<compile_context>
chip_gen: v7x
topology: tpu7x:2x2x1
jax: 0.10.0
libtpu: 0.0.40
codegen_flags: <defaults>
</compile_context>

<pallas_src>
import jax
import jax.numpy as jnp
from jax.experimental import pallas as pl
from jax.experimental.pallas import tpu as pltpu

BN_EPS = 1e-5            # nn.BatchNorm2d default eps
LEAKY_SLOPE = 0.01       # nn.LeakyReLU default negative_slope
COMPUTE_DTYPE = jnp.bfloat16
CPAD = 16                # pad 3x3-conv input channels to a multiple of 16
                         # (native bf16 sublane tile): aligned concat + MXU K


def _round_up(x, m):
    return (x + m - 1) // m * m


def _bf16_round(a):
    return a.astype(jnp.bfloat16).astype(jnp.float32)


# ----------------------------------------------------------------------------
# Fused per-stage kernel: chained Conv(+folded BN)+LeakyReLU layers in VMEM
# ----------------------------------------------------------------------------
def _make_stage_kernel(n_inputs, in_channels, layers_meta, H, W):
    """layers_meta: tuple of (k, cin, cin_pad, cout) per fused layer."""
    HW = H * W
    S = (H + 2) * W + 2                       # flat zero-halo scratch length
    n_layers = len(layers_meta)
    pads3 = [cp for (k, _, cp, _) in layers_meta if k == 3]
    c_max_pad = max(pads3) if pads3 else 0

    def kernel(*refs):
        x_refs = refs[:n_inputs]
        p_refs = refs[n_inputs:n_inputs + 2 * n_layers]
        out_ref = refs[n_inputs + 2 * n_layers]
        s_ref = refs[n_inputs + 2 * n_layers + 1] if c_max_pad else None

        if c_max_pad:
            # Zero the halo scratch ONCE per pallas_call (scratch persists
            # across grid steps).  3x3 layers only overwrite interior columns
            # [W+1, W+1+HW), so the halo stays zero for every layer and every
            # batch element; stale interior rows beyond a layer's cin are
            # multiplied by zero-padded weight columns.
            @pl.when(pl.program_id(0) == 0)
            def _zero_scratch():
                s_ref[...] = jnp.zeros((c_max_pad, S), COMPUTE_DTYPE)

        # Column masks killing row-wrap contamination of the flat layout:
        # taps with column offset -1 are invalid at output column 0,
        # taps with column offset +1 are invalid at output column W-1.
        col = jax.lax.broadcasted_iota(jnp.int32, (1, HW), 1) % W
        not_first_col = col != 0
        not_last_col = col != (W - 1)

        cur = None                            # (C, HW) activation kept in VMEM
        for l, (k, cin, cin_pad, cout) in enumerate(layers_meta):
            w_ref, b_ref = p_refs[2 * l], p_refs[2 * l + 1]
            if k == 1:
                if cur is None:               # (not hit in this module)
                    cur = jnp.concatenate(
                        [xr[0].astype(COMPUTE_DTYPE) for xr in x_refs], axis=0)
                rhs = cur                                        # (cin, HW)
            else:
                # Fill the interior of the flat halo scratch:
                #   s[c, (h+1)*W + (w+1)] = x[c, h, w], zeros elsewhere.
                if cur is None:
                    off = 0
                    for xr, ci in zip(x_refs, in_channels):
                        s_ref[off:off + ci, W + 1:W + 1 + HW] = (
                            xr[0].astype(COMPUTE_DTYPE))
                        off += ci
                else:
                    s_ref[:cin, W + 1:W + 1 + HW] = cur
                # im2col: tap (di, dj) (spatial offsets di-1, dj-1) is the
                # length-HW flat slice starting at di*W + dj.
                patches = []
                for di in range(3):
                    for dj in range(3):
                        start = di * W + dj
                        p = s_ref[:cin_pad, start:start + HW]
                        if dj == 0:
                            p = jnp.where(not_first_col, p, jnp.zeros_like(p))
                        elif dj == 2:
                            p = jnp.where(not_last_col, p, jnp.zeros_like(p))
                        patches.append(p)
                rhs = jnp.concatenate(patches, axis=0)   # (9*cin_pad, HW)
            # Single MXU matmul per layer; BN scale is pre-folded into w.
            acc = jnp.dot(w_ref[...], rhs, preferred_element_type=jnp.float32)
            y = acc + b_ref[...]                         # f32 epilogue
            y = jnp.where(y >= 0, y, LEAKY_SLOPE * y)    # LeakyReLU
            if l == n_layers - 1:
                out_ref[0] = y.astype(out_ref.dtype)     # lane-dense (Cout, HW)
            else:
                cur = y.astype(COMPUTE_DTYPE)

    return kernel


def fused_stage(inputs, layers, H, W, out_dtype):
    """inputs: list of (N, C_i, H*W) bf16 arrays; layers: folded layer dicts."""
    N = inputs[0].shape[0]
    HW = H * W
    layers_meta = tuple((L["k"], L["cin"], L["cin_pad"], L["cout"])
                        for L in layers)
    in_channels = tuple(int(x.shape[1]) for x in inputs)
    cout_last = layers[-1]["cout"]
    pads3 = [L["cin_pad"] for L in layers if L["k"] == 3]
    c_max_pad = max(pads3) if pads3 else 0
    S = (H + 2) * W + 2

    operands = list(inputs)
    in_specs = [pl.BlockSpec((1, c, HW), lambda n: (n, 0, 0))
                for c in in_channels]
    for L in layers:
        operands += [L["w"], L["bias"]]
        # Constant index_map -> weights/biases stay VMEM-resident across the
        # batch grid (no re-fetch per grid step).
        in_specs += [pl.BlockSpec(L["w"].shape, lambda n: (0, 0)),
                     pl.BlockSpec(L["bias"].shape, lambda n: (0, 0))]

    scratch = ([pltpu.VMEM((c_max_pad, S), COMPUTE_DTYPE)]
               if c_max_pad else [])
    kernel = _make_stage_kernel(len(inputs), in_channels, layers_meta, H, W)

    return pl.pallas_call(
        kernel,
        out_shape=jax.ShapeDtypeStruct((N, cout_last, HW), out_dtype),
        grid=(N,),
        in_specs=in_specs,
        out_specs=pl.BlockSpec((1, cout_last, HW), lambda n: (n, 0, 0)),
        scratch_shapes=scratch,
        compiler_params=pltpu.CompilerParams(
            dimension_semantics=("parallel",),     # megacore over batch
            vmem_limit_bytes=32 * 1024 * 1024),
    )(*operands)


# ----------------------------------------------------------------------------
# Deterministic parameter construction (mirrors the PyTorch __init__ shapes)
# ----------------------------------------------------------------------------
def init_deconv_block(key, in_c, out_c, k, num_blocks, bias):
    layers = []
    for idx in range(num_blocks):
        ci = in_c if idx == 0 else out_c
        key, kw_, kb_, kg_, kbe_, km_, kv_ = jax.random.split(key, 7)
        w = 0.1 * jax.random.normal(kw_, (k * k, ci, out_c), jnp.float32)
        b = (0.1 * jax.random.normal(kb_, (out_c,), jnp.float32)
             if bias else jnp.zeros((out_c,), jnp.float32))
        gamma = 1.0 + 0.1 * jax.random.normal(kg_, (out_c,), jnp.float32)
        beta = 0.1 * jax.random.normal(kbe_, (out_c,), jnp.float32)
        mean = 0.1 * jax.random.normal(km_, (out_c,), jnp.float32)
        var = 0.5 + jax.random.uniform(kv_, (out_c,), jnp.float32)
        layers.append(dict(w=w, b=b, gamma=gamma, beta=beta, mean=mean,
                           var=var, k=k))
    # TODO(synk): StochasticDropout is undefined in the source; treated as
    # identity (eval-mode dropout), so no kernel is emitted for it.
    return layers


def fold_layer(L):
    """Fold eval-mode BatchNorm (+ conv bias) into the conv weight/bias and
    reshape to the (Cout, k*k*Cin_pad) layout the fused kernel consumes."""
    w = L["w"]                                        # (k*k, cin, cout)
    kk, cin, cout = w.shape
    k = L["k"]
    scale = L["gamma"] / jnp.sqrt(L["var"] + BN_EPS)              # (cout,)
    bias = L["beta"] + scale * (L["b"] - L["mean"])               # (cout,)
    cin_pad = _round_up(cin, CPAD) if k == 3 else cin
    w_t = jnp.transpose(w, (2, 0, 1))                             # (cout,kk,cin)
    if cin_pad > cin:
        w_t = jnp.pad(w_t, ((0, 0), (0, 0), (0, cin_pad - cin)))
    w2 = (w_t * scale[:, None, None]).reshape(cout, kk * cin_pad)
    return dict(w=w2.astype(COMPUTE_DTYPE),
                bias=bias.reshape(cout, 1).astype(jnp.float32),
                k=k, cin=cin, cin_pad=cin_pad, cout=cout)


def build_decoder_params(key, channels, upsample, num_classes=1,
                         max_channels=512):
    channels = list(channels)
    upsample = list(upsample)
    assert len(channels) == len(upsample)
    if max_channels != 512:
        channels = [c for c in channels if c <= max_channels]
        upsample = upsample[-len(channels):]
    channels.insert(0, channels[0])

    n = len(channels) - 1
    channel_blocks, conv_blocks = [], []
    for idx in range(n):
        in_c = channels[idx] if not upsample[idx] else channels[idx] + channels[idx + 1]
        out_c = channels[idx + 1]
        nb = 1 if (idx == 0 and max_channels == 512) else 3
        key, sub = jax.random.split(key)
        channel_blocks.append(init_deconv_block(sub, in_c, out_c, 3, nb, bias=False))
        if idx != 0:
            key, sub = jax.random.split(key)
            conv_blocks.append(init_deconv_block(sub, out_c, out_c, 1, 2, bias=False))
        else:
            conv_blocks.append(None)
    key, sub = jax.random.split(key)
    final_conv = init_deconv_block(sub, channels[-1], num_classes, 1, 1, bias=True)

    # One fused kernel per decoder stage: channel_blocks[i] (3x3 layers)
    # [+ conv_blocks[i] (1x1 layers)] [+ final_conv on the last stage].
    raw_stages, stages = [], []
    for idx in range(n):
        raw = list(channel_blocks[idx])
        if conv_blocks[idx] is not None:
            raw += conv_blocks[idx]
        if idx == n - 1:
            raw += final_conv
        raw_stages.append(raw)
        stages.append([fold_layer(L) for L in raw])
    return dict(stages=stages, raw_stages=raw_stages,
                channels=channels, upsample=upsample)


# ----------------------------------------------------------------------------
# Forward pass (mirrors VGGUNetDecoder.forward)
# ----------------------------------------------------------------------------
def decoder_forward(params, x, encoder_tensors):
    """x, encoder_tensors[i]: NCHW float32 arrays (PyTorch convention)."""
    upsample = params["upsample"]
    n_stages = len(params["stages"])
    N, C, H, W = x.shape
    cur = x.astype(COMPUTE_DTYPE).reshape(N, C, H * W)   # free: NCHW row-major
    enc_idx = 0
    deep_supervision_features = []
    for idx, stage_layers in enumerate(params["stages"]):
        if upsample[idx]:
            deep_supervision_features.append(
                cur.reshape(N, -1, H, W).astype(jnp.float32))
            # F.interpolate(scale_factor=2) default mode='nearest'.
            up = jnp.repeat(jnp.repeat(cur.reshape(N, -1, H, W), 2, axis=2),
                            2, axis=3)
            H, W = 2 * H, 2 * W
            up = up.reshape(N, -1, H * W)
            enc = encoder_tensors[enc_idx]
            enc = enc.astype(COMPUTE_DTYPE).reshape(N, enc.shape[1], H * W)
            enc_idx += 1
            # torch.cat((encoder_tensor, x), dim=1) is fused into the first
            # conv of the stage: both tensors are passed as separate refs.
            inputs = [enc, up]
        else:
            inputs = [cur]
        out_dtype = jnp.float32 if idx == n_stages - 1 else COMPUTE_DTYPE
        cur = fused_stage(inputs, stage_layers, H, W, out_dtype)
    out = cur.reshape(N, -1, H, W)
    return out, deep_supervision_features


# ----------------------------------------------------------------------------
# Pure-JAX reference (same bf16 rounding points) for numerical validation
# ----------------------------------------------------------------------------
def reference_forward(params, x, encoder_tensors):
    upsample = params["upsample"]
    stages = params["raw_stages"]
    n_stages = len(stages)
    cur = _bf16_round(x)
    enc_idx = 0
    deep = []
    for idx, layers in enumerate(stages):
        if upsample[idx]:
            deep.append(cur)
            cur = jnp.repeat(jnp.repeat(cur, 2, axis=2), 2, axis=3)
            enc = _bf16_round(encoder_tensors[enc_idx])
            enc_idx += 1
            cur = jnp.concatenate([enc, cur], axis=1)
        for li, L in enumerate(layers):
            k = L["k"]
            scale = L["gamma"] / jnp.sqrt(L["var"] + BN_EPS)
            bias = L["beta"] + scale * (L["b"] - L["mean"])
            kk, cin, cout = L["w"].shape
            w4 = L["w"].reshape(k, k, cin, cout).transpose(3, 2, 0, 1)
            w4 = _bf16_round(w4 * scale[:, None, None, None])
            pad = 1 if k == 3 else 0
            y = jax.lax.conv_general_dilated(
                cur, w4, window_strides=(1, 1),
                padding=((pad, pad), (pad, pad)),
                dimension_numbers=("NCHW", "OIHW", "NCHW"),
                precision=jax.lax.Precision.HIGHEST)
            y = y + bias[None, :, None, None]
            y = jnp.where(y >= 0, y, LEAKY_SLOPE * y)
            is_last = (idx == n_stages - 1) and (li == len(layers) - 1)
            cur = y if is_last else _bf16_round(y)
    return cur, deep


# ----------------------------------------------------------------------------
if __name__ == "__main__":
    key = jax.random.PRNGKey(0)
    k_params, k_x, k_e0, k_e1 = jax.random.split(key, 4)

    # Small synthetic config consistent with the module's constructor logic.
    channels = [8, 8, 4]
    upsample = [True, False, True]
    params = build_decoder_params(k_params, channels, upsample, num_classes=1)
    # after insert: params['channels'] == [8, 8, 8, 4]

    B, H0, W0 = 2, 4, 4
    # PyTorch-convention NCHW example inputs.
    x_nchw = jax.random.normal(k_x, (B, 8, H0, W0), jnp.float32)
    enc0_nchw = jax.random.normal(k_e0, (B, 8, 2 * H0, 2 * W0), jnp.float32)
    enc1_nchw = jax.random.normal(k_e1, (B, 4, 4 * H0, 4 * W0), jnp.float32)

    @jax.jit
    def run(x, e0, e1):
        return decoder_forward(params, x, [e0, e1])

    out, deep = run(x_nchw, enc0_nchw, enc1_nchw)
    out = jax.block_until_ready(out)
    deep = jax.block_until_ready(deep)

    assert out.shape == (B, 1, 4 * H0, 4 * W0), out.shape
    assert len(deep) == 2
    assert deep[0].shape == (B, 8, H0, W0)
    assert deep[1].shape == (B, 8, 2 * H0, 2 * W0)
    assert bool(jnp.all(jnp.isfinite(out)))

    # Numerical check against a pure-JAX reference of the same module.
    out_ref, deep_ref = reference_forward(params, x_nchw, [enc0_nchw, enc1_nchw])
    tol = 5e-2
    max_err = float(jnp.max(jnp.abs(out - out_ref)))
    ref_scale = float(jnp.max(jnp.abs(out_ref)))
    assert max_err <= tol + tol * ref_scale, (max_err, ref_scale)
    for d, dr in zip(deep, deep_ref):
        assert d.shape == dr.shape
        e = float(jnp.max(jnp.abs(d - dr)))
        s = float(jnp.max(jnp.abs(dr)))
        assert e <= tol + tol * s, (e, s)

    print("KERNEL_OK")
</pallas_src>

<mosaic_0001>
module attributes {stable_mosaic.version = 11 : i64} {
  func.func @kernel(%arg0: i32, %arg1: memref<1x8x64xbf16, #tpu.memory_space<vmem>>, %arg2: memref<1x8x64xbf16, #tpu.memory_space<vmem>>, %arg3: memref<8x144xbf16, #tpu.memory_space<vmem>>, %arg4: memref<8x1xf32, #tpu.memory_space<vmem>>, %arg5: memref<1x8x64xbf16, #tpu.memory_space<vmem>>, %arg6: memref<16x82xbf16, #tpu.memory_space<vmem>>) attributes {dimension_semantics = [#tpu.dimension_semantics<parallel>], iteration_bounds = array<i64: 2>, scalar_prefetch = 0 : i64, scratch_operands = 1 : i64, tpu.core_type = #tpu.core_type<tc>, window_params = [{transform_indices = @transform_0, window_bounds = array<i64: 1, 8, 64>}, {transform_indices = @transform_1, window_bounds = array<i64: 1, 8, 64>}, {pipeline_mode = #tpu.pipeline_mode<synchronous>, transform_indices = @transform_2, window_bounds = array<i64: 8, 144>}, {pipeline_mode = #tpu.pipeline_mode<synchronous>, transform_indices = @transform_3, window_bounds = array<i64: 8, 1>}, {transform_indices = @transform_4, window_bounds = array<i64: 1, 8, 64>}]} {
    %c0_i32 = arith.constant 0 : i32
    %0 = arith.cmpi eq, %arg0, %c0_i32 : i32
    %1 = arith.extui %0 : i1 to i32
    %c0_i32_0 = arith.constant 0 : i32
    %2 = arith.cmpi ne, %1, %c0_i32_0 : i32
    scf.if %2 {
      %cst_40 = arith.constant 0.000000e+00 : bf16
      %78 = vector.broadcast %cst_40 : bf16 to vector<16x82xbf16>
      %c0_41 = arith.constant 0 : index
      %c0_42 = arith.constant 0 : index
      %79 = vector.load %arg6[%c0_41, %c0_42] : memref<16x82xbf16, #tpu.memory_space<vmem>>, vector<16x82xbf16>
      tpu.vector_store %arg6[%c0_41, %c0_42], %78 {strides = array<i32>} : memref<16x82xbf16, #tpu.memory_space<vmem>>, vector<16x82xbf16>,
    } else {
    }
    %3 = tpu.iota {dimensions = array<i32: 1>} : vector<1x64xi32>
    %c8_i32 = arith.constant 8 : i32
    %c0_i32_1 = arith.constant 0 : i32
    %4 = arith.cmpi eq, %c8_i32, %c0_i32_1 : i32
    %c1_i32 = arith.constant 1 : i32
    %5 = arith.select %4, %c1_i32, %c8_i32 : i32
    %6 = vector.broadcast %5 : i32 to vector<1x64xi32>
    %7 = arith.remsi %3, %6 : vector<1x64xi32>
    %c0_i32_2 = arith.constant 0 : i32
    %8 = vector.broadcast %c0_i32_2 : i32 to vector<1x64xi32>
    %9 = arith.cmpi ne, %7, %8 : vector<1x64xi32>
    %c0_i32_3 = arith.constant 0 : i32
    %10 = vector.broadcast %c0_i32_3 : i32 to vector<1x64xi32>
    %11 = arith.cmpi slt, %7, %10 : vector<1x64xi32>
    %c0_i32_4 = arith.constant 0 : i32
    %12 = arith.cmpi slt, %5, %c0_i32_4 : i32
    %13 = vector.broadcast %12 : i1 to vector<1x64xi1>
    %14 = vector.broadcast %13 : vector<1x64xi1> to vector<1x64xi1>
    %15 = arith.xori %11, %14 : vector<1x64xi1>
    %16 = arith.andi %15, %9 : vector<1x64xi1>
    %17 = vector.broadcast %5 : i32 to vector<1x64xi32>
    %18 = arith.addi %7, %17 : vector<1x64xi32>
    %19 = arith.select %16, %18, %7 : vector<1x64xi1>, vector<1x64xi32>
    %c0_i32_5 = arith.constant 0 : i32
    %20 = vector.broadcast %c0_i32_5 : i32 to vector<1x64xi32>
    %21 = arith.cmpi ne, %19, %20 : vector<1x64xi32>
    %c7_i32 = arith.constant 7 : i32
    %22 = vector.broadcast %c7_i32 : i32 to vector<1x64xi32>
    %23 = arith.cmpi ne, %19, %22 : vector<1x64xi32>
    %c0 = arith.constant 0 : index
    %c0_6 = arith.constant 0 : index
    %c0_7 = arith.constant 0 : index
    %24 = vector.load %arg1[%c0, %c0_6, %c0_7] : memref<1x8x64xbf16, #tpu.memory_space<vmem>>, vector<1x8x64xbf16>
    %25 = vector.shape_cast %24 : vector<1x8x64xbf16> to vector<8x64xbf16>
    %c0_8 = arith.constant 0 : index
    %c9 = arith.constant 9 : index
    %26 = vector.load %arg6[%c0_8, %c9] : memref<16x82xbf16, #tpu.memory_space<vmem>>, vector<8x64xbf16>
    tpu.vector_store %arg6[%c0_8, %c9], %25 {strides = array<i32>} : memref<16x82xbf16, #tpu.memory_space<vmem>>, vector<8x64xbf16>,
    %c0_9 = arith.constant 0 : index
    %c0_10 = arith.constant 0 : index
    %c0_11 = arith.constant 0 : index
    %27 = vector.load %arg2[%c0_9, %c0_10, %c0_11] : memref<1x8x64xbf16, #tpu.memory_space<vmem>>, vector<1x8x64xbf16>
    %28 = vector.shape_cast %27 : vector<1x8x64xbf16> to vector<8x64xbf16>
    %c8 = arith.constant 8 : index
    %c9_12 = arith.constant 9 : index
    %29 = vector.load %arg6[%c8, %c9_12] : memref<16x82xbf16, #tpu.memory_space<vmem>>, vector<8x64xbf16>
    tpu.vector_store %arg6[%c8, %c9_12], %28 {strides = array<i32>} : memref<16x82xbf16, #tpu.memory_space<vmem>>, vector<8x64xbf16>,
    %c0_13 = arith.constant 0 : index
    %c0_14 = arith.constant 0 : index
    %30 = vector.load %arg6[%c0_13, %c0_14] : memref<16x82xbf16, #tpu.memory_space<vmem>>, vector<16x64xbf16>
    %cst = arith.constant 0.000000e+00 : bf16
    %31 = vector.broadcast %cst : bf16 to vector<16x64xbf16>
    %32 = vector.shape_cast %21 : vector<1x64xi1> to vector<1x64xi1>
    %33 = vector.broadcast %32 : vector<1x64xi1> to vector<16x64xi1>
    %34 = arith.select %33, %30, %31 : vector<16x64xi1>, vector<16x64xbf16>
    %c0_15 = arith.constant 0 : index
    %c1 = arith.constant 1 : index
    %35 = vector.load %arg6[%c0_15, %c1] : memref<16x82xbf16, #tpu.memory_space<vmem>>, vector<16x64xbf16>
    %c0_16 = arith.constant 0 : index
    %c2 = arith.constant 2 : index
    %36 = vector.load %arg6[%c0_16, %c2] : memref<16x82xbf16, #tpu.memory_space<vmem>>, vector<16x64xbf16>
    %cst_17 = arith.constant 0.000000e+00 : bf16
    %37 = vector.broadcast %cst_17 : bf16 to vector<16x64xbf16>
    %38 = vector.shape_cast %23 : vector<1x64xi1> to vector<1x64xi1>
    %39 = vector.broadcast %38 : vector<1x64xi1> to vector<16x64xi1>
    %40 = arith.select %39, %36, %37 : vector<16x64xi1>, vector<16x64xbf16>
    %c0_18 = arith.constant 0 : index
    %c8_19 = arith.constant 8 : index
    %41 = vector.load %arg6[%c0_18, %c8_19] : memref<16x82xbf16, #tpu.memory_space<vmem>>, vector<16x64xbf16>
    %cst_20 = arith.constant 0.000000e+00 : bf16
    %42 = vector.broadcast %cst_20 : bf16 to vector<16x64xbf16>
    %43 = vector.shape_cast %21 : vector<1x64xi1> to vector<1x64xi1>
    %44 = vector.broadcast %43 : vector<1x64xi1> to vector<16x64xi1>
    %45 = arith.select %44, %41, %42 : vector<16x64xi1>, vector<16x64xbf16>
    %c0_21 = arith.constant 0 : index
    %c9_22 = arith.constant 9 : index
    %46 = vector.load %arg6[%c0_21, %c9_22] : memref<16x82xbf16, #tpu.memory_space<vmem>>, vector<16x64xbf16>
    %c0_23 = arith.constant 0 : index
    %c10 = arith.constant 10 : index
    %47 = vector.load %arg6[%c0_23, %c10] : memref<16x82xbf16, #tpu.memory_space<vmem>>, vector<16x64xbf16>
    %cst_24 = arith.constant 0.000000e+00 : bf16
    %48 = vector.broadcast %cst_24 : bf16 to vector<16x64xbf16>
    %49 = vector.shape_cast %23 : vector<1x64xi1> to vector<1x64xi1>
    %50 = vector.broadcast %49 : vector<1x64xi1> to vector<16x64xi1>
    %51 = arith.select %50, %47, %48 : vector<16x64xi1>, vector<16x64xbf16>
    %c0_25 = arith.constant 0 : index
    %c16 = arith.constant 16 : index
    %52 = vector.load %arg6[%c0_25, %c16] : memref<16x82xbf16, #tpu.memory_space<vmem>>, vector<16x64xbf16>
    %cst_26 = arith.constant 0.000000e+00 : bf16
    %53 = vector.broadcast %cst_26 : bf16 to vector<16x64xbf16>
    %54 = vector.shape_cast %21 : vector<1x64xi1> to vector<1x64xi1>
    %55 = vector.broadcast %54 : vector<1x64xi1> to vector<16x64xi1>
    %56 = arith.select %55, %52, %53 : vector<16x64xi1>, vector<16x64xbf16>
    %c0_27 = arith.constant 0 : index
    %c17 = arith.constant 17 : index
    %57 = vector.load %arg6[%c0_27, %c17] : memref<16x82xbf16, #tpu.memory_space<vmem>>, vector<16x64xbf16>
    %c0_28 = arith.constant 0 : index
    %c18 = arith.constant 18 : index
    %58 = vector.load %arg6[%c0_28, %c18] : memref<16x82xbf16, #tpu.memory_space<vmem>>, vector<16x64xbf16>
    %cst_29 = arith.constant 0.000000e+00 : bf16
    %59 = vector.broadcast %cst_29 : bf16 to vector<16x64xbf16>
    %60 = vector.shape_cast %23 : vector<1x64xi1> to vector<1x64xi1>
    %61 = vector.broadcast %60 : vector<1x64xi1> to vector<16x64xi1>
    %62 = arith.select %61, %58, %59 : vector<16x64xi1>, vector<16x64xbf16>
    %63 = tpu.concatenate %34, %35, %40, %45, %46, %51, %56, %57, %62 in 0 : vector<16x64xbf16>, vector<16x64xbf16>, vector<16x64xbf16>, vector<16x64xbf16>, vector<16x64xbf16>, vector<16x64xbf16>, vector<16x64xbf16>, vector<16x64xbf16>, vector<16x64xbf16> -> vector<144x64xbf16>
    %c0_30 = arith.constant 0 : index
    %c0_31 = arith.constant 0 : index
    %64 = vector.load %arg3[%c0_30, %c0_31] : memref<8x144xbf16, #tpu.memory_space<vmem>>, vector<8x144xbf16>
    %cst_32 = arith.constant dense<0.000000e+00> : vector<8x64xf32>
    %65 = tpu.matmul %64, %63, %cst_32 {dimension_numbers = #tpu.dot_dimension_numbers<[1], [0], [0], [1], [0, 0, 1, 1], [], []>} : vector<8x144xbf16>, vector<144x64xbf16>, vector<8x64xf32> -> vector<8x64xf32>
    %c0_33 = arith.constant 0 : index
    %c0_34 = arith.constant 0 : index
    %66 = vector.load %arg4[%c0_33, %c0_34] : memref<8x1xf32, #tpu.memory_space<vmem>>, vector<8x1xf32>
    %67 = vector.broadcast %66 : vector<8x1xf32> to vector<8x64xf32>
    %68 = arith.addf %65, %67 : vector<8x64xf32>
    %cst_35 = arith.constant 0.000000e+00 : f32
    %69 = vector.broadcast %cst_35 : f32 to vector<8x64xf32>
    %70 = arith.cmpf oge, %68, %69 : vector<8x64xf32>
    %cst_36 = arith.constant 0.00999999977 : f32
    %71 = vector.broadcast %cst_36 : f32 to vector<8x64xf32>
    %72 = arith.mulf %71, %68 : vector<8x64xf32>
    %73 = arith.select %70, %68, %72 : vector<8x64xi1>, vector<8x64xf32>
    %74 = arith.truncf %73 : vector<8x64xf32> to vector<8x64xbf16>
    %c0_37 = arith.constant 0 : index
    %c0_38 = arith.constant 0 : index
    %c0_39 = arith.constant 0 : index
    %75 = vector.load %arg5[%c0_37, %c0_38, %c0_39] : memref<1x8x64xbf16, #tpu.memory_space<vmem>>, vector<1x8x64xbf16>
    %76 = vector.shape_cast %75 : vector<1x8x64xbf16> to vector<8x64xbf16>
    %77 = vector.shape_cast %74 : vector<8x64xbf16> to vector<1x8x64xbf16>
    tpu.vector_store %arg5[%c0_37, %c0_38, %c0_39], %77 {strides = array<i32>} : memref<1x8x64xbf16, #tpu.memory_space<vmem>>, vector<1x8x64xbf16>,
    return
  }
  func.func @transform_0(%arg0: i32) -> (i32, i32, i32) {
    %c0_i32 = arith.constant 0 : i32
    %c0_i32_0 = arith.constant 0 : i32
    %c0_i32_1 = arith.constant 0 : i32
    return %arg0, %c0_i32, %c0_i32_0 : i32, i32, i32
  }
  func.func @transform_1(%arg0: i32) -> (i32, i32, i32) {
    %c0_i32 = arith.constant 0 : i32
    %c0_i32_0 = arith.constant 0 : i32
    %c0_i32_1 = arith.constant 0 : i32
    return %arg0, %c0_i32, %c0_i32_0 : i32, i32, i32
  }
  func.func @transform_2(%arg0: i32) -> (i32, i32) {
    %c0_i32 = arith.constant 0 : i32
    %c0_i32_0 = arith.constant 0 : i32
    %c0_i32_1 = arith.constant 0 : i32
    return %c0_i32, %c0_i32_0 : i32, i32
  }
  func.func @transform_3(%arg0: i32) -> (i32, i32) {
    %c0_i32 = arith.constant 0 : i32
    %c0_i32_0 = arith.constant 0 : i32
    %c0_i32_1 = arith.constant 0 : i32
    return %c0_i32, %c0_i32_0 : i32, i32
  }
  func.func @transform_4(%arg0: i32) -> (i32, i32, i32) {
    %c0_i32 = arith.constant 0 : i32
    %c0_i32_0 = arith.constant 0 : i32
    %c0_i32_1 = arith.constant 0 : i32
    return %arg0, %c0_i32, %c0_i32_0 : i32, i32, i32
  }
}

module attributes {stable_mosaic.version = 11 : i64} {
  func.func @kernel(%arg0: i32, %arg1: memref<1x8x64xbf16, #tpu.memory_space<vmem>>, %arg2: memref<8x144xbf16, #tpu.memory_space<vmem>>, %arg3: memref<8x1xf32, #tpu.memory_space<vmem>>, %arg4: memref<8x144xbf16, #tpu.memory_space<vmem>>, %arg5: memref<8x1xf32, #tpu.memory_space<vmem>>, %arg6: memref<8x144xbf16, #tpu.memory_space<vmem>>, %arg7: memref<8x1xf32, #tpu.memory_space<vmem>>, %arg8: memref<8x8xbf16, #tpu.memory_space<vmem>>, %arg9: memref<8x1xf32, #tpu.memory_space<vmem>>, %arg10: memref<8x8xbf16, #tpu.memory_space<vmem>>, %arg11: memref<8x1xf32, #tpu.memory_space<vmem>>, %arg12: memref<1x8x64xbf16, #tpu.memory_space<vmem>>, %arg13: memref<16x82xbf16, #tpu.memory_space<vmem>>) attributes {dimension_semantics = [#tpu.dimension_semantics<parallel>], iteration_bounds = array<i64: 2>, scalar_prefetch = 0 : i64, scratch_operands = 1 : i64, tpu.core_type = #tpu.core_type<tc>, window_params = [{transform_indices = @transform_0, window_bounds = array<i64: 1, 8, 64>}, {pipeline_mode = #tpu.pipeline_mode<synchronous>, transform_indices = @transform_1, window_bounds = array<i64: 8, 144>}, {pipeline_mode = #tpu.pipeline_mode<synchronous>, transform_indices = @transform_2, window_bounds = array<i64: 8, 1>}, {pipeline_mode = #tpu.pipeline_mode<synchronous>, transform_indices = @transform_3, window_bounds = array<i64: 8, 144>}, {pipeline_mode = #tpu.pipeline_mode<synchronous>, transform_indices = @transform_4, window_bounds = array<i64: 8, 1>}, {pipeline_mode = #tpu.pipeline_mode<synchronous>, transform_indices = @transform_5, window_bounds = array<i64: 8, 144>}, {pipeline_mode = #tpu.pipeline_mode<synchronous>, transform_indices = @transform_6, window_bounds = array<i64: 8, 1>}, {pipeline_mode = #tpu.pipeline_mode<synchronous>, transform_indices = @transform_7, window_bounds = array<i64: 8, 8>}, {pipeline_mode = #tpu.pipeline_mode<synchronous>, transform_indices = @transform_8, window_bounds = array<i64: 8, 1>}, {pipeline_mode = #tpu.pipeline_mode<synchronous>, transform_indices = @transform_9, window_bounds = array<i64: 8, 8>}, {pipeline_mode = #tpu.pipeline_mode<synchronous>, transform_indices = @transform_10, window_bounds = array<i64: 8, 1>}, {transform_indices = @transform_11, window_bounds = array<i64: 1, 8, 64>}]} {
    %c0_i32 = arith.constant 0 : i32
    %0 = arith.cmpi eq, %arg0, %c0_i32 : i32
    %1 = arith.extui %0 : i1 to i32
    %c0_i32_0 = arith.constant 0 : i32
    %2 = arith.cmpi ne, %1, %c0_i32_0 : i32
    scf.if %2 {
      %cst_115 = arith.constant 0.000000e+00 : bf16
      %189 = vector.broadcast %cst_115 : bf16 to vector<16x82xbf16>
      %c0_116 = arith.constant 0 : index
      %c0_117 = arith.constant 0 : index
      %190 = vector.load %arg13[%c0_116, %c0_117] : memref<16x82xbf16, #tpu.memory_space<vmem>>, vector<16x82xbf16>
      tpu.vector_store %arg13[%c0_116, %c0_117], %189 {strides = array<i32>} : memref<16x82xbf16, #tpu.memory_space<vmem>>, vector<16x82xbf16>,
    } else {
    }
    %3 = tpu.iota {dimensions = array<i32: 1>} : vector<1x64xi32>
    %c8_i32 = arith.constant 8 : i32
    %c0_i32_1 = arith.constant 0 : i32
    %4 = arith.cmpi eq, %c8_i32, %c0_i32_1 : i32
    %c1_i32 = arith.constant 1 : i32
    %5 = arith.select %4, %c1_i32, %c8_i32 : i32
    %6 = vector.broadcast %5 : i32 to vector<1x64xi32>
    %7 = arith.remsi %3, %6 : vector<1x64xi32>
    %c0_i32_2 = arith.constant 0 : i32
    %8 = vector.broadcast %c0_i32_2 : i32 to vector<1x64xi32>
    %9 = arith.cmpi ne, %7, %8 : vector<1x64xi32>
    %c0_i32_3 = arith.constant 0 : i32
    %10 = vector.broadcast %c0_i32_3 : i32 to vector<1x64xi32>
    %11 = arith.cmpi slt, %7, %10 : vector<1x64xi32>
    %c0_i32_4 = arith.constant 0 : i32
    %12 = arith.cmpi slt, %5, %c0_i32_4 : i32
    %13 = vector.broadcast %12 : i1 to vector<1x64xi1>
    %14 = vector.broadcast %13 : vector<1x64xi1> to vector<1x64xi1>
    %15 = arith.xori %11, %14 : vector<1x64xi1>
    %16 = arith.andi %15, %9 : vector<1x64xi1>
    %17 = vector.broadcast %5 : i32 to vector<1x64xi32>
    %18 = arith.addi %7, %17 : vector<1x64xi32>
    %19 = arith.select %16, %18, %7 : vector<1x64xi1>, vector<1x64xi32>
    %c0_i32_5 = arith.constant 0 : i32
    %20 = vector.broadcast %c0_i32_5 : i32 to vector<1x64xi32>
    %21 = arith.cmpi ne, %19, %20 : vector<1x64xi32>
    %c7_i32 = arith.constant 7 : i32
    %22 = vector.broadcast %c7_i32 : i32 to vector<1x64xi32>
    %23 = arith.cmpi ne, %19, %22 : vector<1x64xi32>
    %c0 = arith.constant 0 : index
    %c0_6 = arith.constant 0 : index
    %c0_7 = arith.constant 0 : index
    %24 = vector.load %arg1[%c0, %c0_6, %c0_7] : memref<1x8x64xbf16, #tpu.memory_space<vmem>>, vector<1x8x64xbf16>
    %25 = vector.shape_cast %24 : vector<1x8x64xbf16> to vector<8x64xbf16>
    %c0_8 = arith.constant 0 : index
    %c9 = arith.constant 9 : index
    %26 = vector.load %arg13[%c0_8, %c9] : memref<16x82xbf16, #tpu.memory_space<vmem>>, vector<8x64xbf16>
    tpu.vector_store %arg13[%c0_8, %c9], %25 {strides = array<i32>} : memref<16x82xbf16, #tpu.memory_space<vmem>>, vector<8x64xbf16>,
    %c0_9 = arith.constant 0 : index
    %c0_10 = arith.constant 0 : index
    %27 = vector.load %arg13[%c0_9, %c0_10] : memref<16x82xbf16, #tpu.memory_space<vmem>>, vector<16x64xbf16>
    %cst = arith.constant 0.000000e+00 : bf16
    %28 = vector.broadcast %cst : bf16 to vector<16x64xbf16>
    %29 = vector.shape_cast %21 : vector<1x64xi1> to vector<1x64xi1>
    %30 = vector.broadcast %29 : vector<1x64xi1> to vector<16x64xi1>
    %31 = arith.select %30, %27, %28 : vector<16x64xi1>, vector<16x64xbf16>
    %c0_11 = arith.constant 0 : index
    %c1 = arith.constant 1 : index
    %32 = vector.load %arg13[%c0_11, %c1] : memref<16x82xbf16, #tpu.memory_space<vmem>>, vector<16x64xbf16>
    %c0_12 = arith.constant 0 : index
    %c2 = arith.constant 2 : index
    %33 = vector.load %arg13[%c0_12, %c2] : memref<16x82xbf16, #tpu.memory_space<vmem>>, vector<16x64xbf16>
    %cst_13 = arith.constant 0.000000e+00 : bf16
    %34 = vector.broadcast %cst_13 : bf16 to vector<16x64xbf16>
    %35 = vector.shape_cast %23 : vector<1x64xi1> to vector<1x64xi1>
    %36 = vector.broadcast %35 : vector<1x64xi1> to vector<16x64xi1>
    %37 = arith.select %36, %33, %34 : vector<16x64xi1>, vector<16x64xbf16>
    %c0_14 = arith.constant 0 : index
    %c8 = arith.constant 8 : index
    %38 = vector.load %arg13[%c0_14, %c8] : memref<16x82xbf16, #tpu.memory_space<vmem>>, vector<16x64xbf16>
    %cst_15 = arith.constant 0.000000e+00 : bf16
    %39 = vector.broadcast %cst_15 : bf16 to vector<16x64xbf16>
    %40 = vector.shape_cast %21 : vector<1x64xi1> to vector<1x64xi1>
    %41 = vector.broadcast %40 : vector<1x64xi1> to vector<16x64xi1>
    %42 = arith.select %41, %38, %39 : vector<16x64xi1>, vector<16x64xbf16>
    %c0_16 = arith.constant 0 : index
    %c9_17 = arith.constant 9 : index
    %43 = vector.load %arg13[%c0_16, %c9_17] : memref<16x82xbf16, #tpu.memory_space<vmem>>, vector<16x64xbf16>
    %c0_18 = arith.constant 0 : index
    %c10 = arith.constant 10 : index
    %44 = vector.load %arg13[%c0_18, %c10] : memref<16x82xbf16, #tpu.memory_space<vmem>>, vector<16x64xbf16>
    %cst_19 = arith.constant 0.000000e+00 : bf16
    %45 = vector.broadcast %cst_19 : bf16 to vector<16x64xbf16>
    %46 = vector.shape_cast %23 : vector<1x64xi1> to vector<1x64xi1>
    %47 = vector.broadcast %46 : vector<1x64xi1> to vector<16x64xi1>
    %48 = arith.select %47, %44, %45 : vector<16x64xi1>, vector<16x64xbf16>
    %c0_20 = arith.constant 0 : index
    %c16 = arith.constant 16 : index
    %49 = vector.load %arg13[%c0_20, %c16] : memref<16x82xbf16, #tpu.memory_space<vmem>>, vector<16x64xbf16>
    %cst_21 = arith.constant 0.000000e+00 : bf16
    %50 = vector.broadcast %cst_21 : bf16 to vector<16x64xbf16>
    %51 = vector.shape_cast %21 : vector<1x64xi1> to vector<1x64xi1>
    %52 = vector.broadcast %51 : vector<1x64xi1> to vector<16x64xi1>
    %53 = arith.select %52, %49, %50 : vector<16x64xi1>, vector<16x64xbf16>
    %c0_22 = arith.constant 0 : index
    %c17 = arith.constant 17 : index
    %54 = vector.load %arg13[%c0_22, %c17] : memref<16x82xbf16, #tpu.memory_space<vmem>>, vector<16x64xbf16>
    %c0_23 = arith.constant 0 : index
    %c18 = arith.constant 18 : index
    %55 = vector.load %arg13[%c0_23, %c18] : memref<16x82xbf16, #tpu.memory_space<vmem>>, vector<16x64xbf16>
    %cst_24 = arith.constant 0.000000e+00 : bf16
    %56 = vector.broadcast %cst_24 : bf16 to vector<16x64xbf16>
    %57 = vector.shape_cast %23 : vector<1x64xi1> to vector<1x64xi1>
    %58 = vector.broadcast %57 : vector<1x64xi1> to vector<16x64xi1>
    %59 = arith.select %58, %55, %56 : vector<16x64xi1>, vector<16x64xbf16>
    %60 = tpu.concatenate %31, %32, %37, %42, %43, %48, %53, %54, %59 in 0 : vector<16x64xbf16>, vector<16x64xbf16>, vector<16x64xbf16>, vector<16x64xbf16>, vector<16x64xbf16>, vector<16x64xbf16>, vector<16x64xbf16>, vector<16x64xbf16>, vector<16x64xbf16> -> vector<144x64xbf16>
    %c0_25 = arith.constant 0 : index
    %c0_26 = arith.constant 0 : index
    %61 = vector.load %arg2[%c0_25, %c0_26] : memref<8x144xbf16, #tpu.memory_space<vmem>>, vector<8x144xbf16>
    %cst_27 = arith.constant dense<0.000000e+00> : vector<8x64xf32>
    %62 = tpu.matmul %61, %60, %cst_27 {dimension_numbers = #tpu.dot_dimension_numbers<[1], [0], [0], [1], [0, 0, 1, 1], [], []>} : vector<8x144xbf16>, vector<144x64xbf16>, vector<8x64xf32> -> vector<8x64xf32>
    %c0_28 = arith.constant 0 : index
    %c0_29 = arith.constant 0 : index
    %63 = vector.load %arg3[%c0_28, %c0_29] : memref<8x1xf32, #tpu.memory_space<vmem>>, vector<8x1xf32>
    %64 = vector.broadcast %63 : vector<8x1xf32> to vector<8x64xf32>
    %65 = arith.addf %62, %64 : vector<8x64xf32>
    %cst_30 = arith.constant 0.000000e+00 : f32
    %66 = vector.broadcast %cst_30 : f32 to vector<8x64xf32>
    %67 = arith.cmpf oge, %65, %66 : vector<8x64xf32>
    %cst_31 = arith.constant 0.00999999977 : f32
    %68 = vector.broadcast %cst_31 : f32 to vector<8x64xf32>
    %69 = arith.mulf %68, %65 : vector<8x64xf32>
    %70 = arith.select %67, %65, %69 : vector<8x64xi1>, vector<8x64xf32>
    %71 = arith.truncf %70 : vector<8x64xf32> to vector<8x64xbf16>
    %c0_32 = arith.constant 0 : index
    %c9_33 = arith.constant 9 : index
    %72 = vector.load %arg13[%c0_32, %c9_33] : memref<16x82xbf16, #tpu.memory_space<vmem>>, vector<8x64xbf16>
    tpu.vector_store %arg13[%c0_32, %c9_33], %71 {strides = array<i32>} : memref<16x82xbf16, #tpu.memory_space<vmem>>, vector<8x64xbf16>,
    %c0_34 = arith.constant 0 : index
    %c0_35 = arith.constant 0 : index
    %73 = vector.load %arg13[%c0_34, %c0_35] : memref<16x82xbf16, #tpu.memory_space<vmem>>, vector<16x64xbf16>
    %cst_36 = arith.constant 0.000000e+00 : bf16
    %74 = vector.broadcast %cst_36 : bf16 to vector<16x64xbf16>
    %75 = vector.shape_cast %21 : vector<1x64xi1> to vector<1x64xi1>
    %76 = vector.broadcast %75 : vector<1x64xi1> to vector<16x64xi1>
    %77 = arith.select %76, %73, %74 : vector<16x64xi1>, vector<16x64xbf16>
    %c0_37 = arith.constant 0 : index
    %c1_38 = arith.constant 1 : index
    %78 = vector.load %arg13[%c0_37, %c1_38] : memref<16x82xbf16, #tpu.memory_space<vmem>>, vector<16x64xbf16>
    %c0_39 = arith.constant 0 : index
    %c2_40 = arith.constant 2 : index
    %79 = vector.load %arg13[%c0_39, %c2_40] : memref<16x82xbf16, #tpu.memory_space<vmem>>, vector<16x64xbf16>
    %cst_41 = arith.constant 0.000000e+00 : bf16
    %80 = vector.broadcast %cst_41 : bf16 to vector<16x64xbf16>
    %81 = vector.shape_cast %23 : vector<1x64xi1> to vector<1x64xi1>
    %82 = vector.broadcast %81 : vector<1x64xi1> to vector<16x64xi1>
    %83 = arith.select %82, %79, %80 : vector<16x64xi1>, vector<16x64xbf16>
    %c0_42 = arith.constant 0 : index
    %c8_43 = arith.constant 8 : index
    %84 = vector.load %arg13[%c0_42, %c8_43] : memref<16x82xbf16, #tpu.memory_space<vmem>>, vector<16x64xbf16>
    %cst_44 = arith.constant 0.000000e+00 : bf16
    %85 = vector.broadcast %cst_44 : bf16 to vector<16x64xbf16>
    %86 = vector.shape_cast %21 : vector<1x64xi1> to vector<1x64xi1>
    %87 = vector.broadcast %86 : vector<1x64xi1> to vector<16x64xi1>
    %88 = arith.select %87, %84, %85 : vector<16x64xi1>, vector<16x64xbf16>
    %c0_45 = arith.constant 0 : index
    %c9_46 = arith.constant 9 : index
    %89 = vector.load %arg13[%c0_45, %c9_46] : memref<16x82xbf16, #tpu.memory_space<vmem>>, vector<16x64xbf16>
    %c0_47 = arith.constant 0 : index
    %c10_48 = arith.constant 10 : index
    %90 = vector.load %arg13[%c0_47, %c10_48] : memref<16x82xbf16, #tpu.memory_space<vmem>>, vector<16x64xbf16>
    %cst_49 = arith.constant 0.000000e+00 : bf16
    %91 = vector.broadcast %cst_49 : bf16 to vector<16x64xbf16>
    %92 = vector.shape_cast %23 : vector<1x64xi1> to vector<1x64xi1>
    %93 = vector.broadcast %92 : vector<1x64xi1> to vector<16x64xi1>
    %94 = arith.select %93, %90, %91 : vector<16x64xi1>, vector<16x64xbf16>
    %c0_50 = arith.constant 0 : index
    %c16_51 = arith.constant 16 : index
    %95 = vector.load %arg13[%c0_50, %c16_51] : memref<16x82xbf16, #tpu.memory_space<vmem>>, vector<16x64xbf16>
    %cst_52 = arith.constant 0.000000e+00 : bf16
    %96 = vector.broadcast %cst_52 : bf16 to vector<16x64xbf16>
    %97 = vector.shape_cast %21 : vector<1x64xi1> to vector<1x64xi1>
    %98 = vector.broadcast %97 : vector<1x64xi1> to vector<16x64xi1>
    %99 = arith.select %98, %95, %96 : vector<16x64xi1>, vector<16x64xbf16>
    %c0_53 = arith.constant 0 : index
    %c17_54 = arith.constant 17 : index
    %100 = vector.load %arg13[%c0_53, %c17_54] : memref<16x82xbf16, #tpu.memory_space<vmem>>, vector<16x64xbf16>
    %c0_55 = arith.constant 0 : index
    %c18_56 = arith.constant 18 : index
    %101 = vector.load %arg13[%c0_55, %c18_56] : memref<16x82xbf16, #tpu.memory_space<vmem>>, vector<16x64xbf16>
    %cst_57 = arith.constant 0.000000e+00 : bf16
    %102 = vector.broadcast %cst_57 : bf16 to vector<16x64xbf16>
    %103 = vector.shape_cast %23 : vector<1x64xi1> to vector<1x64xi1>
    %104 = vector.broadcast %103 : vector<1x64xi1> to vector<16x64xi1>
    %105 = arith.select %104, %101, %102 : vector<16x64xi1>, vector<16x64xbf16>
    %106 = tpu.concatenate %77, %78, %83, %88, %89, %94, %99, %100, %105 in 0 : vector<16x64xbf16>, vector<16x64xbf16>, vector<16x64xbf16>, vector<16x64xbf16>, vector<16x64xbf16>, vector<16x64xbf16>, vector<16x64xbf16>, vector<16x64xbf16>, vector<16x64xbf16> -> vector<144x64xbf16>
    %c0_58 = arith.constant 0 : index
    %c0_59 = arith.constant 0 : index
    %107 = vector.load %arg4[%c0_58, %c0_59] : memref<8x144xbf16, #tpu.memory_space<vmem>>, vector<8x144xbf16>
    %cst_60 = arith.constant dense<0.000000e+00> : vector<8x64xf32>
    %108 = tpu.matmul %107, %106, %cst_60 {dimension_numbers = #tpu.dot_dimension_numbers<[1], [0], [0], [1], [0, 0, 1, 1], [], []>} : vector<8x144xbf16>, vector<144x64xbf16>, vector<8x64xf32> -> vector<8x64xf32>
    %c0_61 = arith.constant 0 : index
    %c0_62 = arith.constant 0 : index
    %109 = vector.load %arg5[%c0_61, %c0_62] : memref<8x1xf32, #tpu.memory_space<vmem>>, vector<8x1xf32>
    %110 = vector.broadcast %109 : vector<8x1xf32> to vector<8x64xf32>
    %111 = arith.addf %108, %110 : vector<8x64xf32>
    %cst_63 = arith.constant 0.000000e+00 : f32
    %112 = vector.broadcast %cst_63 : f32 to vector<8x64xf32>
    %113 = arith.cmpf oge, %111, %112 : vector<8x64xf32>
    %cst_64 = arith.constant 0.00999999977 : f32
    %114 = vector.broadcast %cst_64 : f32 to vector<8x64xf32>
    %115 = arith.mulf %114, %111 : vector<8x64xf32>
    %116 = arith.select %113, %111, %115 : vector<8x64xi1>, vector<8x64xf32>
    %117 = arith.truncf %116 : vector<8x64xf32> to vector<8x64xbf16>
    %c0_65 = arith.constant 0 : index
    %c9_66 = arith.constant 9 : index
    %118 = vector.load %arg13[%c0_65, %c9_66] : memref<16x82xbf16, #tpu.memory_space<vmem>>, vector<8x64xbf16>
    tpu.vector_store %arg13[%c0_65, %c9_66], %117 {strides = array<i32>} : memref<16x82xbf16, #tpu.memory_space<vmem>>, vector<8x64xbf16>,
    %c0_67 = arith.constant 0 : index
    %c0_68 = arith.constant 0 : index
    %119 = vector.load %arg13[%c0_67, %c0_68] : memref<16x82xbf16, #tpu.memory_space<vmem>>, vector<16x64xbf16>
    %cst_69 = arith.constant 0.000000e+00 : bf16
    %120 = vector.broadcast %cst_69 : bf16 to vector<16x64xbf16>
    %121 = vector.shape_cast %21 : vector<1x64xi1> to vector<1x64xi1>
    %122 = vector.broadcast %121 : vector<1x64xi1> to vector<16x64xi1>
    %123 = arith.select %122, %119, %120 : vector<16x64xi1>, vector<16x64xbf16>
    %c0_70 = arith.constant 0 : index
    %c1_71 = arith.constant 1 : index
    %124 = vector.load %arg13[%c0_70, %c1_71] : memref<16x82xbf16, #tpu.memory_space<vmem>>, vector<16x64xbf16>
    %c0_72 = arith.constant 0 : index
    %c2_73 = arith.constant 2 : index
    %125 = vector.load %arg13[%c0_72, %c2_73] : memref<16x82xbf16, #tpu.memory_space<vmem>>, vector<16x64xbf16>
    %cst_74 = arith.constant 0.000000e+00 : bf16
    %126 = vector.broadcast %cst_74 : bf16 to vector<16x64xbf16>
    %127 = vector.shape_cast %23 : vector<1x64xi1> to vector<1x64xi1>
    %128 = vector.broadcast %127 : vector<1x64xi1> to vector<16x64xi1>
    %129 = arith.select %128, %125, %126 : vector<16x64xi1>, vector<16x64xbf16>
    %c0_75 = arith.constant 0 : index
    %c8_76 = arith.constant 8 : index
    %130 = vector.load %arg13[%c0_75, %c8_76] : memref<16x82xbf16, #tpu.memory_space<vmem>>, vector<16x64xbf16>
    %cst_77 = arith.constant 0.000000e+00 : bf16
    %131 = vector.broadcast %cst_77 : bf16 to vector<16x64xbf16>
    %132 = vector.shape_cast %21 : vector<1x64xi1> to vector<1x64xi1>
    %133 = vector.broadcast %132 : vector<1x64xi1> to vector<16x64xi1>
    %134 = arith.select %133, %130, %131 : vector<16x64xi1>, vector<16x64xbf16>
    %c0_78 = arith.constant 0 : index
    %c9_79 = arith.constant 9 : index
    %135 = vector.load %arg13[%c0_78, %c9_79] : memref<16x82xbf16, #tpu.memory_space<vmem>>, vector<16x64xbf16>
    %c0_80 = arith.constant 0 : index
    %c10_81 = arith.constant 10 : index
    %136 = vector.load %arg13[%c0_80, %c10_81] : memref<16x82xbf16, #tpu.memory_space<vmem>>, vector<16x64xbf16>
    %cst_82 = arith.constant 0.000000e+00 : bf16
    %137 = vector.broadcast %cst_82 : bf16 to vector<16x64xbf16>
    %138 = vector.shape_cast %23 : vector<1x64xi1> to vector<1x64xi1>
    %139 = vector.broadcast %138 : vector<1x64xi1> to vector<16x64xi1>
    %140 = arith.select %139, %136, %137 : vector<16x64xi1>, vector<16x64xbf16>
    %c0_83 = arith.constant 0 : index
    %c16_84 = arith.constant 16 : index
    %141 = vector.load %arg13[%c0_83, %c16_84] : memref<16x82xbf16, #tpu.memory_space<vmem>>, vector<16x64xbf16>
    %cst_85 = arith.constant 0.000000e+00 : bf16
    %142 = vector.broadcast %cst_85 : bf16 to vector<16x64xbf16>
    %143 = vector.shape_cast %21 : vector<1x64xi1> to vector<1x64xi1>
    %144 = vector.broadcast %143 : vector<1x64xi1> to vector<16x64xi1>
    %145 = arith.select %144, %141, %142 : vector<16x64xi1>, vector<16x64xbf16>
    %c0_86 = arith.constant 0 : index
    %c17_87 = arith.constant 17 : index
    %146 = vector.load %arg13[%c0_86, %c17_87] : memref<16x82xbf16, #tpu.memory_space<vmem>>, vector<16x64xbf16>
    %c0_88 = arith.constant 0 : index
    %c18_89 = arith.constant 18 : index
    %147 = vector.load %arg13[%c0_88, %c18_89] : memref<16x82xbf16, #tpu.memory_space<vmem>>, vector<16x64xbf16>
    %cst_90 = arith.constant 0.000000e+00 : bf16
    %148 = vector.broadcast %cst_90 : bf16 to vector<16x64xbf16>
    %149 = vector.shape_cast %23 : vector<1x64xi1> to vector<1x64xi1>
    %150 = vector.broadcast %149 : vector<1x64xi1> to vector<16x64xi1>
    %151 = arith.select %150, %147, %148 : vector<16x64xi1>, vector<16x64xbf16>
    %152 = tpu.concatenate %123, %124, %129, %134, %135, %140, %145, %146, %151 in 0 : vector<16x64xbf16>, vector<16x64xbf16>, vector<16x64xbf16>, vector<16x64xbf16>, vector<16x64xbf16>, vector<16x64xbf16>, vector<16x64xbf16>, vector<16x64xbf16>, vector<16x64xbf16> -> vector<144x64xbf16>
    %c0_91 = arith.constant 0 : index
    %c0_92 = arith.constant 0 : index
    %153 = vector.load %arg6[%c0_91, %c0_92] : memref<8x144xbf16, #tpu.memory_space<vmem>>, vector<8x144xbf16>
    %cst_93 = arith.constant dense<0.000000e+00> : vector<8x64xf32>
    %154 = tpu.matmul %153, %152, %cst_93 {dimension_numbers = #tpu.dot_dimension_numbers<[1], [0], [0], [1], [0, 0, 1, 1], [], []>} : vector<8x144xbf16>, vector<144x64xbf16>, vector<8x64xf32> -> vector<8x64xf32>
    %c0_94 = arith.constant 0 : index
    %c0_95 = arith.constant 0 : index
    %155 = vector.load %arg7[%c0_94, %c0_95] : memref<8x1xf32, #tpu.memory_space<vmem>>, vector<8x1xf32>
    %156 = vector.broadcast %155 : vector<8x1xf32> to vector<8x64xf32>
    %157 = arith.addf %154, %156 : vector<8x64xf32>
    %cst_96 = arith.constant 0.000000e+00 : f32
    %158 = vector.broadcast %cst_96 : f32 to vector<8x64xf32>
    %159 = arith.cmpf oge, %157, %158 : vector<8x64xf32>
    %cst_97 = arith.constant 0.00999999977 : f32
    %160 = vector.broadcast %cst_97 : f32 to vector<8x64xf32>
    %161 = arith.mulf %160, %157 : vector<8x64xf32>
    %162 = arith.select %159, %157, %161 : vector<8x64xi1>, vector<8x64xf32>
    %163 = arith.truncf %162 : vector<8x64xf32> to vector<8x64xbf16>
    %c0_98 = arith.constant 0 : index
    %c0_99 = arith.constant 0 : index
    %164 = vector.load %arg8[%c0_98, %c0_99] : memref<8x8xbf16, #tpu.memory_space<vmem>>, vector<8x8xbf16>
    %cst_100 = arith.constant dense<0.000000e+00> : vector<8x64xf32>
    %165 = tpu.matmul %164, %163, %cst_100 {dimension_numbers = #tpu.dot_dimension_numbers<[1], [0], [0], [1], [0, 0, 1, 1], [], []>} : vector<8x8xbf16>, vector<8x64xbf16>, vector<8x64xf32> -> vector<8x64xf32>
    %c0_101 = arith.constant 0 : index
    %c0_102 = arith.constant 0 : index
    %166 = vector.load %arg9[%c0_101, %c0_102] : memref<8x1xf32, #tpu.memory_space<vmem>>, vector<8x1xf32>
    %167 = vector.broadcast %166 : vector<8x1xf32> to vector<8x64xf32>
    %168 = arith.addf %165, %167 : vector<8x64xf32>
    %cst_103 = arith.constant 0.000000e+00 : f32
    %169 = vector.broadcast %cst_103 : f32 to vector<8x64xf32>
    %170 = arith.cmpf oge, %168, %169 : vector<8x64xf32>
    %cst_104 = arith.constant 0.00999999977 : f32
    %171 = vector.broadcast %cst_104 : f32 to vector<8x64xf32>
    %172 = arith.mulf %171, %168 : vector<8x64xf32>
    %173 = arith.select %170, %168, %172 : vector<8x64xi1>, vector<8x64xf32>
    %174 = arith.truncf %173 : vector<8x64xf32> to vector<8x64xbf16>
    %c0_105 = arith.constant 0 : index
    %c0_106 = arith.constant 0 : index
    %175 = vector.load %arg10[%c0_105, %c0_106] : memref<8x8xbf16, #tpu.memory_space<vmem>>, vector<8x8xbf16>
    %cst_107 = arith.constant dense<0.000000e+00> : vector<8x64xf32>
    %176 = tpu.matmul %175, %174, %cst_107 {dimension_numbers = #tpu.dot_dimension_numbers<[1], [0], [0], [1], [0, 0, 1, 1], [], []>} : vector<8x8xbf16>, vector<8x64xbf16>, vector<8x64xf32> -> vector<8x64xf32>
    %c0_108 = arith.constant 0 : index
    %c0_109 = arith.constant 0 : index
    %177 = vector.load %arg11[%c0_108, %c0_109] : memref<8x1xf32, #tpu.memory_space<vmem>>, vector<8x1xf32>
    %178 = vector.broadcast %177 : vector<8x1xf32> to vector<8x64xf32>
    %179 = arith.addf %176, %178 : vector<8x64xf32>
    %cst_110 = arith.constant 0.000000e+00 : f32
    %180 = vector.broadcast %cst_110 : f32 to vector<8x64xf32>
    %181 = arith.cmpf oge, %179, %180 : vector<8x64xf32>
    %cst_111 = arith.constant 0.00999999977 : f32
    %182 = vector.broadcast %cst_111 : f32 to vector<8x64xf32>
    %183 = arith.mulf %182, %179 : vector<8x64xf32>
    %184 = arith.select %181, %179, %183 : vector<8x64xi1>, vector<8x64xf32>
    %185 = arith.truncf %184 : vector<8x64xf32> to vector<8x64xbf16>
    %c0_112 = arith.constant 0 : index
    %c0_113 = arith.constant 0 : index
    %c0_114 = arith.constant 0 : index
    %186 = vector.load %arg12[%c0_112, %c0_113, %c0_114] : memref<1x8x64xbf16, #tpu.memory_space<vmem>>, vector<1x8x64xbf16>
    %187 = vector.shape_cast %186 : vector<1x8x64xbf16> to vector<8x64xbf16>
    %188 = vector.shape_cast %185 : vector<8x64xbf16> to vector<1x8x64xbf16>
    tpu.vector_store %arg12[%c0_112, %c0_113, %c0_114], %188 {strides = array<i32>} : memref<1x8x64xbf16, #tpu.memory_space<vmem>>, vector<1x8x64xbf16>,
    return
  }
  func.func @transform_0(%arg0: i32) -> (i32, i32, i32) {
    %c0_i32 = arith.constant 0 : i32
    %c0_i32_0 = arith.constant 0 : i32
    %c0_i32_1 = arith.constant 0 : i32
    return %arg0, %c0_i32, %c0_i32_0 : i32, i32, i32
  }
  func.func @transform_1(%arg0: i32) -> (i32, i32) {
    %c0_i32 = arith.constant 0 : i32
    %c0_i32_0 = arith.constant 0 : i32
    %c0_i32_1 = arith.constant 0 : i32
    return %c0_i32, %c0_i32_0 : i32, i32
  }
  func.func @transform_2(%arg0: i32) -> (i32, i32) {
    %c0_i32 = arith.constant 0 : i32
    %c0_i32_0 = arith.constant 0 : i32
    %c0_i32_1 = arith.constant 0 : i32
    return %c0_i32, %c0_i32_0 : i32, i32
  }
  func.func @transform_3(%arg0: i32) -> (i32, i32) {
    %c0_i32 = arith.constant 0 : i32
    %c0_i32_0 = arith.constant 0 : i32
    %c0_i32_1 = arith.constant 0 : i32
    return %c0_i32, %c0_i32_0 : i32, i32
  }
  func.func @transform_4(%arg0: i32) -> (i32, i32) {
    %c0_i32 = arith.constant 0 : i32
    %c0_i32_0 = arith.constant 0 : i32
    %c0_i32_1 = arith.constant 0 : i32
    return %c0_i32, %c0_i32_0 : i32, i32
  }
  func.func @transform_5(%arg0: i32) -> (i32, i32) {
    %c0_i32 = arith.constant 0 : i32
    %c0_i32_0 = arith.constant 0 : i32
    %c0_i32_1 = arith.constant 0 : i32
    return %c0_i32, %c0_i32_0 : i32, i32
  }
  func.func @transform_6(%arg0: i32) -> (i32, i32) {
    %c0_i32 = arith.constant 0 : i32
    %c0_i32_0 = arith.constant 0 : i32
    %c0_i32_1 = arith.constant 0 : i32
    return %c0_i32, %c0_i32_0 : i32, i32
  }
  func.func @transform_7(%arg0: i32) -> (i32, i32) {
    %c0_i32 = arith.constant 0 : i32
    %c0_i32_0 = arith.constant 0 : i32
    %c0_i32_1 = arith.constant 0 : i32
    return %c0_i32, %c0_i32_0 : i32, i32
  }
  func.func @transform_8(%arg0: i32) -> (i32, i32) {
    %c0_i32 = arith.constant 0 : i32
    %c0_i32_0 = arith.constant 0 : i32
    %c0_i32_1 = arith.constant 0 : i32
    return %c0_i32, %c0_i32_0 : i32, i32
  }
  func.func @transform_9(%arg0: i32) -> (i32, i32) {
    %c0_i32 = arith.constant 0 : i32
    %c0_i32_0 = arith.constant 0 : i32
    %c0_i32_1 = arith.constant 0 : i32
    return %c0_i32, %c0_i32_0 : i32, i32
  }
  func.func @transform_10(%arg0: i32) -> (i32, i32) {
    %c0_i32 = arith.constant 0 : i32
    %c0_i32_0 = arith.constant 0 : i32
    %c0_i32_1 = arith.constant 0 : i32
    return %c0_i32, %c0_i32_0 : i32, i32
  }
  func.func @transform_11(%arg0: i32) -> (i32, i32, i32) {
    %c0_i32 = arith.constant 0 : i32
    %c0_i32_0 = arith.constant 0 : i32
    %c0_i32_1 = arith.constant 0 : i32
    return %arg0, %c0_i32, %c0_i32_0 : i32, i32, i32
  }
}

module attributes {stable_mosaic.version = 11 : i64} {
  func.func @kernel(%arg0: i32, %arg1: memref<1x4x256xbf16, #tpu.memory_space<vmem>>, %arg2: memref<1x8x256xbf16, #tpu.memory_space<vmem>>, %arg3: memref<4x144xbf16, #tpu.memory_space<vmem>>, %arg4: memref<4x1xf32, #tpu.memory_space<vmem>>, %arg5: memref<4x144xbf16, #tpu.memory_space<vmem>>, %arg6: memref<4x1xf32, #tpu.memory_space<vmem>>, %arg7: memref<4x144xbf16, #tpu.memory_space<vmem>>, %arg8: memref<4x1xf32, #tpu.memory_space<vmem>>, %arg9: memref<4x4xbf16, #tpu.memory_space<vmem>>, %arg10: memref<4x1xf32, #tpu.memory_space<vmem>>, %arg11: memref<4x4xbf16, #tpu.memory_space<vmem>>, %arg12: memref<4x1xf32, #tpu.memory_space<vmem>>, %arg13: memref<1x4xbf16, #tpu.memory_space<vmem>>, %arg14: memref<1x1xf32, #tpu.memory_space<vmem>>, %arg15: memref<1x1x256xf32, #tpu.memory_space<vmem>>, %arg16: memref<16x290xbf16, #tpu.memory_space<vmem>>) attributes {dimension_semantics = [#tpu.dimension_semantics<parallel>], iteration_bounds = array<i64: 2>, scalar_prefetch = 0 : i64, scratch_operands = 1 : i64, tpu.core_type = #tpu.core_type<tc>, window_params = [{transform_indices = @transform_0, window_bounds = array<i64: 1, 4, 256>}, {transform_indices = @transform_1, window_bounds = array<i64: 1, 8, 256>}, {pipeline_mode = #tpu.pipeline_mode<synchronous>, transform_indices = @transform_2, window_bounds = array<i64: 4, 144>}, {pipeline_mode = #tpu.pipeline_mode<synchronous>, transform_indices = @transform_3, window_bounds = array<i64: 4, 1>}, {pipeline_mode = #tpu.pipeline_mode<synchronous>, transform_indices = @transform_4, window_bounds = array<i64: 4, 144>}, {pipeline_mode = #tpu.pipeline_mode<synchronous>, transform_indices = @transform_5, window_bounds = array<i64: 4, 1>}, {pipeline_mode = #tpu.pipeline_mode<synchronous>, transform_indices = @transform_6, window_bounds = array<i64: 4, 144>}, {pipeline_mode = #tpu.pipeline_mode<synchronous>, transform_indices = @transform_7, window_bounds = array<i64: 4, 1>}, {pipeline_mode = #tpu.pipeline_mode<synchronous>, transform_indices = @transform_8, window_bounds = array<i64: 4, 4>}, {pipeline_mode = #tpu.pipeline_mode<synchronous>, transform_indices = @transform_9, window_bounds = array<i64: 4, 1>}, {pipeline_mode = #tpu.pipeline_mode<synchronous>, transform_indices = @transform_10, window_bounds = array<i64: 4, 4>}, {pipeline_mode = #tpu.pipeline_mode<synchronous>, transform_indices = @transform_11, window_bounds = array<i64: 4, 1>}, {pipeline_mode = #tpu.pipeline_mode<synchronous>, transform_indices = @transform_12, window_bounds = array<i64: 1, 4>}, {pipeline_mode = #tpu.pipeline_mode<synchronous>, transform_indices = @transform_13, window_bounds = array<i64: 1, 1>}, {transform_indices = @transform_14, window_bounds = array<i64: 1, 1, 256>}]} {
    %c0_i32 = arith.constant 0 : i32
    %0 = arith.cmpi eq, %arg0, %c0_i32 : i32
    %1 = arith.extui %0 : i1 to i32
    %c0_i32_0 = arith.constant 0 : i32
    %2 = arith.cmpi ne, %1, %c0_i32_0 : i32
    scf.if %2 {
      %cst_126 = arith.constant 0.000000e+00 : bf16
      %202 = vector.broadcast %cst_126 : bf16 to vector<16x290xbf16>
      %c0_127 = arith.constant 0 : index
      %c0_128 = arith.constant 0 : index
      %203 = vector.load %arg16[%c0_127, %c0_128] : memref<16x290xbf16, #tpu.memory_space<vmem>>, vector<16x290xbf16>
      tpu.vector_store %arg16[%c0_127, %c0_128], %202 {strides = array<i32>} : memref<16x290xbf16, #tpu.memory_space<vmem>>, vector<16x290xbf16>,
    } else {
    }
    %3 = tpu.iota {dimensions = array<i32: 1>} : vector<1x256xi32>
    %c16_i32 = arith.constant 16 : i32
    %c0_i32_1 = arith.constant 0 : i32
    %4 = arith.cmpi eq, %c16_i32, %c0_i32_1 : i32
    %c1_i32 = arith.constant 1 : i32
    %5 = arith.select %4, %c1_i32, %c16_i32 : i32
    %6 = vector.broadcast %5 : i32 to vector<1x256xi32>
    %7 = arith.remsi %3, %6 : vector<1x256xi32>
    %c0_i32_2 = arith.constant 0 : i32
    %8 = vector.broadcast %c0_i32_2 : i32 to vector<1x256xi32>
    %9 = arith.cmpi ne, %7, %8 : vector<1x256xi32>
    %c0_i32_3 = arith.constant 0 : i32
    %10 = vector.broadcast %c0_i32_3 : i32 to vector<1x256xi32>
    %11 = arith.cmpi slt, %7, %10 : vector<1x256xi32>
    %c0_i32_4 = arith.constant 0 : i32
    %12 = arith.cmpi slt, %5, %c0_i32_4 : i32
    %13 = vector.broadcast %12 : i1 to vector<1x256xi1>
    %14 = vector.broadcast %13 : vector<1x256xi1> to vector<1x256xi1>
    %15 = arith.xori %11, %14 : vector<1x256xi1>
    %16 = arith.andi %15, %9 : vector<1x256xi1>
    %17 = vector.broadcast %5 : i32 to vector<1x256xi32>
    %18 = arith.addi %7, %17 : vector<1x256xi32>
    %19 = arith.select %16, %18, %7 : vector<1x256xi1>, vector<1x256xi32>
    %c0_i32_5 = arith.constant 0 : i32
    %20 = vector.broadcast %c0_i32_5 : i32 to vector<1x256xi32>
    %21 = arith.cmpi ne, %19, %20 : vector<1x256xi32>
    %c15_i32 = arith.constant 15 : i32
    %22 = vector.broadcast %c15_i32 : i32 to vector<1x256xi32>
    %23 = arith.cmpi ne, %19, %22 : vector<1x256xi32>
    %c0 = arith.constant 0 : index
    %c0_6 = arith.constant 0 : index
    %c0_7 = arith.constant 0 : index
    %24 = vector.load %arg1[%c0, %c0_6, %c0_7] : memref<1x4x256xbf16, #tpu.memory_space<vmem>>, vector<1x4x256xbf16>
    %25 = vector.shape_cast %24 : vector<1x4x256xbf16> to vector<4x256xbf16>
    %c0_8 = arith.constant 0 : index
    %c17 = arith.constant 17 : index
    %26 = vector.load %arg16[%c0_8, %c17] : memref<16x290xbf16, #tpu.memory_space<vmem>>, vector<4x256xbf16>
    tpu.vector_store %arg16[%c0_8, %c17], %25 {strides = array<i32>} : memref<16x290xbf16, #tpu.memory_space<vmem>>, vector<4x256xbf16>,
    %c0_9 = arith.constant 0 : index
    %c0_10 = arith.constant 0 : index
    %c0_11 = arith.constant 0 : index
    %27 = vector.load %arg2[%c0_9, %c0_10, %c0_11] : memref<1x8x256xbf16, #tpu.memory_space<vmem>>, vector<1x8x256xbf16>
    %28 = vector.shape_cast %27 : vector<1x8x256xbf16> to vector<8x256xbf16>
    %c4 = arith.constant 4 : index
    %c17_12 = arith.constant 17 : index
    %29 = vector.load %arg16[%c4, %c17_12] : memref<16x290xbf16, #tpu.memory_space<vmem>>, vector<8x256xbf16>
    tpu.vector_store %arg16[%c4, %c17_12], %28 {strides = array<i32>} : memref<16x290xbf16, #tpu.memory_space<vmem>>, vector<8x256xbf16>,
    %c0_13 = arith.constant 0 : index
    %c0_14 = arith.constant 0 : index
    %30 = vector.load %arg16[%c0_13, %c0_14] : memref<16x290xbf16, #tpu.memory_space<vmem>>, vector<16x256xbf16>
    %cst = arith.constant 0.000000e+00 : bf16
    %31 = vector.broadcast %cst : bf16 to vector<16x256xbf16>
    %32 = vector.shape_cast %21 : vector<1x256xi1> to vector<1x256xi1>
    %33 = vector.broadcast %32 : vector<1x256xi1> to vector<16x256xi1>
    %34 = arith.select %33, %30, %31 : vector<16x256xi1>, vector<16x256xbf16>
    %c0_15 = arith.constant 0 : index
    %c1 = arith.constant 1 : index
    %35 = vector.load %arg16[%c0_15, %c1] : memref<16x290xbf16, #tpu.memory_space<vmem>>, vector<16x256xbf16>
    %c0_16 = arith.constant 0 : index
    %c2 = arith.constant 2 : index
    %36 = vector.load %arg16[%c0_16, %c2] : memref<16x290xbf16, #tpu.memory_space<vmem>>, vector<16x256xbf16>
    %cst_17 = arith.constant 0.000000e+00 : bf16
    %37 = vector.broadcast %cst_17 : bf16 to vector<16x256xbf16>
    %38 = vector.shape_cast %23 : vector<1x256xi1> to vector<1x256xi1>
    %39 = vector.broadcast %38 : vector<1x256xi1> to vector<16x256xi1>
    %40 = arith.select %39, %36, %37 : vector<16x256xi1>, vector<16x256xbf16>
    %c0_18 = arith.constant 0 : index
    %c16 = arith.constant 16 : index
    %41 = vector.load %arg16[%c0_18, %c16] : memref<16x290xbf16, #tpu.memory_space<vmem>>, vector<16x256xbf16>
    %cst_19 = arith.constant 0.000000e+00 : bf16
    %42 = vector.broadcast %cst_19 : bf16 to vector<16x256xbf16>
    %43 = vector.shape_cast %21 : vector<1x256xi1> to vector<1x256xi1>
    %44 = vector.broadcast %43 : vector<1x256xi1> to vector<16x256xi1>
    %45 = arith.select %44, %41, %42 : vector<16x256xi1>, vector<16x256xbf16>
    %c0_20 = arith.constant 0 : index
    %c17_21 = arith.constant 17 : index
    %46 = vector.load %arg16[%c0_20, %c17_21] : memref<16x290xbf16, #tpu.memory_space<vmem>>, vector<16x256xbf16>
    %c0_22 = arith.constant 0 : index
    %c18 = arith.constant 18 : index
    %47 = vector.load %arg16[%c0_22, %c18] : memref<16x290xbf16, #tpu.memory_space<vmem>>, vector<16x256xbf16>
    %cst_23 = arith.constant 0.000000e+00 : bf16
    %48 = vector.broadcast %cst_23 : bf16 to vector<16x256xbf16>
    %49 = vector.shape_cast %23 : vector<1x256xi1> to vector<1x256xi1>
    %50 = vector.broadcast %49 : vector<1x256xi1> to vector<16x256xi1>
    %51 = arith.select %50, %47, %48 : vector<16x256xi1>, vector<16x256xbf16>
    %c0_24 = arith.constant 0 : index
    %c32 = arith.constant 32 : index
    %52 = vector.load %arg16[%c0_24, %c32] : memref<16x290xbf16, #tpu.memory_space<vmem>>, vector<16x256xbf16>
    %cst_25 = arith.constant 0.000000e+00 : bf16
    %53 = vector.broadcast %cst_25 : bf16 to vector<16x256xbf16>
    %54 = vector.shape_cast %21 : vector<1x256xi1> to vector<1x256xi1>
    %55 = vector.broadcast %54 : vector<1x256xi1> to vector<16x256xi1>
    %56 = arith.select %55, %52, %53 : vector<16x256xi1>, vector<16x256xbf16>
    %c0_26 = arith.constant 0 : index
    %c33 = arith.constant 33 : index
    %57 = vector.load %arg16[%c0_26, %c33] : memref<16x290xbf16, #tpu.memory_space<vmem>>, vector<16x256xbf16>
    %c0_27 = arith.constant 0 : index
    %c34 = arith.constant 34 : index
    %58 = vector.load %arg16[%c0_27, %c34] : memref<16x290xbf16, #tpu.memory_space<vmem>>, vector<16x256xbf16>
    %cst_28 = arith.constant 0.000000e+00 : bf16
    %59 = vector.broadcast %cst_28 : bf16 to vector<16x256xbf16>
    %60 = vector.shape_cast %23 : vector<1x256xi1> to vector<1x256xi1>
    %61 = vector.broadcast %60 : vector<1x256xi1> to vector<16x256xi1>
    %62 = arith.select %61, %58, %59 : vector<16x256xi1>, vector<16x256xbf16>
    %63 = tpu.concatenate %34, %35, %40, %45, %46, %51, %56, %57, %62 in 0 : vector<16x256xbf16>, vector<16x256xbf16>, vector<16x256xbf16>, vector<16x256xbf16>, vector<16x256xbf16>, vector<16x256xbf16>, vector<16x256xbf16>, vector<16x256xbf16>, vector<16x256xbf16> -> vector<144x256xbf16>
    %c0_29 = arith.constant 0 : index
    %c0_30 = arith.constant 0 : index
    %64 = vector.load %arg3[%c0_29, %c0_30] : memref<4x144xbf16, #tpu.memory_space<vmem>>, vector<4x144xbf16>
    %cst_31 = arith.constant dense<0.000000e+00> : vector<4x256xf32>
    %65 = tpu.matmul %64, %63, %cst_31 {dimension_numbers = #tpu.dot_dimension_numbers<[1], [0], [0], [1], [0, 0, 1, 1], [], []>} : vector<4x144xbf16>, vector<144x256xbf16>, vector<4x256xf32> -> vector<4x256xf32>
    %c0_32 = arith.constant 0 : index
    %c0_33 = arith.constant 0 : index
    %66 = vector.load %arg4[%c0_32, %c0_33] : memref<4x1xf32, #tpu.memory_space<vmem>>, vector<4x1xf32>
    %67 = vector.broadcast %66 : vector<4x1xf32> to vector<4x256xf32>
    %68 = arith.addf %65, %67 : vector<4x256xf32>
    %cst_34 = arith.constant 0.000000e+00 : f32
    %69 = vector.broadcast %cst_34 : f32 to vector<4x256xf32>
    %70 = arith.cmpf oge, %68, %69 : vector<4x256xf32>
    %cst_35 = arith.constant 0.00999999977 : f32
    %71 = vector.broadcast %cst_35 : f32 to vector<4x256xf32>
    %72 = arith.mulf %71, %68 : vector<4x256xf32>
    %73 = arith.select %70, %68, %72 : vector<4x256xi1>, vector<4x256xf32>
    %74 = arith.truncf %73 : vector<4x256xf32> to vector<4x256xbf16>
    %c0_36 = arith.constant 0 : index
    %c17_37 = arith.constant 17 : index
    %75 = vector.load %arg16[%c0_36, %c17_37] : memref<16x290xbf16, #tpu.memory_space<vmem>>, vector<4x256xbf16>
    tpu.vector_store %arg16[%c0_36, %c17_37], %74 {strides = array<i32>} : memref<16x290xbf16, #tpu.memory_space<vmem>>, vector<4x256xbf16>,
    %c0_38 = arith.constant 0 : index
    %c0_39 = arith.constant 0 : index
    %76 = vector.load %arg16[%c0_38, %c0_39] : memref<16x290xbf16, #tpu.memory_space<vmem>>, vector<16x256xbf16>
    %cst_40 = arith.constant 0.000000e+00 : bf16
    %77 = vector.broadcast %cst_40 : bf16 to vector<16x256xbf16>
    %78 = vector.shape_cast %21 : vector<1x256xi1> to vector<1x256xi1>
    %79 = vector.broadcast %78 : vector<1x256xi1> to vector<16x256xi1>
    %80 = arith.select %79, %76, %77 : vector<16x256xi1>, vector<16x256xbf16>
    %c0_41 = arith.constant 0 : index
    %c1_42 = arith.constant 1 : index
    %81 = vector.load %arg16[%c0_41, %c1_42] : memref<16x290xbf16, #tpu.memory_space<vmem>>, vector<16x256xbf16>
    %c0_43 = arith.constant 0 : index
    %c2_44 = arith.constant 2 : index
    %82 = vector.load %arg16[%c0_43, %c2_44] : memref<16x290xbf16, #tpu.memory_space<vmem>>, vector<16x256xbf16>
    %cst_45 = arith.constant 0.000000e+00 : bf16
    %83 = vector.broadcast %cst_45 : bf16 to vector<16x256xbf16>
    %84 = vector.shape_cast %23 : vector<1x256xi1> to vector<1x256xi1>
    %85 = vector.broadcast %84 : vector<1x256xi1> to vector<16x256xi1>
    %86 = arith.select %85, %82, %83 : vector<16x256xi1>, vector<16x256xbf16>
    %c0_46 = arith.constant 0 : index
    %c16_47 = arith.constant 16 : index
    %87 = vector.load %arg16[%c0_46, %c16_47] : memref<16x290xbf16, #tpu.memory_space<vmem>>, vector<16x256xbf16>
    %cst_48 = arith.constant 0.000000e+00 : bf16
    %88 = vector.broadcast %cst_48 : bf16 to vector<16x256xbf16>
    %89 = vector.shape_cast %21 : vector<1x256xi1> to vector<1x256xi1>
    %90 = vector.broadcast %89 : vector<1x256xi1> to vector<16x256xi1>
    %91 = arith.select %90, %87, %88 : vector<16x256xi1>, vector<16x256xbf16>
    %c0_49 = arith.constant 0 : index
    %c17_50 = arith.constant 17 : index
    %92 = vector.load %arg16[%c0_49, %c17_50] : memref<16x290xbf16, #tpu.memory_space<vmem>>, vector<16x256xbf16>
    %c0_51 = arith.constant 0 : index
    %c18_52 = arith.constant 18 : index
    %93 = vector.load %arg16[%c0_51, %c18_52] : memref<16x290xbf16, #tpu.memory_space<vmem>>, vector<16x256xbf16>
    %cst_53 = arith.constant 0.000000e+00 : bf16
    %94 = vector.broadcast %cst_53 : bf16 to vector<16x256xbf16>
    %95 = vector.shape_cast %23 : vector<1x256xi1> to vector<1x256xi1>
    %96 = vector.broadcast %95 : vector<1x256xi1> to vector<16x256xi1>
    %97 = arith.select %96, %93, %94 : vector<16x256xi1>, vector<16x256xbf16>
    %c0_54 = arith.constant 0 : index
    %c32_55 = arith.constant 32 : index
    %98 = vector.load %arg16[%c0_54, %c32_55] : memref<16x290xbf16, #tpu.memory_space<vmem>>, vector<16x256xbf16>
    %cst_56 = arith.constant 0.000000e+00 : bf16
    %99 = vector.broadcast %cst_56 : bf16 to vector<16x256xbf16>
    %100 = vector.shape_cast %21 : vector<1x256xi1> to vector<1x256xi1>
    %101 = vector.broadcast %100 : vector<1x256xi1> to vector<16x256xi1>
    %102 = arith.select %101, %98, %99 : vector<16x256xi1>, vector<16x256xbf16>
    %c0_57 = arith.constant 0 : index
    %c33_58 = arith.constant 33 : index
    %103 = vector.load %arg16[%c0_57, %c33_58] : memref<16x290xbf16, #tpu.memory_space<vmem>>, vector<16x256xbf16>
    %c0_59 = arith.constant 0 : index
    %c34_60 = arith.constant 34 : index
    %104 = vector.load %arg16[%c0_59, %c34_60] : memref<16x290xbf16, #tpu.memory_space<vmem>>, vector<16x256xbf16>
    %cst_61 = arith.constant 0.000000e+00 : bf16
    %105 = vector.broadcast %cst_61 : bf16 to vector<16x256xbf16>
    %106 = vector.shape_cast %23 : vector<1x256xi1> to vector<1x256xi1>
    %107 = vector.broadcast %106 : vector<1x256xi1> to vector<16x256xi1>
    %108 = arith.select %107, %104, %105 : vector<16x256xi1>, vector<16x256xbf16>
    %109 = tpu.concatenate %80, %81, %86, %91, %92, %97, %102, %103, %108 in 0 : vector<16x256xbf16>, vector<16x256xbf16>, vector<16x256xbf16>, vector<16x256xbf16>, vector<16x256xbf16>, vector<16x256xbf16>, vector<16x256xbf16>, vector<16x256xbf16>, vector<16x256xbf16> -> vector<144x256xbf16>
    %c0_62 = arith.constant 0 : index
    %c0_63 = arith.constant 0 : index
    %110 = vector.load %arg5[%c0_62, %c0_63] : memref<4x144xbf16, #tpu.memory_space<vmem>>, vector<4x144xbf16>
    %cst_64 = arith.constant dense<0.000000e+00> : vector<4x256xf32>
    %111 = tpu.matmul %110, %109, %cst_64 {dimension_numbers = #tpu.dot_dimension_numbers<[1], [0], [0], [1], [0, 0, 1, 1], [], []>} : vector<4x144xbf16>, vector<144x256xbf16>, vector<4x256xf32> -> vector<4x256xf32>
    %c0_65 = arith.constant 0 : index
    %c0_66 = arith.constant 0 : index
    %112 = vector.load %arg6[%c0_65, %c0_66] : memref<4x1xf32, #tpu.memory_space<vmem>>, vector<4x1xf32>
    %113 = vector.broadcast %112 : vector<4x1xf32> to vector<4x256xf32>
    %114 = arith.addf %111, %113 : vector<4x256xf32>
    %cst_67 = arith.constant 0.000000e+00 : f32
    %115 = vector.broadcast %cst_67 : f32 to vector<4x256xf32>
    %116 = arith.cmpf oge, %114, %115 : vector<4x256xf32>
    %cst_68 = arith.constant 0.00999999977 : f32
    %117 = vector.broadcast %cst_68 : f32 to vector<4x256xf32>
    %118 = arith.mulf %117, %114 : vector<4x256xf32>
    %119 = arith.select %116, %114, %118 : vector<4x256xi1>, vector<4x256xf32>
    %120 = arith.truncf %119 : vector<4x256xf32> to vector<4x256xbf16>
    %c0_69 = arith.constant 0 : index
    %c17_70 = arith.constant 17 : index
    %121 = vector.load %arg16[%c0_69, %c17_70] : memref<16x290xbf16, #tpu.memory_space<vmem>>, vector<4x256xbf16>
    tpu.vector_store %arg16[%c0_69, %c17_70], %120 {strides = array<i32>} : memref<16x290xbf16, #tpu.memory_space<vmem>>, vector<4x256xbf16>,
    %c0_71 = arith.constant 0 : index
    %c0_72 = arith.constant 0 : index
    %122 = vector.load %arg16[%c0_71, %c0_72] : memref<16x290xbf16, #tpu.memory_space<vmem>>, vector<16x256xbf16>
    %cst_73 = arith.constant 0.000000e+00 : bf16
    %123 = vector.broadcast %cst_73 : bf16 to vector<16x256xbf16>
    %124 = vector.shape_cast %21 : vector<1x256xi1> to vector<1x256xi1>
    %125 = vector.broadcast %124 : vector<1x256xi1> to vector<16x256xi1>
    %126 = arith.select %125, %122, %123 : vector<16x256xi1>, vector<16x256xbf16>
    %c0_74 = arith.constant 0 : index
    %c1_75 = arith.constant 1 : index
    %127 = vector.load %arg16[%c0_74, %c1_75] : memref<16x290xbf16, #tpu.memory_space<vmem>>, vector<16x256xbf16>
    %c0_76 = arith.constant 0 : index
    %c2_77 = arith.constant 2 : index
    %128 = vector.load %arg16[%c0_76, %c2_77] : memref<16x290xbf16, #tpu.memory_space<vmem>>, vector<16x256xbf16>
    %cst_78 = arith.constant 0.000000e+00 : bf16
    %129 = vector.broadcast %cst_78 : bf16 to vector<16x256xbf16>
    %130 = vector.shape_cast %23 : vector<1x256xi1> to vector<1x256xi1>
    %131 = vector.broadcast %130 : vector<1x256xi1> to vector<16x256xi1>
    %132 = arith.select %131, %128, %129 : vector<16x256xi1>, vector<16x256xbf16>
    %c0_79 = arith.constant 0 : index
    %c16_80 = arith.constant 16 : index
    %133 = vector.load %arg16[%c0_79, %c16_80] : memref<16x290xbf16, #tpu.memory_space<vmem>>, vector<16x256xbf16>
    %cst_81 = arith.constant 0.000000e+00 : bf16
    %134 = vector.broadcast %cst_81 : bf16 to vector<16x256xbf16>
    %135 = vector.shape_cast %21 : vector<1x256xi1> to vector<1x256xi1>
    %136 = vector.broadcast %135 : vector<1x256xi1> to vector<16x256xi1>
    %137 = arith.select %136, %133, %134 : vector<16x256xi1>, vector<16x256xbf16>
    %c0_82 = arith.constant 0 : index
    %c17_83 = arith.constant 17 : index
    %138 = vector.load %arg16[%c0_82, %c17_83] : memref<16x290xbf16, #tpu.memory_space<vmem>>, vector<16x256xbf16>
    %c0_84 = arith.constant 0 : index
    %c18_85 = arith.constant 18 : index
    %139 = vector.load %arg16[%c0_84, %c18_85] : memref<16x290xbf16, #tpu.memory_space<vmem>>, vector<16x256xbf16>
    %cst_86 = arith.constant 0.000000e+00 : bf16
    %140 = vector.broadcast %cst_86 : bf16 to vector<16x256xbf16>
    %141 = vector.shape_cast %23 : vector<1x256xi1> to vector<1x256xi1>
    %142 = vector.broadcast %141 : vector<1x256xi1> to vector<16x256xi1>
    %143 = arith.select %142, %139, %140 : vector<16x256xi1>, vector<16x256xbf16>
    %c0_87 = arith.constant 0 : index
    %c32_88 = arith.constant 32 : index
    %144 = vector.load %arg16[%c0_87, %c32_88] : memref<16x290xbf16, #tpu.memory_space<vmem>>, vector<16x256xbf16>
    %cst_89 = arith.constant 0.000000e+00 : bf16
    %145 = vector.broadcast %cst_89 : bf16 to vector<16x256xbf16>
    %146 = vector.shape_cast %21 : vector<1x256xi1> to vector<1x256xi1>
    %147 = vector.broadcast %146 : vector<1x256xi1> to vector<16x256xi1>
    %148 = arith.select %147, %144, %145 : vector<16x256xi1>, vector<16x256xbf16>
    %c0_90 = arith.constant 0 : index
    %c33_91 = arith.constant 33 : index
    %149 = vector.load %arg16[%c0_90, %c33_91] : memref<16x290xbf16, #tpu.memory_space<vmem>>, vector<16x256xbf16>
    %c0_92 = arith.constant 0 : index
    %c34_93 = arith.constant 34 : index
    %150 = vector.load %arg16[%c0_92, %c34_93] : memref<16x290xbf16, #tpu.memory_space<vmem>>, vector<16x256xbf16>
    %cst_94 = arith.constant 0.000000e+00 : bf16
    %151 = vector.broadcast %cst_94 : bf16 to vector<16x256xbf16>
    %152 = vector.shape_cast %23 : vector<1x256xi1> to vector<1x256xi1>
    %153 = vector.broadcast %152 : vector<1x256xi1> to vector<16x256xi1>
    %154 = arith.select %153, %150, %151 : vector<16x256xi1>, vector<16x256xbf16>
    %155 = tpu.concatenate %126, %127, %132, %137, %138, %143, %148, %149, %154 in 0 : vector<16x256xbf16>, vector<16x256xbf16>, vector<16x256xbf16>, vector<16x256xbf16>, vector<16x256xbf16>, vector<16x256xbf16>, vector<16x256xbf16>, vector<16x256xbf16>, vector<16x256xbf16> -> vector<144x256xbf16>
    %c0_95 = arith.constant 0 : index
    %c0_96 = arith.constant 0 : index
    %156 = vector.load %arg7[%c0_95, %c0_96] : memref<4x144xbf16, #tpu.memory_space<vmem>>, vector<4x144xbf16>
    %cst_97 = arith.constant dense<0.000000e+00> : vector<4x256xf32>
    %157 = tpu.matmul %156, %155, %cst_97 {dimension_numbers = #tpu.dot_dimension_numbers<[1], [0], [0], [1], [0, 0, 1, 1], [], []>} : vector<4x144xbf16>, vector<144x256xbf16>, vector<4x256xf32> -> vector<4x256xf32>
    %c0_98 = arith.constant 0 : index
    %c0_99 = arith.constant 0 : index
    %158 = vector.load %arg8[%c0_98, %c0_99] : memref<4x1xf32, #tpu.memory_space<vmem>>, vector<4x1xf32>
    %159 = vector.broadcast %158 : vector<4x1xf32> to vector<4x256xf32>
    %160 = arith.addf %157, %159 : vector<4x256xf32>
    %cst_100 = arith.constant 0.000000e+00 : f32
    %161 = vector.broadcast %cst_100 : f32 to vector<4x256xf32>
    %162 = arith.cmpf oge, %160, %161 : vector<4x256xf32>
    %cst_101 = arith.constant 0.00999999977 : f32
    %163 = vector.broadcast %cst_101 : f32 to vector<4x256xf32>
    %164 = arith.mulf %163, %160 : vector<4x256xf32>
    %165 = arith.select %162, %160, %164 : vector<4x256xi1>, vector<4x256xf32>
    %166 = arith.truncf %165 : vector<4x256xf32> to vector<4x256xbf16>
    %c0_102 = arith.constant 0 : index
    %c0_103 = arith.constant 0 : index
    %167 = vector.load %arg9[%c0_102, %c0_103] : memref<4x4xbf16, #tpu.memory_space<vmem>>, vector<4x4xbf16>
    %cst_104 = arith.constant dense<0.000000e+00> : vector<4x256xf32>
    %168 = tpu.matmul %167, %166, %cst_104 {dimension_numbers = #tpu.dot_dimension_numbers<[1], [0], [0], [1], [0, 0, 1, 1], [], []>} : vector<4x4xbf16>, vector<4x256xbf16>, vector<4x256xf32> -> vector<4x256xf32>
    %c0_105 = arith.constant 0 : index
    %c0_106 = arith.constant 0 : index
    %169 = vector.load %arg10[%c0_105, %c0_106] : memref<4x1xf32, #tpu.memory_space<vmem>>, vector<4x1xf32>
    %170 = vector.broadcast %169 : vector<4x1xf32> to vector<4x256xf32>
    %171 = arith.addf %168, %170 : vector<4x256xf32>
    %cst_107 = arith.constant 0.000000e+00 : f32
    %172 = vector.broadcast %cst_107 : f32 to vector<4x256xf32>
    %173 = arith.cmpf oge, %171, %172 : vector<4x256xf32>
    %cst_108 = arith.constant 0.00999999977 : f32
    %174 = vector.broadcast %cst_108 : f32 to vector<4x256xf32>
    %175 = arith.mulf %174, %171 : vector<4x256xf32>
    %176 = arith.select %173, %171, %175 : vector<4x256xi1>, vector<4x256xf32>
    %177 = arith.truncf %176 : vector<4x256xf32> to vector<4x256xbf16>
    %c0_109 = arith.constant 0 : index
    %c0_110 = arith.constant 0 : index
    %178 = vector.load %arg11[%c0_109, %c0_110] : memref<4x4xbf16, #tpu.memory_space<vmem>>, vector<4x4xbf16>
    %cst_111 = arith.constant dense<0.000000e+00> : vector<4x256xf32>
    %179 = tpu.matmul %178, %177, %cst_111 {dimension_numbers = #tpu.dot_dimension_numbers<[1], [0], [0], [1], [0, 0, 1, 1], [], []>} : vector<4x4xbf16>, vector<4x256xbf16>, vector<4x256xf32> -> vector<4x256xf32>
    %c0_112 = arith.constant 0 : index
    %c0_113 = arith.constant 0 : index
    %180 = vector.load %arg12[%c0_112, %c0_113] : memref<4x1xf32, #tpu.memory_space<vmem>>, vector<4x1xf32>
    %181 = vector.broadcast %180 : vector<4x1xf32> to vector<4x256xf32>
    %182 = arith.addf %179, %181 : vector<4x256xf32>
    %cst_114 = arith.constant 0.000000e+00 : f32
    %183 = vector.broadcast %cst_114 : f32 to vector<4x256xf32>
    %184 = arith.cmpf oge, %182, %183 : vector<4x256xf32>
    %cst_115 = arith.constant 0.00999999977 : f32
    %185 = vector.broadcast %cst_115 : f32 to vector<4x256xf32>
    %186 = arith.mulf %185, %182 : vector<4x256xf32>
    %187 = arith.select %184, %182, %186 : vector<4x256xi1>, vector<4x256xf32>
    %188 = arith.truncf %187 : vector<4x256xf32> to vector<4x256xbf16>
    %c0_116 = arith.constant 0 : index
    %c0_117 = arith.constant 0 : index
    %189 = vector.load %arg13[%c0_116, %c0_117] : memref<1x4xbf16, #tpu.memory_space<vmem>>, vector<1x4xbf16>
    %cst_118 = arith.constant dense<0.000000e+00> : vector<1x256xf32>
    %190 = tpu.matmul %189, %188, %cst_118 {dimension_numbers = #tpu.dot_dimension_numbers<[1], [0], [0], [1], [0, 0, 1, 1], [], []>} : vector<1x4xbf16>, vector<4x256xbf16>, vector<1x256xf32> -> vector<1x256xf32>
    %c0_119 = arith.constant 0 : index
    %c0_120 = arith.constant 0 : index
    %191 = vector.load %arg14[%c0_119, %c0_120] : memref<1x1xf32, #tpu.memory_space<vmem>>, vector<1x1xf32>
    %192 = vector.broadcast %191 : vector<1x1xf32> to vector<1x256xf32>
    %193 = arith.addf %190, %192 : vector<1x256xf32>
    %cst_121 = arith.constant 0.000000e+00 : f32
    %194 = vector.broadcast %cst_121 : f32 to vector<1x256xf32>
    %195 = arith.cmpf oge, %193, %194 : vector<1x256xf32>
    %cst_122 = arith.constant 0.00999999977 : f32
    %196 = vector.broadcast %cst_122 : f32 to vector<1x256xf32>
    %197 = arith.mulf %196, %193 : vector<1x256xf32>
    %198 = arith.select %195, %193, %197 : vector<1x256xi1>, vector<1x256xf32>
    %c0_123 = arith.constant 0 : index
    %c0_124 = arith.constant 0 : index
    %c0_125 = arith.constant 0 : index
    %199 = vector.load %arg15[%c0_123, %c0_124, %c0_125] : memref<1x1x256xf32, #tpu.memory_space<vmem>>, vector<1x1x256xf32>
    %200 = vector.shape_cast %199 : vector<1x1x256xf32> to vector<1x256xf32>
    %201 = vector.shape_cast %198 : vector<1x256xf32> to vector<1x1x256xf32>
    tpu.vector_store %arg15[%c0_123, %c0_124, %c0_125], %201 {strides = array<i32>} : memref<1x1x256xf32, #tpu.memory_space<vmem>>, vector<1x1x256xf32>,
    return
  }
  func.func @transform_0(%arg0: i32) -> (i32, i32, i32) {
    %c0_i32 = arith.constant 0 : i32
    %c0_i32_0 = arith.constant 0 : i32
    %c0_i32_1 = arith.constant 0 : i32
    return %arg0, %c0_i32, %c0_i32_0 : i32, i32, i32
  }
  func.func @transform_1(%arg0: i32) -> (i32, i32, i32) {
    %c0_i32 = arith.constant 0 : i32
    %c0_i32_0 = arith.constant 0 : i32
    %c0_i32_1 = arith.constant 0 : i32
    return %arg0, %c0_i32, %c0_i32_0 : i32, i32, i32
  }
  func.func @transform_2(%arg0: i32) -> (i32, i32) {
    %c0_i32 = arith.constant 0 : i32
    %c0_i32_0 = arith.constant 0 : i32
    %c0_i32_1 = arith.constant 0 : i32
    return %c0_i32, %c0_i32_0 : i32, i32
  }
  func.func @transform_3(%arg0: i32) -> (i32, i32) {
    %c0_i32 = arith.constant 0 : i32
    %c0_i32_0 = arith.constant 0 : i32
    %c0_i32_1 = arith.constant 0 : i32
    return %c0_i32, %c0_i32_0 : i32, i32
  }
  func.func @transform_4(%arg0: i32) -> (i32, i32) {
    %c0_i32 = arith.constant 0 : i32
    %c0_i32_0 = arith.constant 0 : i32
    %c0_i32_1 = arith.constant 0 : i32
    return %c0_i32, %c0_i32_0 : i32, i32
  }
  func.func @transform_5(%arg0: i32) -> (i32, i32) {
    %c0_i32 = arith.constant 0 : i32
    %c0_i32_0 = arith.constant 0 : i32
    %c0_i32_1 = arith.constant 0 : i32
    return %c0_i32, %c0_i32_0 : i32, i32
  }
  func.func @transform_6(%arg0: i32) -> (i32, i32) {
    %c0_i32 = arith.constant 0 : i32
    %c0_i32_0 = arith.constant 0 : i32
    %c0_i32_1 = arith.constant 0 : i32
    return %c0_i32, %c0_i32_0 : i32, i32
  }
  func.func @transform_7(%arg0: i32) -> (i32, i32) {
    %c0_i32 = arith.constant 0 : i32
    %c0_i32_0 = arith.constant 0 : i32
    %c0_i32_1 = arith.constant 0 : i32
    return %c0_i32, %c0_i32_0 : i32, i32
  }
  func.func @transform_8(%arg0: i32) -> (i32, i32) {
    %c0_i32 = arith.constant 0 : i32
    %c0_i32_0 = arith.constant 0 : i32
    %c0_i32_1 = arith.constant 0 : i32
    return %c0_i32, %c0_i32_0 : i32, i32
  }
  func.func @transform_9(%arg0: i32) -> (i32, i32) {
    %c0_i32 = arith.constant 0 : i32
    %c0_i32_0 = arith.constant 0 : i32
    %c0_i32_1 = arith.constant 0 : i32
    return %c0_i32, %c0_i32_0 : i32, i32
  }
  func.func @transform_10(%arg0: i32) -> (i32, i32) {
    %c0_i32 = arith.constant 0 : i32
    %c0_i32_0 = arith.constant 0 : i32
    %c0_i32_1 = arith.constant 0 : i32
    return %c0_i32, %c0_i32_0 : i32, i32
  }
  func.func @transform_11(%arg0: i32) -> (i32, i32) {
    %c0_i32 = arith.constant 0 : i32
    %c0_i32_0 = arith.constant 0 : i32
    %c0_i32_1 = arith.constant 0 : i32
    return %c0_i32, %c0_i32_0 : i32, i32
  }
  func.func @transform_12(%arg0: i32) -> (i32, i32) {
    %c0_i32 = arith.constant 0 : i32
    %c0_i32_0 = arith.constant 0 : i32
    %c0_i32_1 = arith.constant 0 : i32
    return %c0_i32, %c0_i32_0 : i32, i32
  }
  func.func @transform_13(%arg0: i32) -> (i32, i32) {
    %c0_i32 = arith.constant 0 : i32
    %c0_i32_0 = arith.constant 0 : i32
    %c0_i32_1 = arith.constant 0 : i32
    return %c0_i32, %c0_i32_0 : i32, i32
  }
  func.func @transform_14(%arg0: i32) -> (i32, i32, i32) {
    %c0_i32 = arith.constant 0 : i32
    %c0_i32_0 = arith.constant 0 : i32
    %c0_i32_1 = arith.constant 0 : i32
    return %arg0, %c0_i32, %c0_i32_0 : i32, i32, i32
  }
}

</mosaic_0001>

<llo_original>
// kernel: run.3
$region0: #{run.3}
  #allocation0 [shape = 'u32[]', space=smem, size = 0x4, offset = 0x4, fixed_abs, tag = 'smem constant byte address 0x4 - core index']
  #allocation1 [shape = 'u32[144,128]{1,0:T(1,128)}', space=vmem, size = 0x12000, scoped, tag = 'internal scratch']
  #allocation2 [shape = 'bf16[16,82]{1,0:T(16,128)(2,1)}', space=vmem, size = 0x1000, scoped, tag = 'scratch operand']
  %s0 = inlined_call_operand.vmem [shape: bf16[2,8,64], index: 0, kind: input, shape index: {}]
  %s1 = inlined_call_operand.vmem [shape: bf16[2,8,64], index: 1, kind: input, shape index: {}]
  %s2 = inlined_call_operand.vmem [shape: bf16[8,144], index: 2, kind: input, shape index: {}]
  %s3 = inlined_call_operand.vmem [shape: f32[8,1], index: 3, kind: input, shape index: {}]
  %s4 = inlined_call_operand.vmem [shape: bf16[2,8,64], index: 4, kind: output, shape index: {}]
  %s5 = sld [smem:[#allocation0]]
  $region53: #{run.3} parent=0
    _
  %s7 = ssub.s32 1, %s5
  %s8 = scalar_select 0, %s7, %s5
  loop: start=0, step=1, limit=4
  $region2: #{run.3} parent=0 // loop_pre_header
    _
  $region3: #{run.3} parent=0 // loop_header
    %s10 = sphi 0, %s14
    %p11 = scmp.ge.s32.totalorder %s10, 4
    %s20 = sphi 0, %s22
    %s23 = sphi 0, %s20
    %s24 = sphi 0, %s23
    %s40 = sphi 0, %s24
    %s46 = sphi 0, %s48
    %s49 = sphi 0, %s46
    %s50 = sphi 0, %s49
    %s66 = sphi 0, %s50
    %s70 = sphi 0, %s70
    %s72 = sphi 0, %s70
    %s73 = sphi 0, %s72
    %s87 = sphi 0, %s73
    %s91 = sphi 0, %s91
    %s93 = sphi 0, %s91
    %s94 = sphi 0, %s93
    %s108 = sphi 0, %s94
    %s114 = sphi 0, %s116
    %s117 = sphi 0, %s114
    %s118 = sphi 0, %s117
    %s134 = sphi 0, %s118
  $region4: #{run.3} parent=0 // loop_header_branch
    %13 = sbr.rel (%p11) target = $region8
  $region5: #{run.3} parent=0 // loop_body
    %s15 = ssub.s32 %s10, 1
    %s16 = ssub.s32 %s10, 2
    %s17 = sadd.s32 %s10, 1
    %s18 = ssub.s32 %s10, %s17
    %p19 = scmp.eq.s32.totalorder %s18, 0
    %s21 = sadd.s32 %s20, 1
    %s22 = scalar_select %p19, %s20, %s21
    %p25 = pneg %p19
    %p26 = scmp.eq.s32.totalorder %s10, 1
    %p27 = por %p25, %p26
    %p28 = scmp.ne.s32.totalorder %s20, %s23
    %p29 = scmp.eq.s32.totalorder %s10, 0
    %p30 = por %p28, %p29
    %p31 = scmp.ne.s32.totalorder %s20, %s23
    %p32 = scmp.eq.s32.totalorder %s15, 1
    %p33 = por %p31, %p32
    %p34 = scmp.ne.s32.totalorder %s23, %s24
    %p35 = scmp.eq.s32.totalorder %s15, 0
    %p36 = por %p34, %p35
    %p37 = scmp.ne.s32.totalorder %s23, %s24
    %p38 = scmp.eq.s32.totalorder %s16, 1
    %p39 = por %p37, %p38
    %p41 = scmp.ne.s32.totalorder %s24, %s40
    %p42 = scmp.eq.s32.totalorder %s16, 0
    %p43 = por %p41, %p42
    %s44 = ssub.s32 %s10, %s17
    %p45 = scmp.eq.s32.totalorder %s44, 0
    %s47 = sadd.s32 %s46, 1
    %s48 = scalar_select %p45, %s46, %s47
    %p51 = pneg %p45
    %p52 = scmp.eq.s32.totalorder %s10, 1
    %p53 = por %p51, %p52
    %p54 = scmp.ne.s32.totalorder %s46, %s49
    %p55 = scmp.eq.s32.totalorder %s10, 0
    %p56 = por %p54, %p55
    %p57 = scmp.ne.s32.totalorder %s46, %s49
    %p58 = scmp.eq.s32.totalorder %s15, 1
    %p59 = por %p57, %p58
    %p60 = scmp.ne.s32.totalorder %s49, %s50
    %p61 = scmp.eq.s32.totalorder %s15, 0
    %p62 = por %p60, %p61
    %p63 = scmp.ne.s32.totalorder %s49, %s50
    %p64 = scmp.eq.s32.totalorder %s16, 1
    %p65 = por %p63, %p64
    %p67 = scmp.ne.s32.totalorder %s50, %s66
    %p68 = scmp.eq.s32.totalorder %s16, 0
    %p69 = por %p67, %p68
    %s71 = sadd.s32 %s70, 1
    %p74 = scmp.eq.s32.totalorder %s10, 1
    %p75 = scmp.ne.s32.totalorder %s70, %s72
    %p76 = scmp.eq.s32.totalorder %s10, 0
    %p77 = por %p75, %p76
    %p78 = scmp.ne.s32.totalorder %s70, %s72
    %p79 = scmp.eq.s32.totalorder %s15, 1
    %p80 = por %p78, %p79
    %p81 = scmp.ne.s32.totalorder %s72, %s73
    %p82 = scmp.eq.s32.totalorder %s15, 0
    %p83 = por %p81, %p82
    %p84 = scmp.ne.s32.totalorder %s72, %s73
    %p85 = scmp.eq.s32.totalorder %s16, 1
    %p86 = por %p84, %p85
    %p88 = scmp.ne.s32.totalorder %s73, %s87
    %p89 = scmp.eq.s32.totalorder %s16, 0
    %p90 = por %p88, %p89
    %s92 = sadd.s32 %s91, 1
    %p95 = scmp.eq.s32.totalorder %s10, 1
    %p96 = scmp.ne.s32.totalorder %s91, %s93
    %p97 = scmp.eq.s32.totalorder %s10, 0
    %p98 = por %p96, %p97
    %p99 = scmp.ne.s32.totalorder %s91, %s93
    %p100 = scmp.eq.s32.totalorder %s15, 1
    %p101 = por %p99, %p100
    %p102 = scmp.ne.s32.totalorder %s93, %s94
    %p103 = scmp.eq.s32.totalorder %s15, 0
    %p104 = por %p102, %p103
    %p105 = scmp.ne.s32.totalorder %s93, %s94
    %p106 = scmp.eq.s32.totalorder %s16, 1
    %p107 = por %p105, %p106
    %p109 = scmp.ne.s32.totalorder %s94, %s108
    %p110 = scmp.eq.s32.totalorder %s16, 0
    %p111 = por %p109, %p110
    %s112 = ssub.s32 %s10, %s17
    %p113 = scmp.eq.s32.totalorder %s112, 0
    %s115 = sadd.s32 %s114, 1
    %s116 = scalar_select %p113, %s114, %s115
    %p119 = pneg %p113
    %p120 = scmp.eq.s32.totalorder %s10, 1
    %p121 = por %p119, %p120
    %p122 = scmp.ne.s32.totalorder %s114, %s117
    %p123 = scmp.eq.s32.totalorder %s10, 0
    %p124 = por %p122, %p123
    %p125 = scmp.ne.s32.totalorder %s114, %s117
    %p126 = scmp.eq.s32.totalorder %s15, 1
    %p127 = por %p125, %p126
    %p128 = scmp.ne.s32.totalorder %s117, %s118
    %p129 = scmp.eq.s32.totalorder %s15, 0
    %p130 = por %p128, %p129
    %p131 = scmp.ne.s32.totalorder %s117, %s118
    %p132 = scmp.eq.s32.totalorder %s16, 1
    %p133 = por %p131, %p132
    %p135 = scmp.ne.s32.totalorder %s118, %s134
    %p136 = scmp.eq.s32.totalorder %s16, 0
    %p137 = por %p135, %p136
    %p138 = scmp.le.s32.totalorder 1, %s10
    %p139 = scmp.lt.s32.totalorder %s10, 3
    %p140 = pnand %p138, %p139
    %p141 = pneg %p140
    // Predicated region
    $region9: #{run.3} parent=5 // pred_check
      _
    $region10: #{run.3} parent=5 // pred_check_branch
      %143 = sbr.rel (%p140) target = $region12
    $region11: #{run.3} parent=5 // pred_region
      %s144 = ssub.s32 %s10, 1
      // Predicated region
      $region13: #{run.3} parent=11 // pred_check
        %p145 = pneg %p83
      $region14: #{run.3} parent=11 // pred_check_branch
        %147 = sbr.rel (%p145) target = $region16
      $region15: #{run.3} parent=11 // pred_region
        _
      $region16: #{run.3} parent=11 // pred_fallthru
        _
      // Predicated region
      $region17: #{run.3} parent=11 // pred_check
        %p148 = pneg %p104
      $region18: #{run.3} parent=11 // pred_check_branch
        %150 = sbr.rel (%p148) target = $region20
      $region19: #{run.3} parent=11 // pred_region
        _
      $region20: #{run.3} parent=11 // pred_fallthru
        _
    $region12: #{run.3} parent=5 // pred_fallthru
      _
    %p151 = scmp.lt.s32.totalorder %s10, 2
    // Predicated region
    $region21: #{run.3} parent=5 // pred_check
      %p152 = pneg %p151
    $region22: #{run.3} parent=5 // pred_check_branch
      %154 = sbr.rel (%p152) target = $region24
    $region23: #{run.3} parent=5 // pred_region
      // Predicated region
      $region25: #{run.3} parent=23 // pred_check
        %p155 = pneg %p30
      $region26: #{run.3} parent=23 // pred_check_branch
        %157 = sbr.rel (%p155) target = $region28
      $region27: #{run.3} parent=23 // pred_region
        %p158 = scmp.lt.s32.totalorder %s10, 1
        %s159 = scalar_select %p158, %s10, 1
        %s160 = smul.addr %s159, 4
        %s161 = scalar_lea.vmem %s0, %s160
      $region28: #{run.3} parent=23 // pred_fallthru
        _
      // Predicated region
      $region29: #{run.3} parent=23 // pred_check
        %p162 = pneg %p56
      $region30: #{run.3} parent=23 // pred_check_branch
        %164 = sbr.rel (%p162) target = $region32
      $region31: #{run.3} parent=23 // pred_region
        %p165 = scmp.lt.s32.totalorder %s10, 1
        %s166 = scalar_select %p165, %s10, 1
        %s167 = smul.addr %s166, 4
        %s168 = scalar_lea.vmem %s1, %s167
      $region32: #{run.3} parent=23 // pred_fallthru
        _
    $region24: #{run.3} parent=5 // pred_fallthru
      _
    %p169 = scmp.le.s32.totalorder 1, %s10
    %p170 = scmp.lt.s32.totalorder %s10, 3
    %p171 = pnand %p169, %p170
    %p172 = pneg %p171
    // Predicated region
    $region33: #{run.3} parent=5 // pred_check
      _
    $region34: #{run.3} parent=5 // pred_check_branch
      %174 = sbr.rel (%p171) target = $region36
    $region35: #{run.3} parent=5 // pred_region
      %s175 = ssub.s32 %s10, 1
      %p176 = scmp.lt.s32.totalorder %s15, 1
      %s177 = scalar_select %p176, %s15, 1
      %s178 = smul.addr %s177, 4
      %s179 = scalar_lea.vmem %s0, %s178
      %p180 = pneg %p36
      %p181 = pneg %p33
      %p182 = scmp.lt.s32.totalorder %s15, 1
      %s183 = scalar_select %p182, %s15, 1
      %s184 = smul.addr %s183, 4
      %s185 = scalar_lea.vmem %s1, %s184
      %p186 = pneg %p62
      %p187 = pneg %p59
      %p188 = pneg %p83
      %p189 = pneg %p80
      %p190 = pneg %p104
      %p191 = pneg %p101
      %p192 = pneg %p130
      %p193 = pneg %p127
      %p194 = scmp.lt.s32.totalorder %s15, 1
      %s195 = scalar_select %p194, %s15, 1
      %s196 = smul.addr %s195, 4
      %s197 = scalar_lea.vmem %s4, %s196
      %p198 = scmp.lt.s32.totalorder %s15, 1
      %s199 = scalar_select %p198, %s15, 1
      %s200 = smul.addr %s199, 4
      %s201 = scalar_lea.vmem %s0, %s200
      %p202 = scmp.lt.s32.totalorder %s15, 1
      %s203 = scalar_select %p202, %s15, 1
      %s204 = smul.addr %s203, 4
      %s205 = scalar_lea.vmem %s1, %s204
      %p206 = scmp.lt.s32.totalorder %s15, 1
      %s207 = scalar_select %p206, %s15, 1
      %s208 = smul.addr %s207, 4
      %s209 = scalar_lea.vmem %s4, %s208
      %p213 = scmp.eq.s32.totalorder %s15, 0
      // Predicated region
      $region37: #{run.3} parent=35 // pred_check
        %p214 = pneg %p213
      $region38: #{run.3} parent=35 // pred_check_branch
        %216 = sbr.rel (%p214) target = $region40
      $region39: #{run.3} parent=35 // pred_region
        %vm217 = vcmask 670720
        %218 = vst.msk [vmem:[#allocation2] sm:$0xff] %vm217, 0
      $region40: #{run.3} parent=35 // pred_fallthru
        _
      %v219 = vlaneseq
      %v220 = vand.u32 %v219, 127
      %vm221 = vcmp.lt.s32.totalorder %v220, 0
      %v222 = vsub.s32 0, %v220
      %v223 = vsel %vm221, %v222, %v220
      %v224 = vshrl.u32 %v223, 3
      %v225 = vand.u32 %v223, 7
      %v226 = vsub.s32 0, %v225
      %v227 = vsel %vm221, %v226, %v225
      %vm228 = vcmp.ne.s32.totalorder %v227, 0
      %vm229 = vcmp.lt.s32.totalorder %v227, 0
      %vm230 = vmand %vm229, %vm228
      %v231 = vadd.s32 %v227, 8
      %v232 = vsel %vm230, %v231, %v227
      %vm233 = vcmp.ne.s32.totalorder %v232, 0
      %vm234 = vcmp.ne.s32.totalorder %v232, 7
      %v235 = vld [vmem:[%s201] sm:$0xf]
      %v237 = vunpack.c.l.b16 %v235
      %v238 = vpack.c.b16 %v237, %v237
      %239 = vrot.lane.b32.xlu0 %v238, 9
      %v240 = vpop.permute.xlu0 %239
      %vm242 = vcmask 592968
      %243 = vst.msk [vmem:[#allocation2] sm:$0xf] %vm242, %v240
      %v244 = vld [vmem:[%s205] sm:$0xf]
      %v246 = vunpack.c.l.b16 %v244
      %v247 = vpack.c.b16 %v246, %v246
      %248 = vrot.lane.b32.xlu0 %v247, 9
      %v249 = vpop.permute.xlu0 %248
      %vm251 = vcmask 597068
      %252 = vst.msk [vmem:[#allocation2] sm:$0xf0] %vm251, %v249
      %v253 = vld [vmem:[#allocation2] sm:$0xff]
      %v254 = vsel %vm233, 1, 0
      %vm255 = vcmp.eq.s32.totalorder %v254, 1
      %vm256 = vmpackc.low %vm255, %vm255
      %v257 = vsel %vm256, 65537, 0
      %v258 = vlaneseq
      %v259 = vshrl.u32 %v258, 7
      %v260 = vsub.s32 0, %v259
      %v261 = vrot.slane %v257, %v260
      %vm262 = vcmp.ne.s16.totalorder %v261, 0
      %v263 = vsel %vm262, %v253, 0
      %v264 = vsel %vm234, 1, 0
      %vm265 = vcmp.eq.s32.totalorder %v264, 1
      %vm266 = vmpackc.low %vm265, %vm265
      %v267 = vsel %vm266, 65537, 0
      %v268 = vlaneseq
      %v269 = vshrl.u32 %v268, 7
      %v270 = vsub.s32 0, %v269
      %v271 = vrot.slane %v267, %v270
      %272 = vrot.lane.b32.xlu0 %v271, 2
      %v273 = vpop.permute.xlu0 %272
      %vm274 = vcmp.ne.s16.totalorder %v273, 0
      %v275 = vsel %vm274, %v253, 0
      %276 = vrot.lane.b32.xlu0 %v261, 8
      %v277 = vpop.permute.xlu0 %276
      %vm278 = vcmp.ne.s16.totalorder %v277, 0
      %v279 = vsel %vm278, %v253, 0
      %280 = vrot.lane.b32.xlu0 %v271, 10
      %v281 = vpop.permute.xlu0 %280
      %vm282 = vcmp.ne.s16.totalorder %v281, 0
      %v283 = vsel %vm282, %v253, 0
      %284 = vrot.lane.b32.xlu0 %v261, 16
      %v285 = vpop.permute.xlu0 %284
      %vm286 = vcmp.ne.s16.totalorder %v285, 0
      %v287 = vsel %vm286, %v253, 0
      %288 = vrot.lane.b32.xlu0 %v271, 18
      %v289 = vpop.permute.xlu0 %288
      %vm290 = vcmp.ne.s16.totalorder %v289, 0
      %v291 = vsel %vm290, %v253, 0
      %293 = vrot.lane.b32.xlu0 %v253, 127
      %v294 = vpop.permute.xlu0 %293
      %297 = vrot.lane.b32.xlu0 %v275, 126
      %v298 = vpop.permute.xlu0 %297
      %301 = vrot.lane.b32.xlu0 %v279, 120
      %v302 = vpop.permute.xlu0 %301
      %304 = vrot.lane.b32.xlu0 %v253, 119
      %v305 = vpop.permute.xlu0 %304
      %308 = vrot.lane.b32.xlu0 %v283, 118
      %v309 = vpop.permute.xlu0 %308
      %312 = vrot.lane.b32.xlu0 %v287, 112
      %v313 = vpop.permute.xlu0 %312
      %315 = vrot.lane.b32.xlu0 %v253, 111
      %v316 = vpop.permute.xlu0 %315
      %319 = vrot.lane.b32.xlu0 %v291, 110
      %v320 = vpop.permute.xlu0 %319
      %v322 = vld [vmem:[%s2] sm:$0xff]
      %v323 = vld [vmem:[%s3] sm:$0xff]
      %325 = vset.pattern.permute.xlu0 0
      %326 = vperm.xlu0 %325, %v323
      %v327 = vpop.permute.xlu0 %326
      %v330 = vunpack.c.l.b16 %v322
      %v331 = vunpack.c.h.b16 %v322
      %v332 = vpack.c.b16 %v330, %v330
      %v333 = vpack.c.b16 %v331, %v331
      %vm335 = vcmask 130048
      %v337 = vsel %vm335, %v333, 0
      %339 = vmatprep.subr.bf16.mxu0 0
      %340 = vmatpush1.bf16.msra.mxu0 %v263
      %341 = vmatprep.subr.bf16.mxu0 0
      %342 = vmatpush1.bf16.msra.mxu0 %v294
      %343 = vmatprep.subr.bf16.mxu0 0
      %344 = vmatpush1.bf16.msra.mxu0 %v298
      %345 = vmatprep.subr.bf16.mxu0 0
      %346 = vmatpush1.bf16.msra.mxu0 %v302
      %347 = vmatprep.subr.bf16.mxu0 0
      %348 = vmatpush1.bf16.msra.mxu0 %v305
      %349 = vmatprep.subr.bf16.mxu0 0
      %350 = vmatpush1.bf16.msra.mxu0 %v309
      %351 = vmatprep.subr.bf16.mxu0 0
      %352 = vmatpush1.bf16.msra.mxu0 %v313
      %353 = vmatprep.subr.bf16.mxu0 0
      %354 = vmatpush1.bf16.msra.mxu0 %v316
      %355 = vmatprep.subr.bf16.mxu0 0
      %356 = vmatpush1.bf16.msra.mxu0 %v320
      %357 = vmatprep.subr.bf16.mxu0 0
      %358 = vmatpush1.bf16.msra.mxu0 0
      %359 = vmatprep.subr.bf16.mxu0 0
      %360 = vmatpush1.bf16.msra.mxu0 0
      %361 = vmatprep.subr.bf16.mxu0 0
      %362 = vmatpush1.bf16.msra.mxu0 0
      %363 = vmatprep.subr.bf16.mxu0 0
      %364 = vmatpush1.bf16.msra.mxu0 0
      %365 = vmatprep.subr.bf16.mxu0 0
      %366 = vmatpush1.bf16.msra.mxu0 0
      %367 = vmatprep.subr.bf16.mxu0 0
      %368 = vmatpush1.bf16.msra.mxu0 0
      %369 = vmatprep.subr.bf16.mxu0 0
      %370 = vmatpush1.bf16.msra.mxu0 0
      %371 = vmatprep.mubr.bf16.mxu0 %v337
      %372 = vmatmul.mubr.bf16.gmra.mrb[0].mxu0 %v332
      %v373 = vpop.f32.mrb[0].mxu0
      %v374 = vadd.f32 %v327, %v373
      %v375 = vpop.f32.mrb[0].mxu0
      %v376 = vpop.f32.mrb[0].mxu0
      %v377 = vpop.f32.mrb[0].mxu0
      %378 = vdwg.mxu0
      %vm379 = vcmp.ge.f32.partialorder %v374, 0.0
      %v380 = vmul.f32 %v374, 0.01
      %v381 = vsel %vm379, %v374, %v380
      %v382 = vpack.c.bf16 %v381, %v381
      %vm383 = vcmask 519168
      %384 = vst.msk [vmem:[%s209] sm:$0xf] %vm383, %v382
      %p385 = scmp.lt.s32.totalorder %s15, 1
      %s386 = scalar_select %p385, %s15, 1
      %s387 = smul.addr %s386, 4
      %s388 = scalar_lea.vmem %s4, %s387
      // Predicated region
      $region41: #{run.3} parent=35 // pred_check
        %p389 = pneg %p127
      $region42: #{run.3} parent=35 // pred_check_branch
        %391 = sbr.rel (%p389) target = $region44
      $region43: #{run.3} parent=35 // pred_region
        _
      $region44: #{run.3} parent=35 // pred_fallthru
        _
    $region36: #{run.3} parent=5 // pred_fallthru
      _
    %p392 = scmp.le.s32.totalorder 2, %s10
    // Predicated region
    $region45: #{run.3} parent=5 // pred_check
      %p393 = pneg %p392
    $region46: #{run.3} parent=5 // pred_check_branch
      %395 = sbr.rel (%p393) target = $region48
    $region47: #{run.3} parent=5 // pred_region
      %s396 = ssub.s32 %s10, 2
      // Predicated region
      $region49: #{run.3} parent=47 // pred_check
        %p397 = pneg %p133
      $region50: #{run.3} parent=47 // pred_check_branch
        %399 = sbr.rel (%p397) target = $region52
      $region51: #{run.3} parent=47 // pred_region
        %p400 = scmp.lt.s32.totalorder %s16, 1
        %s401 = scalar_select %p400, %s16, 1
        %s402 = smul.addr %s401, 4
        %s403 = scalar_lea.vmem %s4, %s402
      $region52: #{run.3} parent=47 // pred_fallthru
        _
    $region48: #{run.3} parent=5 // pred_fallthru
      _
  $region6: #{run.3} parent=0 // loop_footer
    %s14 = sadd.s32 1, %s10
  $region7: #{run.3} parent=0 // loop_footer_branch
    %9 = sbr.rel target = $region3
  $region8: #{run.3} parent=0 // loop_exit
    _

// kernel: run.4
$region0: #{run.4}
  #allocation0 [shape = 'u32[]', space=smem, size = 0x4, offset = 0x4, fixed_abs, tag = 'smem constant byte address 0x4 - core index']
  #allocation1 [shape = 'u32[144,128]{1,0:T(1,128)}', space=vmem, size = 0x12000, scoped, tag = 'internal scratch']
  #allocation2 [shape = 'bf16[16,82]{1,0:T(16,128)(2,1)}', space=vmem, size = 0x1000, scoped, tag = 'scratch operand']
  %s0 = inlined_call_operand.vmem [shape: bf16[2,8,64], index: 0, kind: input, shape index: {}]
  %s1 = inlined_call_operand.vmem [shape: bf16[8,144], index: 1, kind: input, shape index: {}]
  %s2 = inlined_call_operand.vmem [shape: f32[8,1], index: 2, kind: input, shape index: {}]
  %s3 = inlined_call_operand.vmem [shape: bf16[8,144], index: 3, kind: input, shape index: {}]
  %s4 = inlined_call_operand.vmem [shape: f32[8,1], index: 4, kind: input, shape index: {}]
  %s5 = inlined_call_operand.vmem [shape: bf16[8,144], index: 5, kind: input, shape index: {}]
  %s6 = inlined_call_operand.vmem [shape: f32[8,1], index: 6, kind: input, shape index: {}]
  %s7 = inlined_call_operand.vmem [shape: bf16[8,8], index: 7, kind: input, shape index: {}]
  %s8 = inlined_call_operand.vmem [shape: f32[8,1], index: 8, kind: input, shape index: {}]
  %s9 = inlined_call_operand.vmem [shape: bf16[8,8], index: 9, kind: input, shape index: {}]
  %s10 = inlined_call_operand.vmem [shape: f32[8,1], index: 10, kind: input, shape index: {}]
  %s11 = inlined_call_operand.vmem [shape: bf16[2,8,64], index: 11, kind: output, shape index: {}]
  %s12 = sld [smem:[#allocation0]]
  $region81: #{run.4} parent=0
    _
  %s14 = ssub.s32 1, %s12
  %s15 = scalar_select 0, %s14, %s12
  loop: start=0, step=1, limit=4
  $region2: #{run.4} parent=0 // loop_pre_header
    _
  $region3: #{run.4} parent=0 // loop_header
    %s17 = sphi 0, %s21
    %p18 = scmp.ge.s32.totalorder %s17, 4
    %s27 = sphi 0, %s29
    %s30 = sphi 0, %s27
    %s31 = sphi 0, %s30
    %s47 = sphi 0, %s31
    %s51 = sphi 0, %s51
    %s53 = sphi 0, %s51
    %s54 = sphi 0, %s53
    %s68 = sphi 0, %s54
    %s72 = sphi 0, %s72
    %s74 = sphi 0, %s72
    %s75 = sphi 0, %s74
    %s89 = sphi 0, %s75
    %s93 = sphi 0, %s93
    %s95 = sphi 0, %s93
    %s96 = sphi 0, %s95
    %s110 = sphi 0, %s96
    %s114 = sphi 0, %s114
    %s116 = sphi 0, %s114
    %s117 = sphi 0, %s116
    %s131 = sphi 0, %s117
    %s135 = sphi 0, %s135
    %s137 = sphi 0, %s135
    %s138 = sphi 0, %s137
    %s152 = sphi 0, %s138
    %s156 = sphi 0, %s156
    %s158 = sphi 0, %s156
    %s159 = sphi 0, %s158
    %s173 = sphi 0, %s159
    %s177 = sphi 0, %s177
    %s179 = sphi 0, %s177
    %s180 = sphi 0, %s179
    %s194 = sphi 0, %s180
    %s198 = sphi 0, %s198
    %s200 = sphi 0, %s198
    %s201 = sphi 0, %s200
    %s215 = sphi 0, %s201
    %s219 = sphi 0, %s219
    %s221 = sphi 0, %s219
    %s222 = sphi 0, %s221
    %s236 = sphi 0, %s222
    %s240 = sphi 0, %s240
    %s242 = sphi 0, %s240
    %s243 = sphi 0, %s242
    %s257 = sphi 0, %s243
    %s263 = sphi 0, %s265
    %s266 = sphi 0, %s263
    %s267 = sphi 0, %s266
    %s283 = sphi 0, %s267
  $region4: #{run.4} parent=0 // loop_header_branch
    %20 = sbr.rel (%p18) target = $region8
  $region5: #{run.4} parent=0 // loop_body
    %s22 = ssub.s32 %s17, 1
    %s23 = ssub.s32 %s17, 2
    %s24 = sadd.s32 %s17, 1
    %s25 = ssub.s32 %s17, %s24
    %p26 = scmp.eq.s32.totalorder %s25, 0
    %s28 = sadd.s32 %s27, 1
    %s29 = scalar_select %p26, %s27, %s28
    %p32 = pneg %p26
    %p33 = scmp.eq.s32.totalorder %s17, 1
    %p34 = por %p32, %p33
    %p35 = scmp.ne.s32.totalorder %s27, %s30
    %p36 = scmp.eq.s32.totalorder %s17, 0
    %p37 = por %p35, %p36
    %p38 = scmp.ne.s32.totalorder %s27, %s30
    %p39 = scmp.eq.s32.totalorder %s22, 1
    %p40 = por %p38, %p39
    %p41 = scmp.ne.s32.totalorder %s30, %s31
    %p42 = scmp.eq.s32.totalorder %s22, 0
    %p43 = por %p41, %p42
    %p44 = scmp.ne.s32.totalorder %s30, %s31
    %p45 = scmp.eq.s32.totalorder %s23, 1
    %p46 = por %p44, %p45
    %p48 = scmp.ne.s32.totalorder %s31, %s47
    %p49 = scmp.eq.s32.totalorder %s23, 0
    %p50 = por %p48, %p49
    %s52 = sadd.s32 %s51, 1
    %p55 = scmp.eq.s32.totalorder %s17, 1
    %p56 = scmp.ne.s32.totalorder %s51, %s53
    %p57 = scmp.eq.s32.totalorder %s17, 0
    %p58 = por %p56, %p57
    %p59 = scmp.ne.s32.totalorder %s51, %s53
    %p60 = scmp.eq.s32.totalorder %s22, 1
    %p61 = por %p59, %p60
    %p62 = scmp.ne.s32.totalorder %s53, %s54
    %p63 = scmp.eq.s32.totalorder %s22, 0
    %p64 = por %p62, %p63
    %p65 = scmp.ne.s32.totalorder %s53, %s54
    %p66 = scmp.eq.s32.totalorder %s23, 1
    %p67 = por %p65, %p66
    %p69 = scmp.ne.s32.totalorder %s54, %s68
    %p70 = scmp.eq.s32.totalorder %s23, 0
    %p71 = por %p69, %p70
    %s73 = sadd.s32 %s72, 1
    %p76 = scmp.eq.s32.totalorder %s17, 1
    %p77 = scmp.ne.s32.totalorder %s72, %s74
    %p78 = scmp.eq.s32.totalorder %s17, 0
    %p79 = por %p77, %p78
    %p80 = scmp.ne.s32.totalorder %s72, %s74
    %p81 = scmp.eq.s32.totalorder %s22, 1
    %p82 = por %p80, %p81
    %p83 = scmp.ne.s32.totalorder %s74, %s75
    %p84 = scmp.eq.s32.totalorder %s22, 0
    %p85 = por %p83, %p84
    %p86 = scmp.ne.s32.totalorder %s74, %s75
    %p87 = scmp.eq.s32.totalorder %s23, 1
    %p88 = por %p86, %p87
    %p90 = scmp.ne.s32.totalorder %s75, %s89
    %p91 = scmp.eq.s32.totalorder %s23, 0
    %p92 = por %p90, %p91
    %s94 = sadd.s32 %s93, 1
    %p97 = scmp.eq.s32.totalorder %s17, 1
    %p98 = scmp.ne.s32.totalorder %s93, %s95
    %p99 = scmp.eq.s32.totalorder %s17, 0
    %p100 = por %p98, %p99
    %p101 = scmp.ne.s32.totalorder %s93, %s95
    %p102 = scmp.eq.s32.totalorder %s22, 1
    %p103 = por %p101, %p102
    %p104 = scmp.ne.s32.totalorder %s95, %s96
    %p105 = scmp.eq.s32.totalorder %s22, 0
    %p106 = por %p104, %p105
    %p107 = scmp.ne.s32.totalorder %s95, %s96
    %p108 = scmp.eq.s32.totalorder %s23, 1
    %p109 = por %p107, %p108
    %p111 = scmp.ne.s32.totalorder %s96, %s110
    %p112 = scmp.eq.s32.totalorder %s23, 0
    %p113 = por %p111, %p112
    %s115 = sadd.s32 %s114, 1
    %p118 = scmp.eq.s32.totalorder %s17, 1
    %p119 = scmp.ne.s32.totalorder %s114, %s116
    %p120 = scmp.eq.s32.totalorder %s17, 0
    %p121 = por %p119, %p120
    %p122 = scmp.ne.s32.totalorder %s114, %s116
    %p123 = scmp.eq.s32.totalorder %s22, 1
    %p124 = por %p122, %p123
    %p125 = scmp.ne.s32.totalorder %s116, %s117
    %p126 = scmp.eq.s32.totalorder %s22, 0
    %p127 = por %p125, %p126
    %p128 = scmp.ne.s32.totalorder %s116, %s117
    %p129 = scmp.eq.s32.totalorder %s23, 1
    %p130 = por %p128, %p129
    %p132 = scmp.ne.s32.totalorder %s117, %s131
    %p133 = scmp.eq.s32.totalorder %s23, 0
    %p134 = por %p132, %p133
    %s136 = sadd.s32 %s135, 1
    %p139 = scmp.eq.s32.totalorder %s17, 1
    %p140 = scmp.ne.s32.totalorder %s135, %s137
    %p141 = scmp.eq.s32.totalorder %s17, 0
    %p142 = por %p140, %p141
    %p143 = scmp.ne.s32.totalorder %s135, %s137
    %p144 = scmp.eq.s32.totalorder %s22, 1
    %p145 = por %p143, %p144
    %p146 = scmp.ne.s32.totalorder %s137, %s138
    %p147 = scmp.eq.s32.totalorder %s22, 0
    %p148 = por %p146, %p147
    %p149 = scmp.ne.s32.totalorder %s137, %s138
    %p150 = scmp.eq.s32.totalorder %s23, 1
    %p151 = por %p149, %p150
    %p153 = scmp.ne.s32.totalorder %s138, %s152
    %p154 = scmp.eq.s32.totalorder %s23, 0
    %p155 = por %p153, %p154
    %s157 = sadd.s32 %s156, 1
    %p160 = scmp.eq.s32.totalorder %s17, 1
    %p161 = scmp.ne.s32.totalorder %s156, %s158
    %p162 = scmp.eq.s32.totalorder %s17, 0
    %p163 = por %p161, %p162
    %p164 = scmp.ne.s32.totalorder %s156, %s158
    %p165 = scmp.eq.s32.totalorder %s22, 1
    %p166 = por %p164, %p165
    %p167 = scmp.ne.s32.totalorder %s158, %s159
    %p168 = scmp.eq.s32.totalorder %s22, 0
    %p169 = por %p167, %p168
    %p170 = scmp.ne.s32.totalorder %s158, %s159
    %p171 = scmp.eq.s32.totalorder %s23, 1
    %p172 = por %p170, %p171
    %p174 = scmp.ne.s32.totalorder %s159, %s173
    %p175 = scmp.eq.s32.totalorder %s23, 0
    %p176 = por %p174, %p175
    %s178 = sadd.s32 %s177, 1
    %p181 = scmp.eq.s32.totalorder %s17, 1
    %p182 = scmp.ne.s32.totalorder %s177, %s179
    %p183 = scmp.eq.s32.totalorder %s17, 0
    %p184 = por %p182, %p183
    %p185 = scmp.ne.s32.totalorder %s177, %s179
    %p186 = scmp.eq.s32.totalorder %s22, 1
    %p187 = por %p185, %p186
    %p188 = scmp.ne.s32.totalorder %s179, %s180
    %p189 = scmp.eq.s32.totalorder %s22, 0
    %p190 = por %p188, %p189
    %p191 = scmp.ne.s32.totalorder %s179, %s180
    %p192 = scmp.eq.s32.totalorder %s23, 1
    %p193 = por %p191, %p192
    %p195 = scmp.ne.s32.totalorder %s180, %s194
    %p196 = scmp.eq.s32.totalorder %s23, 0
    %p197 = por %p195, %p196
    %s199 = sadd.s32 %s198, 1
    %p202 = scmp.eq.s32.totalorder %s17, 1
    %p203 = scmp.ne.s32.totalorder %s198, %s200
    %p204 = scmp.eq.s32.totalorder %s17, 0
    %p205 = por %p203, %p204
    %p206 = scmp.ne.s32.totalorder %s198, %s200
    %p207 = scmp.eq.s32.totalorder %s22, 1
    %p208 = por %p206, %p207
    %p209 = scmp.ne.s32.totalorder %s200, %s201
    %p210 = scmp.eq.s32.totalorder %s22, 0
    %p211 = por %p209, %p210
    %p212 = scmp.ne.s32.totalorder %s200, %s201
    %p213 = scmp.eq.s32.totalorder %s23, 1
    %p214 = por %p212, %p213
    %p216 = scmp.ne.s32.totalorder %s201, %s215
    %p217 = scmp.eq.s32.totalorder %s23, 0
    %p218 = por %p216, %p217
    %s220 = sadd.s32 %s219, 1
    %p223 = scmp.eq.s32.totalorder %s17, 1
    %p224 = scmp.ne.s32.totalorder %s219, %s221
    %p225 = scmp.eq.s32.totalorder %s17, 0
    %p226 = por %p224, %p225
    %p227 = scmp.ne.s32.totalorder %s219, %s221
    %p228 = scmp.eq.s32.totalorder %s22, 1
    %p229 = por %p227, %p228
    %p230 = scmp.ne.s32.totalorder %s221, %s222
    %p231 = scmp.eq.s32.totalorder %s22, 0
    %p232 = por %p230, %p231
    %p233 = scmp.ne.s32.totalorder %s221, %s222
    %p234 = scmp.eq.s32.totalorder %s23, 1
    %p235 = por %p233, %p234
    %p237 = scmp.ne.s32.totalorder %s222, %s236
    %p238 = scmp.eq.s32.totalorder %s23, 0
    %p239 = por %p237, %p238
    %s241 = sadd.s32 %s240, 1
    %p244 = scmp.eq.s32.totalorder %s17, 1
    %p245 = scmp.ne.s32.totalorder %s240, %s242
    %p246 = scmp.eq.s32.totalorder %s17, 0
    %p247 = por %p245, %p246
    %p248 = scmp.ne.s32.totalorder %s240, %s242
    %p249 = scmp.eq.s32.totalorder %s22, 1
    %p250 = por %p248, %p249
    %p251 = scmp.ne.s32.totalorder %s242, %s243
    %p252 = scmp.eq.s32.totalorder %s22, 0
    %p253 = por %p251, %p252
    %p254 = scmp.ne.s32.totalorder %s242, %s243
    %p255 = scmp.eq.s32.totalorder %s23, 1
    %p256 = por %p254, %p255
    %p258 = scmp.ne.s32.totalorder %s243, %s257
    %p259 = scmp.eq.s32.totalorder %s23, 0
    %p260 = por %p258, %p259
    %s261 = ssub.s32 %s17, %s24
    %p262 = scmp.eq.s32.totalorder %s261, 0
    %s264 = sadd.s32 %s263, 1
    %s265 = scalar_select %p262, %s263, %s264
    %p268 = pneg %p262
    %p269 = scmp.eq.s32.totalorder %s17, 1
    %p270 = por %p268, %p269
    %p271 = scmp.ne.s32.totalorder %s263, %s266
    %p272 = scmp.eq.s32.totalorder %s17, 0
    %p273 = por %p271, %p272
    %p274 = scmp.ne.s32.totalorder %s263, %s266
    %p275 = scmp.eq.s32.totalorder %s22, 1
    %p276 = por %p274, %p275
    %p277 = scmp.ne.s32.totalorder %s266, %s267
    %p278 = scmp.eq.s32.totalorder %s22, 0
    %p279 = por %p277, %p278
    %p280 = scmp.ne.s32.totalorder %s266, %s267
    %p281 = scmp.eq.s32.totalorder %s23, 1
    %p282 = por %p280, %p281
    %p284 = scmp.ne.s32.totalorder %s267, %s283
    %p285 = scmp.eq.s32.totalorder %s23, 0
    %p286 = por %p284, %p285
    %p287 = scmp.le.s32.totalorder 1, %s17
    %p288 = scmp.lt.s32.totalorder %s17, 3
    %p289 = pnand %p287, %p288
    %p290 = pneg %p289
    // Predicated region
    $region9: #{run.4} parent=5 // pred_check
      _
    $region10: #{run.4} parent=5 // pred_check_branch
      %292 = sbr.rel (%p289) target = $region12
    $region11: #{run.4} parent=5 // pred_region
      %s293 = ssub.s32 %s17, 1
      // Predicated region
      $region13: #{run.4} parent=11 // pred_check
        %p294 = pneg %p64
      $region14: #{run.4} parent=11 // pred_check_branch
        %296 = sbr.rel (%p294) target = $region16
      $region15: #{run.4} parent=11 // pred_region
        _
      $region16: #{run.4} parent=11 // pred_fallthru
        _
      // Predicated region
      $region17: #{run.4} parent=11 // pred_check
        %p297 = pneg %p85
      $region18: #{run.4} parent=11 // pred_check_branch
        %299 = sbr.rel (%p297) target = $region20
      $region19: #{run.4} parent=11 // pred_region
        _
      $region20: #{run.4} parent=11 // pred_fallthru
        _
      // Predicated region
      $region21: #{run.4} parent=11 // pred_check
        %p300 = pneg %p106
      $region22: #{run.4} parent=11 // pred_check_branch
        %302 = sbr.rel (%p300) target = $region24
      $region23: #{run.4} parent=11 // pred_region
        _
      $region24: #{run.4} parent=11 // pred_fallthru
        _
      // Predicated region
      $region25: #{run.4} parent=11 // pred_check
        %p303 = pneg %p127
      $region26: #{run.4} parent=11 // pred_check_branch
        %305 = sbr.rel (%p303) target = $region28
      $region27: #{run.4} parent=11 // pred_region
        _
      $region28: #{run.4} parent=11 // pred_fallthru
        _
      // Predicated region
      $region29: #{run.4} parent=11 // pred_check
        %p306 = pneg %p148
      $region30: #{run.4} parent=11 // pred_check_branch
        %308 = sbr.rel (%p306) target = $region32
      $region31: #{run.4} parent=11 // pred_region
        _
      $region32: #{run.4} parent=11 // pred_fallthru
        _
      // Predicated region
      $region33: #{run.4} parent=11 // pred_check
        %p309 = pneg %p169
      $region34: #{run.4} parent=11 // pred_check_branch
        %311 = sbr.rel (%p309) target = $region36
      $region35: #{run.4} parent=11 // pred_region
        _
      $region36: #{run.4} parent=11 // pred_fallthru
        _
      // Predicated region
      $region37: #{run.4} parent=11 // pred_check
        %p312 = pneg %p190
      $region38: #{run.4} parent=11 // pred_check_branch
        %314 = sbr.rel (%p312) target = $region40
      $region39: #{run.4} parent=11 // pred_region
        _
      $region40: #{run.4} parent=11 // pred_fallthru
        _
      // Predicated region
      $region41: #{run.4} parent=11 // pred_check
        %p315 = pneg %p211
      $region42: #{run.4} parent=11 // pred_check_branch
        %317 = sbr.rel (%p315) target = $region44
      $region43: #{run.4} parent=11 // pred_region
        _
      $region44: #{run.4} parent=11 // pred_fallthru
        _
      // Predicated region
      $region45: #{run.4} parent=11 // pred_check
        %p318 = pneg %p232
      $region46: #{run.4} parent=11 // pred_check_branch
        %320 = sbr.rel (%p318) target = $region48
      $region47: #{run.4} parent=11 // pred_region
        _
      $region48: #{run.4} parent=11 // pred_fallthru
        _
      // Predicated region
      $region49: #{run.4} parent=11 // pred_check
        %p321 = pneg %p253
      $region50: #{run.4} parent=11 // pred_check_branch
        %323 = sbr.rel (%p321) target = $region52
      $region51: #{run.4} parent=11 // pred_region
        _
      $region52: #{run.4} parent=11 // pred_fallthru
        _
    $region12: #{run.4} parent=5 // pred_fallthru
      _
    %p324 = scmp.lt.s32.totalorder %s17, 2
    // Predicated region
    $region53: #{run.4} parent=5 // pred_check
      %p325 = pneg %p324
    $region54: #{run.4} parent=5 // pred_check_branch
      %327 = sbr.rel (%p325) target = $region56
    $region55: #{run.4} parent=5 // pred_region
      // Predicated region
      $region57: #{run.4} parent=55 // pred_check
        %p328 = pneg %p37
      $region58: #{run.4} parent=55 // pred_check_branch
        %330 = sbr.rel (%p328) target = $region60
      $region59: #{run.4} parent=55 // pred_region
        %p331 = scmp.lt.s32.totalorder %s17, 1
        %s332 = scalar_select %p331, %s17, 1
        %s333 = smul.addr %s332, 4
        %s334 = scalar_lea.vmem %s0, %s333
      $region60: #{run.4} parent=55 // pred_fallthru
        _
    $region56: #{run.4} parent=5 // pred_fallthru
      _
    %p335 = scmp.le.s32.totalorder 1, %s17
    %p336 = scmp.lt.s32.totalorder %s17, 3
    %p337 = pnand %p335, %p336
    %p338 = pneg %p337
    // Predicated region
    $region61: #{run.4} parent=5 // pred_check
      _
    $region62: #{run.4} parent=5 // pred_check_branch
      %340 = sbr.rel (%p337) target = $region64
    $region63: #{run.4} parent=5 // pred_region
      %s341 = ssub.s32 %s17, 1
      %p342 = scmp.lt.s32.totalorder %s22, 1
      %s343 = scalar_select %p342, %s22, 1
      %s344 = smul.addr %s343, 4
      %s345 = scalar_lea.vmem %s0, %s344
      %p346 = pneg %p43
      %p347 = pneg %p40
      %p348 = pneg %p64
      %p349 = pneg %p61
      %p350 = pneg %p85
      %p351 = pneg %p82
      %p352 = pneg %p106
      %p353 = pneg %p103
      %p354 = pneg %p127
      %p355 = pneg %p124
      %p356 = pneg %p148
      %p357 = pneg %p145
      %p358 = pneg %p169
      %p359 = pneg %p166
      %p360 = pneg %p190
      %p361 = pneg %p187
      %p362 = pneg %p211
      %p363 = pneg %p208
      %p364 = pneg %p232
      %p365 = pneg %p229
      %p366 = pneg %p253
      %p367 = pneg %p250
      %p368 = pneg %p279
      %p369 = pneg %p276
      %p370 = scmp.lt.s32.totalorder %s22, 1
      %s371 = scalar_select %p370, %s22, 1
      %s372 = smul.addr %s371, 4
      %s373 = scalar_lea.vmem %s11, %s372
      %p374 = scmp.lt.s32.totalorder %s22, 1
      %s375 = scalar_select %p374, %s22, 1
      %s376 = smul.addr %s375, 4
      %s377 = scalar_lea.vmem %s0, %s376
      %p378 = scmp.lt.s32.totalorder %s22, 1
      %s379 = scalar_select %p378, %s22, 1
      %s380 = smul.addr %s379, 4
      %s381 = scalar_lea.vmem %s11, %s380
      %p385 = scmp.eq.s32.totalorder %s22, 0
      // Predicated region
      $region65: #{run.4} parent=63 // pred_check
        %p386 = pneg %p385
      $region66: #{run.4} parent=63 // pred_check_branch
        %388 = sbr.rel (%p386) target = $region68
      $region67: #{run.4} parent=63 // pred_region
        %vm389 = vcmask 670720
        %390 = vst.msk [vmem:[#allocation2] sm:$0xff] %vm389, 0
      $region68: #{run.4} parent=63 // pred_fallthru
        _
      %v391 = vlaneseq
      %v392 = vand.u32 %v391, 127
      %vm393 = vcmp.lt.s32.totalorder %v392, 0
      %v394 = vsub.s32 0, %v392
      %v395 = vsel %vm393, %v394, %v392
      %v396 = vshrl.u32 %v395, 3
      %v397 = vand.u32 %v395, 7
      %v398 = vsub.s32 0, %v397
      %v399 = vsel %vm393, %v398, %v397
      %vm400 = vcmp.ne.s32.totalorder %v399, 0
      %vm401 = vcmp.lt.s32.totalorder %v399, 0
      %vm402 = vmand %vm401, %vm400
      %v403 = vadd.s32 %v399, 8
      %v404 = vsel %vm402, %v403, %v399
      %vm405 = vcmp.ne.s32.totalorder %v404, 0
      %vm406 = vcmp.ne.s32.totalorder %v404, 7
      %v407 = vld [vmem:[%s377] sm:$0xf]
      %v409 = vunpack.c.l.b16 %v407
      %v410 = vpack.c.b16 %v409, %v409
      %411 = vrot.lane.b32.xlu0 %v410, 9
      %v412 = vpop.permute.xlu0 %411
      %vm414 = vcmask 592968
      %415 = vst.msk [vmem:[#allocation2] sm:$0xf] %vm414, %v412
      %v416 = vld [vmem:[#allocation2] sm:$0xff]
      %v417 = vsel %vm405, 1, 0
      %vm418 = vcmp.eq.s32.totalorder %v417, 1
      %vm419 = vmpackc.low %vm418, %vm418
      %v420 = vsel %vm419, 65537, 0
      %v421 = vlaneseq
      %v422 = vshrl.u32 %v421, 7
      %v423 = vsub.s32 0, %v422
      %v424 = vrot.slane %v420, %v423
      %vm425 = vcmp.ne.s16.totalorder %v424, 0
      %v426 = vsel %vm425, %v416, 0
      %v427 = vsel %vm406, 1, 0
      %vm428 = vcmp.eq.s32.totalorder %v427, 1
      %vm429 = vmpackc.low %vm428, %vm428
      %v430 = vsel %vm429, 65537, 0
      %v431 = vlaneseq
      %v432 = vshrl.u32 %v431, 7
      %v433 = vsub.s32 0, %v432
      %v434 = vrot.slane %v430, %v433
      %435 = vrot.lane.b32.xlu0 %v434, 2
      %v436 = vpop.permute.xlu0 %435
      %vm437 = vcmp.ne.s16.totalorder %v436, 0
      %v438 = vsel %vm437, %v416, 0
      %439 = vrot.lane.b32.xlu0 %v424, 8
      %v440 = vpop.permute.xlu0 %439
      %vm441 = vcmp.ne.s16.totalorder %v440, 0
      %v442 = vsel %vm441, %v416, 0
      %443 = vrot.lane.b32.xlu0 %v434, 10
      %v444 = vpop.permute.xlu0 %443
      %vm445 = vcmp.ne.s16.totalorder %v444, 0
      %v446 = vsel %vm445, %v416, 0
      %447 = vrot.lane.b32.xlu0 %v424, 16
      %v448 = vpop.permute.xlu0 %447
      %vm449 = vcmp.ne.s16.totalorder %v448, 0
      %v450 = vsel %vm449, %v416, 0
      %451 = vrot.lane.b32.xlu0 %v434, 18
      %v452 = vpop.permute.xlu0 %451
      %vm453 = vcmp.ne.s16.totalorder %v452, 0
      %v454 = vsel %vm453, %v416, 0
      %456 = vrot.lane.b32.xlu0 %v416, 127
      %v457 = vpop.permute.xlu0 %456
      %460 = vrot.lane.b32.xlu0 %v438, 126
      %v461 = vpop.permute.xlu0 %460
      %464 = vrot.lane.b32.xlu0 %v442, 120
      %v465 = vpop.permute.xlu0 %464
      %467 = vrot.lane.b32.xlu0 %v416, 119
      %v468 = vpop.permute.xlu0 %467
      %471 = vrot.lane.b32.xlu0 %v446, 118
      %v472 = vpop.permute.xlu0 %471
      %475 = vrot.lane.b32.xlu0 %v450, 112
      %v476 = vpop.permute.xlu0 %475
      %478 = vrot.lane.b32.xlu0 %v416, 111
      %v479 = vpop.permute.xlu0 %478
      %482 = vrot.lane.b32.xlu0 %v454, 110
      %v483 = vpop.permute.xlu0 %482
      %v485 = vld [vmem:[%s1] sm:$0xff]
      %v486 = vld [vmem:[%s2] sm:$0xff]
      %488 = vset.pattern.permute.xlu0 0
      %489 = vperm.xlu0 %488, %v486
      %v490 = vpop.permute.xlu0 %489
      %v493 = vunpack.c.l.b16 %v485
      %v494 = vunpack.c.h.b16 %v485
      %v495 = vpack.c.b16 %v493, %v493
      %v496 = vpack.c.b16 %v494, %v494
      %vm498 = vcmask 130048
      %v500 = vsel %vm498, %v496, 0
      %502 = vmatprep.subr.bf16.mxu0 0
      %503 = vmatpush1.bf16.msra.mxu0 %v426
      %504 = vmatprep.subr.bf16.mxu0 0
      %505 = vmatpush1.bf16.msra.mxu0 %v457
      %506 = vmatprep.subr.bf16.mxu0 0
      %507 = vmatpush1.bf16.msra.mxu0 %v461
      %508 = vmatprep.subr.bf16.mxu0 0
      %509 = vmatpush1.bf16.msra.mxu0 %v465
      %510 = vmatprep.subr.bf16.mxu0 0
      %511 = vmatpush1.bf16.msra.mxu0 %v468
      %512 = vmatprep.subr.bf16.mxu0 0
      %513 = vmatpush1.bf16.msra.mxu0 %v472
      %514 = vmatprep.subr.bf16.mxu0 0
      %515 = vmatpush1.bf16.msra.mxu0 %v476
      %516 = vmatprep.subr.bf16.mxu0 0
      %517 = vmatpush1.bf16.msra.mxu0 %v479
      %518 = vmatprep.subr.bf16.mxu0 0
      %519 = vmatpush1.bf16.msra.mxu0 %v483
      %520 = vmatprep.subr.bf16.mxu0 0
      %521 = vmatpush1.bf16.msra.mxu0 0
      %522 = vmatprep.subr.bf16.mxu0 0
      %523 = vmatpush1.bf16.msra.mxu0 0
      %524 = vmatprep.subr.bf16.mxu0 0
      %525 = vmatpush1.bf16.msra.mxu0 0
      %526 = vmatprep.subr.bf16.mxu0 0
      %527 = vmatpush1.bf16.msra.mxu0 0
      %528 = vmatprep.subr.bf16.mxu0 0
      %529 = vmatpush1.bf16.msra.mxu0 0
      %530 = vmatprep.subr.bf16.mxu0 0
      %531 = vmatpush1.bf16.msra.mxu0 0
      %532 = vmatprep.subr.bf16.mxu0 0
      %533 = vmatpush1.bf16.msra.mxu0 0
      %534 = vmatprep.mubr.bf16.mxu0 %v500
      %535 = vmatmul.mubr.bf16.gmra.mrb[0].mxu0 %v495
      %v536 = vpop.f32.mrb[0].mxu0
      %v537 = vadd.f32 %v490, %v536
      %v538 = vpop.f32.mrb[0].mxu0
      %v539 = vpop.f32.mrb[0].mxu0
      %v540 = vpop.f32.mrb[0].mxu0
      %541 = vdwg.mxu0
      %vm542 = vcmp.ge.f32.partialorder %v537, 0.0
      %v543 = vmul.f32 %v537, 0.01
      %v544 = vsel %vm542, %v537, %v543
      %v545 = vpack.c.bf16 %v544, %v544
      %547 = vrot.lane.b32.xlu0 %v545, 9
      %v548 = vpop.permute.xlu0 %547
      %550 = vst.msk [vmem:[#allocation2] sm:$0xf] %vm414, %v548
      %v551 = vld [vmem:[#allocation2] sm:$0xff]
      %v552 = vsel %vm425, %v551, 0
      %v553 = vsel %vm437, %v551, 0
      %v554 = vsel %vm441, %v551, 0
      %v555 = vsel %vm445, %v551, 0
      %v556 = vsel %vm449, %v551, 0
      %v557 = vsel %vm453, %v551, 0
      %559 = vrot.lane.b32.xlu0 %v551, 127
      %v560 = vpop.permute.xlu0 %559
      %563 = vrot.lane.b32.xlu0 %v553, 126
      %v564 = vpop.permute.xlu0 %563
      %567 = vrot.lane.b32.xlu0 %v554, 120
      %v568 = vpop.permute.xlu0 %567
      %570 = vrot.lane.b32.xlu0 %v551, 119
      %v571 = vpop.permute.xlu0 %570
      %574 = vrot.lane.b32.xlu0 %v555, 118
      %v575 = vpop.permute.xlu0 %574
      %578 = vrot.lane.b32.xlu0 %v556, 112
      %v579 = vpop.permute.xlu0 %578
      %581 = vrot.lane.b32.xlu0 %v551, 111
      %v582 = vpop.permute.xlu0 %581
      %585 = vrot.lane.b32.xlu0 %v557, 110
      %v586 = vpop.permute.xlu0 %585
      %v588 = vld [vmem:[%s3] sm:$0xff]
      %v589 = vld [vmem:[%s4] sm:$0xff]
      %591 = vset.pattern.permute.xlu0 0
      %592 = vperm.xlu0 %591, %v589
      %v593 = vpop.permute.xlu0 %592
      %v596 = vunpack.c.l.b16 %v588
      %v597 = vunpack.c.h.b16 %v588
      %v598 = vpack.c.b16 %v596, %v596
      %v599 = vpack.c.b16 %v597, %v597
      %v602 = vsel %vm498, %v599, 0
      %604 = vmatprep.subr.bf16.mxu0 0
      %605 = vmatpush1.bf16.msra.mxu0 %v552
      %606 = vmatprep.subr.bf16.mxu0 0
      %607 = vmatpush1.bf16.msra.mxu0 %v560
      %608 = vmatprep.subr.bf16.mxu0 0
      %609 = vmatpush1.bf16.msra.mxu0 %v564
      %610 = vmatprep.subr.bf16.mxu0 0
      %611 = vmatpush1.bf16.msra.mxu0 %v568
      %612 = vmatprep.subr.bf16.mxu0 0
      %613 = vmatpush1.bf16.msra.mxu0 %v571
      %614 = vmatprep.subr.bf16.mxu0 0
      %615 = vmatpush1.bf16.msra.mxu0 %v575
      %616 = vmatprep.subr.bf16.mxu0 0
      %617 = vmatpush1.bf16.msra.mxu0 %v579
      %618 = vmatprep.subr.bf16.mxu0 0
      %619 = vmatpush1.bf16.msra.mxu0 %v582
      %620 = vmatprep.subr.bf16.mxu0 0
      %621 = vmatpush1.bf16.msra.mxu0 %v586
      %622 = vmatprep.subr.bf16.mxu0 0
      %623 = vmatpush1.bf16.msra.mxu0 0
      %624 = vmatprep.subr.bf16.mxu0 0
      %625 = vmatpush1.bf16.msra.mxu0 0
      %626 = vmatprep.subr.bf16.mxu0 0
      %627 = vmatpush1.bf16.msra.mxu0 0
      %628 = vmatprep.subr.bf16.mxu0 0
      %629 = vmatpush1.bf16.msra.mxu0 0
      %630 = vmatprep.subr.bf16.mxu0 0
      %631 = vmatpush1.bf16.msra.mxu0 0
      %632 = vmatprep.subr.bf16.mxu0 0
      %633 = vmatpush1.bf16.msra.mxu0 0
      %634 = vmatprep.subr.bf16.mxu0 0
      %635 = vmatpush1.bf16.msra.mxu0 0
      %636 = vmatprep.mubr.bf16.mxu0 %v602
      %637 = vmatmul.mubr.bf16.gmra.mrb[0].mxu0 %v598
      %v638 = vpop.f32.mrb[0].mxu0
      %v639 = vadd.f32 %v593, %v638
      %v640 = vpop.f32.mrb[0].mxu0
      %v641 = vpop.f32.mrb[0].mxu0
      %v642 = vpop.f32.mrb[0].mxu0
      %643 = vdwg.mxu0
      %vm644 = vcmp.ge.f32.partialorder %v639, 0.0
      %v645 = vmul.f32 %v639, 0.01
      %v646 = vsel %vm644, %v639, %v645
      %v647 = vpack.c.bf16 %v646, %v646
      %649 = vrot.lane.b32.xlu0 %v647, 9
      %v650 = vpop.permute.xlu0 %649
      %652 = vst.msk [vmem:[#allocation2] sm:$0xf] %vm414, %v650
      %v653 = vld [vmem:[#allocation2] sm:$0xff]
      %v654 = vsel %vm425, %v653, 0
      %v655 = vsel %vm437, %v653, 0
      %v656 = vsel %vm441, %v653, 0
      %v657 = vsel %vm445, %v653, 0
      %v658 = vsel %vm449, %v653, 0
      %v659 = vsel %vm453, %v653, 0
      %661 = vrot.lane.b32.xlu0 %v653, 127
      %v662 = vpop.permute.xlu0 %661
      %665 = vrot.lane.b32.xlu0 %v655, 126
      %v666 = vpop.permute.xlu0 %665
      %669 = vrot.lane.b32.xlu0 %v656, 120
      %v670 = vpop.permute.xlu0 %669
      %672 = vrot.lane.b32.xlu0 %v653, 119
      %v673 = vpop.permute.xlu0 %672
      %676 = vrot.lane.b32.xlu0 %v657, 118
      %v677 = vpop.permute.xlu0 %676
      %680 = vrot.lane.b32.xlu0 %v658, 112
      %v681 = vpop.permute.xlu0 %680
      %683 = vrot.lane.b32.xlu0 %v653, 111
      %v684 = vpop.permute.xlu0 %683
      %687 = vrot.lane.b32.xlu0 %v659, 110
      %v688 = vpop.permute.xlu0 %687
      %v690 = vld [vmem:[%s5] sm:$0xff]
      %v691 = vld [vmem:[%s6] sm:$0xff]
      %693 = vset.pattern.permute.xlu0 0
      %694 = vperm.xlu0 %693, %v691
      %v695 = vpop.permute.xlu0 %694
      %v698 = vunpack.c.l.b16 %v690
      %v699 = vunpack.c.h.b16 %v690
      %v700 = vpack.c.b16 %v698, %v698
      %v701 = vpack.c.b16 %v699, %v699
      %v704 = vsel %vm498, %v701, 0
      %706 = vmatprep.subr.bf16.mxu0 0
      %707 = vmatpush1.bf16.msra.mxu0 %v654
      %708 = vmatprep.subr.bf16.mxu0 0
      %709 = vmatpush1.bf16.msra.mxu0 %v662
      %710 = vmatprep.subr.bf16.mxu0 0
      %711 = vmatpush1.bf16.msra.mxu0 %v666
      %712 = vmatprep.subr.bf16.mxu0 0
      %713 = vmatpush1.bf16.msra.mxu0 %v670
      %714 = vmatprep.subr.bf16.mxu0 0
      %715 = vmatpush1.bf16.msra.mxu0 %v673
      %716 = vmatprep.subr.bf16.mxu0 0
      %717 = vmatpush1.bf16.msra.mxu0 %v677
      %718 = vmatprep.subr.bf16.mxu0 0
      %719 = vmatpush1.bf16.msra.mxu0 %v681
      %720 = vmatprep.subr.bf16.mxu0 0
      %721 = vmatpush1.bf16.msra.mxu0 %v684
      %722 = vmatprep.subr.bf16.mxu0 0
      %723 = vmatpush1.bf16.msra.mxu0 %v688
      %724 = vmatprep.subr.bf16.mxu0 0
      %725 = vmatpush1.bf16.msra.mxu0 0
      %726 = vmatprep.subr.bf16.mxu0 0
      %727 = vmatpush1.bf16.msra.mxu0 0
      %728 = vmatprep.subr.bf16.mxu0 0
      %729 = vmatpush1.bf16.msra.mxu0 0
      %730 = vmatprep.subr.bf16.mxu0 0
      %731 = vmatpush1.bf16.msra.mxu0 0
      %732 = vmatprep.subr.bf16.mxu0 0
      %733 = vmatpush1.bf16.msra.mxu0 0
      %734 = vmatprep.subr.bf16.mxu0 0
      %735 = vmatpush1.bf16.msra.mxu0 0
      %736 = vmatprep.subr.bf16.mxu0 0
      %737 = vmatpush1.bf16.msra.mxu0 0
      %738 = vmatprep.mubr.bf16.mxu0 %v704
      %739 = vmatmul.mubr.bf16.gmra.mrb[0].mxu0 %v700
      %v740 = vpop.f32.mrb[0].mxu0
      %v741 = vadd.f32 %v695, %v740
      %v742 = vpop.f32.mrb[0].mxu0
      %v743 = vpop.f32.mrb[0].mxu0
      %v744 = vpop.f32.mrb[0].mxu0
      %745 = vdwg.mxu0
      %vm746 = vcmp.ge.f32.partialorder %v741, 0.0
      %v747 = vmul.f32 %v741, 0.01
      %v748 = vsel %vm746, %v741, %v747
      %v749 = vpack.c.bf16 %v748, %v748
      %v750 = vld [vmem:[%s7] sm:$0xf]
      %v751 = vld [vmem:[%s8] sm:$0xff]
      %753 = vset.pattern.permute.xlu0 0
      %754 = vperm.xlu0 %753, %v751
      %v755 = vpop.permute.xlu0 %754
      %vm757 = vcmask 64512
      %v759 = vsel %vm757, %v750, 0
      %vm761 = vcmask 1043456
      %v763 = vsel %vm761, %v749, 0
      %765 = vmatprep.subr.bf16.mxu0 0
      %766 = vmatpush1.bf16.msra.mxu0 %v763
      %767 = vmatprep.subr.bf16.mxu0 0
      %768 = vmatpush1.bf16.msra.mxu0 0
      %769 = vmatprep.subr.bf16.mxu0 0
      %770 = vmatpush1.bf16.msra.mxu0 0
      %771 = vmatprep.subr.bf16.mxu0 0
      %772 = vmatpush1.bf16.msra.mxu0 0
      %773 = vmatprep.subr.bf16.mxu0 0
      %774 = vmatpush1.bf16.msra.mxu0 0
      %775 = vmatprep.subr.bf16.mxu0 0
      %776 = vmatpush1.bf16.msra.mxu0 0
      %777 = vmatprep.subr.bf16.mxu0 0
      %778 = vmatpush1.bf16.msra.mxu0 0
      %779 = vmatprep.subr.bf16.mxu0 0
      %780 = vmatpush1.bf16.msra.mxu0 0
      %781 = vmatprep.subr.bf16.mxu0 0
      %782 = vmatpush1.bf16.msra.mxu0 0
      %783 = vmatprep.subr.bf16.mxu0 0
      %784 = vmatpush1.bf16.msra.mxu0 0
      %785 = vmatprep.subr.bf16.mxu0 0
      %786 = vmatpush1.bf16.msra.mxu0 0
      %787 = vmatprep.subr.bf16.mxu0 0
      %788 = vmatpush1.bf16.msra.mxu0 0
      %789 = vmatprep.subr.bf16.mxu0 0
      %790 = vmatpush1.bf16.msra.mxu0 0
      %791 = vmatprep.subr.bf16.mxu0 0
      %792 = vmatpush1.bf16.msra.mxu0 0
      %793 = vmatprep.subr.bf16.mxu0 0
      %794 = vmatpush1.bf16.msra.mxu0 0
      %795 = vmatprep.subr.bf16.mxu0 0
      %796 = vmatpush1.bf16.msra.mxu0 0
      %797 = vmatprep.mubr.bf16.mxu0 0
      %798 = vmatmul.mubr.bf16.gmra.mrb[0].mxu0 %v759
      %v799 = vpop.f32.mrb[0].mxu0
      %v800 = vadd.f32 %v755, %v799
      %v801 = vpop.f32.mrb[0].mxu0
      %v802 = vpop.f32.mrb[0].mxu0
      %v803 = vpop.f32.mrb[0].mxu0
      %804 = vdwg.mxu0
      %vm805 = vcmp.ge.f32.partialorder %v800, 0.0
      %v806 = vmul.f32 %v800, 0.01
      %v807 = vsel %vm805, %v800, %v806
      %v808 = vpack.c.bf16 %v807, %v807
      %v809 = vld [vmem:[%s9] sm:$0xf]
      %v810 = vld [vmem:[%s10] sm:$0xff]
      %812 = vset.pattern.permute.xlu0 0
      %813 = vperm.xlu0 %812, %v810
      %v814 = vpop.permute.xlu0 %813
      %v817 = vsel %vm757, %v809, 0
      %v820 = vsel %vm761, %v808, 0
      %822 = vmatprep.subr.bf16.mxu0 0
      %823 = vmatpush1.bf16.msra.mxu0 %v820
      %824 = vmatprep.subr.bf16.mxu0 0
      %825 = vmatpush1.bf16.msra.mxu0 0
      %826 = vmatprep.subr.bf16.mxu0 0
      %827 = vmatpush1.bf16.msra.mxu0 0
      %828 = vmatprep.subr.bf16.mxu0 0
      %829 = vmatpush1.bf16.msra.mxu0 0
      %830 = vmatprep.subr.bf16.mxu0 0
      %831 = vmatpush1.bf16.msra.mxu0 0
      %832 = vmatprep.subr.bf16.mxu0 0
      %833 = vmatpush1.bf16.msra.mxu0 0
      %834 = vmatprep.subr.bf16.mxu0 0
      %835 = vmatpush1.bf16.msra.mxu0 0
      %836 = vmatprep.subr.bf16.mxu0 0
      %837 = vmatpush1.bf16.msra.mxu0 0
      %838 = vmatprep.subr.bf16.mxu0 0
      %839 = vmatpush1.bf16.msra.mxu0 0
      %840 = vmatprep.subr.bf16.mxu0 0
      %841 = vmatpush1.bf16.msra.mxu0 0
      %842 = vmatprep.subr.bf16.mxu0 0
      %843 = vmatpush1.bf16.msra.mxu0 0
      %844 = vmatprep.subr.bf16.mxu0 0
      %845 = vmatpush1.bf16.msra.mxu0 0
      %846 = vmatprep.subr.bf16.mxu0 0
      %847 = vmatpush1.bf16.msra.mxu0 0
      %848 = vmatprep.subr.bf16.mxu0 0
      %849 = vmatpush1.bf16.msra.mxu0 0
      %850 = vmatprep.subr.bf16.mxu0 0
      %851 = vmatpush1.bf16.msra.mxu0 0
      %852 = vmatprep.subr.bf16.mxu0 0
      %853 = vmatpush1.bf16.msra.mxu0 0
      %854 = vmatprep.mubr.bf16.mxu0 0
      %855 = vmatmul.mubr.bf16.gmra.mrb[0].mxu0 %v817
      %v856 = vpop.f32.mrb[0].mxu0
      %v857 = vadd.f32 %v814, %v856
      %v858 = vpop.f32.mrb[0].mxu0
      %v859 = vpop.f32.mrb[0].mxu0
      %v860 = vpop.f32.mrb[0].mxu0
      %861 = vdwg.mxu0
      %vm862 = vcmp.ge.f32.partialorder %v857, 0.0
      %v863 = vmul.f32 %v857, 0.01
      %v864 = vsel %vm862, %v857, %v863
      %v865 = vpack.c.bf16 %v864, %v864
      %vm866 = vcmask 519168
      %867 = vst.msk [vmem:[%s381] sm:$0xf] %vm866, %v865
      %p868 = scmp.lt.s32.totalorder %s22, 1
      %s869 = scalar_select %p868, %s22, 1
      %s870 = smul.addr %s869, 4
      %s871 = scalar_lea.vmem %s11, %s870
      // Predicated region
      $region69: #{run.4} parent=63 // pred_check
        %p872 = pneg %p276
      $region70: #{run.4} parent=63 // pred_check_branch
        %874 = sbr.rel (%p872) target = $region72
      $region71: #{run.4} parent=63 // pred_region
        _
      $region72: #{run.4} parent=63 // pred_fallthru
        _
    $region64: #{run.4} parent=5 // pred_fallthru
      _
    %p875 = scmp.le.s32.totalorder 2, %s17
    // Predicated region
    $region73: #{run.4} parent=5 // pred_check
      %p876 = pneg %p875
    $region74: #{run.4} parent=5 // pred_check_branch
      %878 = sbr.rel (%p876) target = $region76
    $region75: #{run.4} parent=5 // pred_region
      %s879 = ssub.s32 %s17, 2
      // Predicated region
      $region77: #{run.4} parent=75 // pred_check
        %p880 = pneg %p282
      $region78: #{run.4} parent=75 // pred_check_branch
        %882 = sbr.rel (%p880) target = $region80
      $region79: #{run.4} parent=75 // pred_region
        %p883 = scmp.lt.s32.totalorder %s23, 1
        %s884 = scalar_select %p883, %s23, 1
        %s885 = smul.addr %s884, 4
        %s886 = scalar_lea.vmem %s11, %s885
      $region80: #{run.4} parent=75 // pred_fallthru
        _
    $region76: #{run.4} parent=5 // pred_fallthru
      _
  $region6: #{run.4} parent=0 // loop_footer
    %s21 = sadd.s32 1, %s17
  $region7: #{run.4} parent=0 // loop_footer_branch
    %16 = sbr.rel target = $region3
  $region8: #{run.4} parent=0 // loop_exit
    _

// kernel: run.5
$region0: #{run.5}
  #allocation0 [shape = 'u32[]', space=smem, size = 0x4, offset = 0x4, fixed_abs, tag = 'smem constant byte address 0x4 - core index']
  #allocation1 [shape = 'u32[144,128]{1,0:T(1,128)}', space=vmem, size = 0x12000, scoped, tag = 'internal scratch']
  #allocation2 [shape = 'bf16[16,290]{1,0:T(16,128)(2,1)}', space=vmem, size = 0x3000, scoped, tag = 'scratch operand']
  #allocation3 [shape = 'f32[1,1]{1,0:T(1,128)S(1)}', space=vmem, size = 0x200, scoped, tag = 'scoped memory for run.5']
  %s0 = inlined_call_operand.vmem [shape: bf16[2,4,256], index: 0, kind: input, shape index: {}]
  %s1 = inlined_call_operand.vmem [shape: bf16[2,8,256], index: 1, kind: input, shape index: {}]
  %s2 = inlined_call_operand.vmem [shape: bf16[4,144], index: 2, kind: input, shape index: {}]
  %s3 = inlined_call_operand.vmem [shape: f32[4,1], index: 3, kind: input, shape index: {}]
  %s4 = inlined_call_operand.vmem [shape: bf16[4,144], index: 4, kind: input, shape index: {}]
  %s5 = inlined_call_operand.vmem [shape: f32[4,1], index: 5, kind: input, shape index: {}]
  %s6 = inlined_call_operand.vmem [shape: bf16[4,144], index: 6, kind: input, shape index: {}]
  %s7 = inlined_call_operand.vmem [shape: f32[4,1], index: 7, kind: input, shape index: {}]
  %s8 = inlined_call_operand.vmem [shape: bf16[4,4], index: 8, kind: input, shape index: {}]
  %s9 = inlined_call_operand.vmem [shape: f32[4,1], index: 9, kind: input, shape index: {}]
  %s10 = inlined_call_operand.vmem [shape: bf16[4,4], index: 10, kind: input, shape index: {}]
  %s11 = inlined_call_operand.vmem [shape: f32[4,1], index: 11, kind: input, shape index: {}]
  %s12 = inlined_call_operand.vmem [shape: bf16[1,4], index: 12, kind: input, shape index: {}]
  %s13 = inlined_call_operand.<no memory space> [shape: f32[1,1], index: 13, kind: input, shape index: {}]
  %s14 = inlined_call_operand.vmem [shape: f32[2,1,256], index: 14, kind: output, shape index: {}]
  %s15 = sld [smem:[#allocation0]]
  $region93: #{run.5} parent=0
    _
  %s17 = ssub.s32 1, %s15
  %s18 = scalar_select 0, %s17, %s15
  %v19 = vstv %s13
  %20 = vst [vmem:[#allocation3] sm:$0x1] %v19
  loop: start=0, step=1, limit=4
  $region2: #{run.5} parent=0 // loop_pre_header
    _
  $region3: #{run.5} parent=0 // loop_header
    %s22 = sphi 0, %s26
    %p23 = scmp.ge.s32.totalorder %s22, 4
    %s32 = sphi 0, %s34
    %s35 = sphi 0, %s32
    %s36 = sphi 0, %s35
    %s52 = sphi 0, %s36
    %s58 = sphi 0, %s60
    %s61 = sphi 0, %s58
    %s62 = sphi 0, %s61
    %s78 = sphi 0, %s62
    %s82 = sphi 0, %s82
    %s84 = sphi 0, %s82
    %s85 = sphi 0, %s84
    %s99 = sphi 0, %s85
    %s103 = sphi 0, %s103
    %s105 = sphi 0, %s103
    %s106 = sphi 0, %s105
    %s120 = sphi 0, %s106
    %s124 = sphi 0, %s124
    %s126 = sphi 0, %s124
    %s127 = sphi 0, %s126
    %s141 = sphi 0, %s127
    %s145 = sphi 0, %s145
    %s147 = sphi 0, %s145
    %s148 = sphi 0, %s147
    %s162 = sphi 0, %s148
    %s166 = sphi 0, %s166
    %s168 = sphi 0, %s166
    %s169 = sphi 0, %s168
    %s183 = sphi 0, %s169
    %s187 = sphi 0, %s187
    %s189 = sphi 0, %s187
    %s190 = sphi 0, %s189
    %s204 = sphi 0, %s190
    %s208 = sphi 0, %s208
    %s210 = sphi 0, %s208
    %s211 = sphi 0, %s210
    %s225 = sphi 0, %s211
    %s229 = sphi 0, %s229
    %s231 = sphi 0, %s229
    %s232 = sphi 0, %s231
    %s246 = sphi 0, %s232
    %s250 = sphi 0, %s250
    %s252 = sphi 0, %s250
    %s253 = sphi 0, %s252
    %s267 = sphi 0, %s253
    %s271 = sphi 0, %s271
    %s273 = sphi 0, %s271
    %s274 = sphi 0, %s273
    %s288 = sphi 0, %s274
    %s292 = sphi 0, %s292
    %s294 = sphi 0, %s292
    %s295 = sphi 0, %s294
    %s309 = sphi 0, %s295
    %s313 = sphi 0, %s313
    %s315 = sphi 0, %s313
    %s316 = sphi 0, %s315
    %s330 = sphi 0, %s316
    %s336 = sphi 0, %s338
    %s339 = sphi 0, %s336
    %s340 = sphi 0, %s339
    %s356 = sphi 0, %s340
  $region4: #{run.5} parent=0 // loop_header_branch
    %25 = sbr.rel (%p23) target = $region8
  $region5: #{run.5} parent=0 // loop_body
    %s27 = ssub.s32 %s22, 1
    %s28 = ssub.s32 %s22, 2
    %s29 = sadd.s32 %s22, 1
    %s30 = ssub.s32 %s22, %s29
    %p31 = scmp.eq.s32.totalorder %s30, 0
    %s33 = sadd.s32 %s32, 1
    %s34 = scalar_select %p31, %s32, %s33
    %p37 = pneg %p31
    %p38 = scmp.eq.s32.totalorder %s22, 1
    %p39 = por %p37, %p38
    %p40 = scmp.ne.s32.totalorder %s32, %s35
    %p41 = scmp.eq.s32.totalorder %s22, 0
    %p42 = por %p40, %p41
    %p43 = scmp.ne.s32.totalorder %s32, %s35
    %p44 = scmp.eq.s32.totalorder %s27, 1
    %p45 = por %p43, %p44
    %p46 = scmp.ne.s32.totalorder %s35, %s36
    %p47 = scmp.eq.s32.totalorder %s27, 0
    %p48 = por %p46, %p47
    %p49 = scmp.ne.s32.totalorder %s35, %s36
    %p50 = scmp.eq.s32.totalorder %s28, 1
    %p51 = por %p49, %p50
    %p53 = scmp.ne.s32.totalorder %s36, %s52
    %p54 = scmp.eq.s32.totalorder %s28, 0
    %p55 = por %p53, %p54
    %s56 = ssub.s32 %s22, %s29
    %p57 = scmp.eq.s32.totalorder %s56, 0
    %s59 = sadd.s32 %s58, 1
    %s60 = scalar_select %p57, %s58, %s59
    %p63 = pneg %p57
    %p64 = scmp.eq.s32.totalorder %s22, 1
    %p65 = por %p63, %p64
    %p66 = scmp.ne.s32.totalorder %s58, %s61
    %p67 = scmp.eq.s32.totalorder %s22, 0
    %p68 = por %p66, %p67
    %p69 = scmp.ne.s32.totalorder %s58, %s61
    %p70 = scmp.eq.s32.totalorder %s27, 1
    %p71 = por %p69, %p70
    %p72 = scmp.ne.s32.totalorder %s61, %s62
    %p73 = scmp.eq.s32.totalorder %s27, 0
    %p74 = por %p72, %p73
    %p75 = scmp.ne.s32.totalorder %s61, %s62
    %p76 = scmp.eq.s32.totalorder %s28, 1
    %p77 = por %p75, %p76
    %p79 = scmp.ne.s32.totalorder %s62, %s78
    %p80 = scmp.eq.s32.totalorder %s28, 0
    %p81 = por %p79, %p80
    %s83 = sadd.s32 %s82, 1
    %p86 = scmp.eq.s32.totalorder %s22, 1
    %p87 = scmp.ne.s32.totalorder %s82, %s84
    %p88 = scmp.eq.s32.totalorder %s22, 0
    %p89 = por %p87, %p88
    %p90 = scmp.ne.s32.totalorder %s82, %s84
    %p91 = scmp.eq.s32.totalorder %s27, 1
    %p92 = por %p90, %p91
    %p93 = scmp.ne.s32.totalorder %s84, %s85
    %p94 = scmp.eq.s32.totalorder %s27, 0
    %p95 = por %p93, %p94
    %p96 = scmp.ne.s32.totalorder %s84, %s85
    %p97 = scmp.eq.s32.totalorder %s28, 1
    %p98 = por %p96, %p97
    %p100 = scmp.ne.s32.totalorder %s85, %s99
    %p101 = scmp.eq.s32.totalorder %s28, 0
    %p102 = por %p100, %p101
    %s104 = sadd.s32 %s103, 1
    %p107 = scmp.eq.s32.totalorder %s22, 1
    %p108 = scmp.ne.s32.totalorder %s103, %s105
    %p109 = scmp.eq.s32.totalorder %s22, 0
    %p110 = por %p108, %p109
    %p111 = scmp.ne.s32.totalorder %s103, %s105
    %p112 = scmp.eq.s32.totalorder %s27, 1
    %p113 = por %p111, %p112
    %p114 = scmp.ne.s32.totalorder %s105, %s106
    %p115 = scmp.eq.s32.totalorder %s27, 0
    %p116 = por %p114, %p115
    %p117 = scmp.ne.s32.totalorder %s105, %s106
    %p118 = scmp.eq.s32.totalorder %s28, 1
    %p119 = por %p117, %p118
    %p121 = scmp.ne.s32.totalorder %s106, %s120
    %p122 = scmp.eq.s32.totalorder %s28, 0
    %p123 = por %p121, %p122
    %s125 = sadd.s32 %s124, 1
    %p128 = scmp.eq.s32.totalorder %s22, 1
    %p129 = scmp.ne.s32.totalorder %s124, %s126
    %p130 = scmp.eq.s32.totalorder %s22, 0
    %p131 = por %p129, %p130
    %p132 = scmp.ne.s32.totalorder %s124, %s126
    %p133 = scmp.eq.s32.totalorder %s27, 1
    %p134 = por %p132, %p133
    %p135 = scmp.ne.s32.totalorder %s126, %s127
    %p136 = scmp.eq.s32.totalorder %s27, 0
    %p137 = por %p135, %p136
    %p138 = scmp.ne.s32.totalorder %s126, %s127
    %p139 = scmp.eq.s32.totalorder %s28, 1
    %p140 = por %p138, %p139
    %p142 = scmp.ne.s32.totalorder %s127, %s141
    %p143 = scmp.eq.s32.totalorder %s28, 0
    %p144 = por %p142, %p143
    %s146 = sadd.s32 %s145, 1
    %p149 = scmp.eq.s32.totalorder %s22, 1
    %p150 = scmp.ne.s32.totalorder %s145, %s147
    %p151 = scmp.eq.s32.totalorder %s22, 0
    %p152 = por %p150, %p151
    %p153 = scmp.ne.s32.totalorder %s145, %s147
    %p154 = scmp.eq.s32.totalorder %s27, 1
    %p155 = por %p153, %p154
    %p156 = scmp.ne.s32.totalorder %s147, %s148
    %p157 = scmp.eq.s32.totalorder %s27, 0
    %p158 = por %p156, %p157
    %p159 = scmp.ne.s32.totalorder %s147, %s148
    %p160 = scmp.eq.s32.totalorder %s28, 1
    %p161 = por %p159, %p160
    %p163 = scmp.ne.s32.totalorder %s148, %s162
    %p164 = scmp.eq.s32.totalorder %s28, 0
    %p165 = por %p163, %p164
    %s167 = sadd.s32 %s166, 1
    %p170 = scmp.eq.s32.totalorder %s22, 1
    %p171 = scmp.ne.s32.totalorder %s166, %s168
    %p172 = scmp.eq.s32.totalorder %s22, 0
    %p173 = por %p171, %p172
    %p174 = scmp.ne.s32.totalorder %s166, %s168
    %p175 = scmp.eq.s32.totalorder %s27, 1
    %p176 = por %p174, %p175
    %p177 = scmp.ne.s32.totalorder %s168, %s169
    %p178 = scmp.eq.s32.totalorder %s27, 0
    %p179 = por %p177, %p178
    %p180 = scmp.ne.s32.totalorder %s168, %s169
    %p181 = scmp.eq.s32.totalorder %s28, 1
    %p182 = por %p180, %p181
    %p184 = scmp.ne.s32.totalorder %s169, %s183
    %p185 = scmp.eq.s32.totalorder %s28, 0
    %p186 = por %p184, %p185
    %s188 = sadd.s32 %s187, 1
    %p191 = scmp.eq.s32.totalorder %s22, 1
    %p192 = scmp.ne.s32.totalorder %s187, %s189
    %p193 = scmp.eq.s32.totalorder %s22, 0
    %p194 = por %p192, %p193
    %p195 = scmp.ne.s32.totalorder %s187, %s189
    %p196 = scmp.eq.s32.totalorder %s27, 1
    %p197 = por %p195, %p196
    %p198 = scmp.ne.s32.totalorder %s189, %s190
    %p199 = scmp.eq.s32.totalorder %s27, 0
    %p200 = por %p198, %p199
    %p201 = scmp.ne.s32.totalorder %s189, %s190
    %p202 = scmp.eq.s32.totalorder %s28, 1
    %p203 = por %p201, %p202
    %p205 = scmp.ne.s32.totalorder %s190, %s204
    %p206 = scmp.eq.s32.totalorder %s28, 0
    %p207 = por %p205, %p206
    %s209 = sadd.s32 %s208, 1
    %p212 = scmp.eq.s32.totalorder %s22, 1
    %p213 = scmp.ne.s32.totalorder %s208, %s210
    %p214 = scmp.eq.s32.totalorder %s22, 0
    %p215 = por %p213, %p214
    %p216 = scmp.ne.s32.totalorder %s208, %s210
    %p217 = scmp.eq.s32.totalorder %s27, 1
    %p218 = por %p216, %p217
    %p219 = scmp.ne.s32.totalorder %s210, %s211
    %p220 = scmp.eq.s32.totalorder %s27, 0
    %p221 = por %p219, %p220
    %p222 = scmp.ne.s32.totalorder %s210, %s211
    %p223 = scmp.eq.s32.totalorder %s28, 1
    %p224 = por %p222, %p223
    %p226 = scmp.ne.s32.totalorder %s211, %s225
    %p227 = scmp.eq.s32.totalorder %s28, 0
    %p228 = por %p226, %p227
    %s230 = sadd.s32 %s229, 1
    %p233 = scmp.eq.s32.totalorder %s22, 1
    %p234 = scmp.ne.s32.totalorder %s229, %s231
    %p235 = scmp.eq.s32.totalorder %s22, 0
    %p236 = por %p234, %p235
    %p237 = scmp.ne.s32.totalorder %s229, %s231
    %p238 = scmp.eq.s32.totalorder %s27, 1
    %p239 = por %p237, %p238
    %p240 = scmp.ne.s32.totalorder %s231, %s232
    %p241 = scmp.eq.s32.totalorder %s27, 0
    %p242 = por %p240, %p241
    %p243 = scmp.ne.s32.totalorder %s231, %s232
    %p244 = scmp.eq.s32.totalorder %s28, 1
    %p245 = por %p243, %p244
    %p247 = scmp.ne.s32.totalorder %s232, %s246
    %p248 = scmp.eq.s32.totalorder %s28, 0
    %p249 = por %p247, %p248
    %s251 = sadd.s32 %s250, 1
    %p254 = scmp.eq.s32.totalorder %s22, 1
    %p255 = scmp.ne.s32.totalorder %s250, %s252
    %p256 = scmp.eq.s32.totalorder %s22, 0
    %p257 = por %p255, %p256
    %p258 = scmp.ne.s32.totalorder %s250, %s252
    %p259 = scmp.eq.s32.totalorder %s27, 1
    %p260 = por %p258, %p259
    %p261 = scmp.ne.s32.totalorder %s252, %s253
    %p262 = scmp.eq.s32.totalorder %s27, 0
    %p263 = por %p261, %p262
    %p264 = scmp.ne.s32.totalorder %s252, %s253
    %p265 = scmp.eq.s32.totalorder %s28, 1
    %p266 = por %p264, %p265
    %p268 = scmp.ne.s32.totalorder %s253, %s267
    %p269 = scmp.eq.s32.totalorder %s28, 0
    %p270 = por %p268, %p269
    %s272 = sadd.s32 %s271, 1
    %p275 = scmp.eq.s32.totalorder %s22, 1
    %p276 = scmp.ne.s32.totalorder %s271, %s273
    %p277 = scmp.eq.s32.totalorder %s22, 0
    %p278 = por %p276, %p277
    %p279 = scmp.ne.s32.totalorder %s271, %s273
    %p280 = scmp.eq.s32.totalorder %s27, 1
    %p281 = por %p279, %p280
    %p282 = scmp.ne.s32.totalorder %s273, %s274
    %p283 = scmp.eq.s32.totalorder %s27, 0
    %p284 = por %p282, %p283
    %p285 = scmp.ne.s32.totalorder %s273, %s274
    %p286 = scmp.eq.s32.totalorder %s28, 1
    %p287 = por %p285, %p286
    %p289 = scmp.ne.s32.totalorder %s274, %s288
    %p290 = scmp.eq.s32.totalorder %s28, 0
    %p291 = por %p289, %p290
    %s293 = sadd.s32 %s292, 1
    %p296 = scmp.eq.s32.totalorder %s22, 1
    %p297 = scmp.ne.s32.totalorder %s292, %s294
    %p298 = scmp.eq.s32.totalorder %s22, 0
    %p299 = por %p297, %p298
    %p300 = scmp.ne.s32.totalorder %s292, %s294
    %p301 = scmp.eq.s32.totalorder %s27, 1
    %p302 = por %p300, %p301
    %p303 = scmp.ne.s32.totalorder %s294, %s295
    %p304 = scmp.eq.s32.totalorder %s27, 0
    %p305 = por %p303, %p304
    %p306 = scmp.ne.s32.totalorder %s294, %s295
    %p307 = scmp.eq.s32.totalorder %s28, 1
    %p308 = por %p306, %p307
    %p310 = scmp.ne.s32.totalorder %s295, %s309
    %p311 = scmp.eq.s32.totalorder %s28, 0
    %p312 = por %p310, %p311
    %s314 = sadd.s32 %s313, 1
    %p317 = scmp.eq.s32.totalorder %s22, 1
    %p318 = scmp.ne.s32.totalorder %s313, %s315
    %p319 = scmp.eq.s32.totalorder %s22, 0
    %p320 = por %p318, %p319
    %p321 = scmp.ne.s32.totalorder %s313, %s315
    %p322 = scmp.eq.s32.totalorder %s27, 1
    %p323 = por %p321, %p322
    %p324 = scmp.ne.s32.totalorder %s315, %s316
    %p325 = scmp.eq.s32.totalorder %s27, 0
    %p326 = por %p324, %p325
    %p327 = scmp.ne.s32.totalorder %s315, %s316
    %p328 = scmp.eq.s32.totalorder %s28, 1
    %p329 = por %p327, %p328
    %p331 = scmp.ne.s32.totalorder %s316, %s330
    %p332 = scmp.eq.s32.totalorder %s28, 0
    %p333 = por %p331, %p332
    %s334 = ssub.s32 %s22, %s29
    %p335 = scmp.eq.s32.totalorder %s334, 0
    %s337 = sadd.s32 %s336, 1
    %s338 = scalar_select %p335, %s336, %s337
    %p341 = pneg %p335
    %p342 = scmp.eq.s32.totalorder %s22, 1
    %p343 = por %p341, %p342
    %p344 = scmp.ne.s32.totalorder %s336, %s339
    %p345 = scmp.eq.s32.totalorder %s22, 0
    %p346 = por %p344, %p345
    %p347 = scmp.ne.s32.totalorder %s336, %s339
    %p348 = scmp.eq.s32.totalorder %s27, 1
    %p349 = por %p347, %p348
    %p350 = scmp.ne.s32.totalorder %s339, %s340
    %p351 = scmp.eq.s32.totalorder %s27, 0
    %p352 = por %p350, %p351
    %p353 = scmp.ne.s32.totalorder %s339, %s340
    %p354 = scmp.eq.s32.totalorder %s28, 1
    %p355 = por %p353, %p354
    %p357 = scmp.ne.s32.totalorder %s340, %s356
    %p358 = scmp.eq.s32.totalorder %s28, 0
    %p359 = por %p357, %p358
    %p360 = scmp.le.s32.totalorder 1, %s22
    %p361 = scmp.lt.s32.totalorder %s22, 3
    %p362 = pnand %p360, %p361
    %p363 = pneg %p362
    // Predicated region
    $region9: #{run.5} parent=5 // pred_check
      _
    $region10: #{run.5} parent=5 // pred_check_branch
      %365 = sbr.rel (%p362) target = $region12
    $region11: #{run.5} parent=5 // pred_region
      %s366 = ssub.s32 %s22, 1
      // Predicated region
      $region13: #{run.5} parent=11 // pred_check
        %p367 = pneg %p95
      $region14: #{run.5} parent=11 // pred_check_branch
        %369 = sbr.rel (%p367) target = $region16
      $region15: #{run.5} parent=11 // pred_region
        _
      $region16: #{run.5} parent=11 // pred_fallthru
        _
      // Predicated region
      $region17: #{run.5} parent=11 // pred_check
        %p370 = pneg %p116
      $region18: #{run.5} parent=11 // pred_check_branch
        %372 = sbr.rel (%p370) target = $region20
      $region19: #{run.5} parent=11 // pred_region
        _
      $region20: #{run.5} parent=11 // pred_fallthru
        _
      // Predicated region
      $region21: #{run.5} parent=11 // pred_check
        %p373 = pneg %p137
      $region22: #{run.5} parent=11 // pred_check_branch
        %375 = sbr.rel (%p373) target = $region24
      $region23: #{run.5} parent=11 // pred_region
        _
      $region24: #{run.5} parent=11 // pred_fallthru
        _
      // Predicated region
      $region25: #{run.5} parent=11 // pred_check
        %p376 = pneg %p158
      $region26: #{run.5} parent=11 // pred_check_branch
        %378 = sbr.rel (%p376) target = $region28
      $region27: #{run.5} parent=11 // pred_region
        _
      $region28: #{run.5} parent=11 // pred_fallthru
        _
      // Predicated region
      $region29: #{run.5} parent=11 // pred_check
        %p379 = pneg %p179
      $region30: #{run.5} parent=11 // pred_check_branch
        %381 = sbr.rel (%p379) target = $region32
      $region31: #{run.5} parent=11 // pred_region
        _
      $region32: #{run.5} parent=11 // pred_fallthru
        _
      // Predicated region
      $region33: #{run.5} parent=11 // pred_check
        %p382 = pneg %p200
      $region34: #{run.5} parent=11 // pred_check_branch
        %384 = sbr.rel (%p382) target = $region36
      $region35: #{run.5} parent=11 // pred_region
        _
      $region36: #{run.5} parent=11 // pred_fallthru
        _
      // Predicated region
      $region37: #{run.5} parent=11 // pred_check
        %p385 = pneg %p221
      $region38: #{run.5} parent=11 // pred_check_branch
        %387 = sbr.rel (%p385) target = $region40
      $region39: #{run.5} parent=11 // pred_region
        _
      $region40: #{run.5} parent=11 // pred_fallthru
        _
      // Predicated region
      $region41: #{run.5} parent=11 // pred_check
        %p388 = pneg %p242
      $region42: #{run.5} parent=11 // pred_check_branch
        %390 = sbr.rel (%p388) target = $region44
      $region43: #{run.5} parent=11 // pred_region
        _
      $region44: #{run.5} parent=11 // pred_fallthru
        _
      // Predicated region
      $region45: #{run.5} parent=11 // pred_check
        %p391 = pneg %p263
      $region46: #{run.5} parent=11 // pred_check_branch
        %393 = sbr.rel (%p391) target = $region48
      $region47: #{run.5} parent=11 // pred_region
        _
      $region48: #{run.5} parent=11 // pred_fallthru
        _
      // Predicated region
      $region49: #{run.5} parent=11 // pred_check
        %p394 = pneg %p284
      $region50: #{run.5} parent=11 // pred_check_branch
        %396 = sbr.rel (%p394) target = $region52
      $region51: #{run.5} parent=11 // pred_region
        _
      $region52: #{run.5} parent=11 // pred_fallthru
        _
      // Predicated region
      $region53: #{run.5} parent=11 // pred_check
        %p397 = pneg %p305
      $region54: #{run.5} parent=11 // pred_check_branch
        %399 = sbr.rel (%p397) target = $region56
      $region55: #{run.5} parent=11 // pred_region
        _
      $region56: #{run.5} parent=11 // pred_fallthru
        _
      // Predicated region
      $region57: #{run.5} parent=11 // pred_check
        %p400 = pneg %p326
      $region58: #{run.5} parent=11 // pred_check_branch
        %402 = sbr.rel (%p400) target = $region60
      $region59: #{run.5} parent=11 // pred_region
        _
      $region60: #{run.5} parent=11 // pred_fallthru
        _
    $region12: #{run.5} parent=5 // pred_fallthru
      _
    %p403 = scmp.lt.s32.totalorder %s22, 2
    // Predicated region
    $region61: #{run.5} parent=5 // pred_check
      %p404 = pneg %p403
    $region62: #{run.5} parent=5 // pred_check_branch
      %406 = sbr.rel (%p404) target = $region64
    $region63: #{run.5} parent=5 // pred_region
      // Predicated region
      $region65: #{run.5} parent=63 // pred_check
        %p407 = pneg %p42
      $region66: #{run.5} parent=63 // pred_check_branch
        %409 = sbr.rel (%p407) target = $region68
      $region67: #{run.5} parent=63 // pred_region
        %p410 = scmp.lt.s32.totalorder %s22, 1
        %s411 = scalar_select %p410, %s22, 1
        %s412 = smul.addr %s411, 2
        %s413 = smul.addr %s412, 2
        %s414 = scalar_lea.vmem %s0, %s413
      $region68: #{run.5} parent=63 // pred_fallthru
        _
      // Predicated region
      $region69: #{run.5} parent=63 // pred_check
        %p415 = pneg %p68
      $region70: #{run.5} parent=63 // pred_check_branch
        %417 = sbr.rel (%p415) target = $region72
      $region71: #{run.5} parent=63 // pred_region
        %p418 = scmp.lt.s32.totalorder %s22, 1
        %s419 = scalar_select %p418, %s22, 1
        %s420 = smul.addr %s419, 2
        %s421 = smul.addr %s420, 4
        %s422 = scalar_lea.vmem %s1, %s421
      $region72: #{run.5} parent=63 // pred_fallthru
        _
    $region64: #{run.5} parent=5 // pred_fallthru
      _
    %p423 = scmp.le.s32.totalorder 1, %s22
    %p424 = scmp.lt.s32.totalorder %s22, 3
    %p425 = pnand %p423, %p424
    %p426 = pneg %p425
    // Predicated region
    $region73: #{run.5} parent=5 // pred_check
      _
    $region74: #{run.5} parent=5 // pred_check_branch
      %428 = sbr.rel (%p425) target = $region76
    $region75: #{run.5} parent=5 // pred_region
      %s429 = ssub.s32 %s22, 1
      %p430 = scmp.lt.s32.totalorder %s27, 1
      %s431 = scalar_select %p430, %s27, 1
      %s432 = smul.addr %s431, 2
      %s433 = smul.addr %s432, 2
      %s434 = scalar_lea.vmem %s0, %s433
      %p435 = pneg %p48
      %p436 = pneg %p45
      %p437 = scmp.lt.s32.totalorder %s27, 1
      %s438 = scalar_select %p437, %s27, 1
      %s439 = smul.addr %s438, 2
      %s440 = smul.addr %s439, 4
      %s441 = scalar_lea.vmem %s1, %s440
      %p442 = pneg %p74
      %p443 = pneg %p71
      %p444 = pneg %p95
      %p445 = pneg %p92
      %p446 = pneg %p116
      %p447 = pneg %p113
      %p448 = pneg %p137
      %p449 = pneg %p134
      %p450 = pneg %p158
      %p451 = pneg %p155
      %p452 = pneg %p179
      %p453 = pneg %p176
      %p454 = pneg %p200
      %p455 = pneg %p197
      %p456 = pneg %p221
      %p457 = pneg %p218
      %p458 = pneg %p242
      %p459 = pneg %p239
      %p460 = pneg %p263
      %p461 = pneg %p260
      %p462 = pneg %p284
      %p463 = pneg %p281
      %p464 = pneg %p305
      %p465 = pneg %p302
      %p466 = pneg %p326
      %p467 = pneg %p323
      %p468 = pneg %p352
      %p469 = pneg %p349
      %p470 = scmp.lt.s32.totalorder %s27, 1
      %s471 = scalar_select %p470, %s27, 1
      %s472 = smul.addr %s471, 2
      %s473 = scalar_lea.vmem %s14, %s472
      %p474 = scmp.lt.s32.totalorder %s27, 1
      %s475 = scalar_select %p474, %s27, 1
      %s476 = smul.addr %s475, 2
      %s477 = smul.addr %s476, 2
      %s478 = scalar_lea.vmem %s0, %s477
      %p479 = scmp.lt.s32.totalorder %s27, 1
      %s480 = scalar_select %p479, %s27, 1
      %s481 = smul.addr %s480, 2
      %s482 = smul.addr %s481, 4
      %s483 = scalar_lea.vmem %s1, %s482
      %p484 = scmp.lt.s32.totalorder %s27, 1
      %s485 = scalar_select %p484, %s27, 1
      %s486 = smul.addr %s485, 2
      %s487 = scalar_lea.vmem %s14, %s486
      %p491 = scmp.eq.s32.totalorder %s27, 0
      // Predicated region
      $region77: #{run.5} parent=75 // pred_check
        %p492 = pneg %p491
      $region78: #{run.5} parent=75 // pred_check_branch
        %494 = sbr.rel (%p492) target = $region80
      $region79: #{run.5} parent=75 // pred_region
        %495 = vst [vmem:[#allocation2] sm:$0xff] 0
        %496 = vst [vmem:[#allocation2 + $0x8] sm:$0xff] 0
        %vm497 = vcmask 277504
        %498 = vst.msk [vmem:[#allocation2 + $0x10] sm:$0xff] %vm497, 0
      $region80: #{run.5} parent=75 // pred_fallthru
        _
      %v499 = vlaneseq
      %v500 = vand.u32 %v499, 127
      %v501 = vadd.s32 %v500, 128
      %vm502 = vcmp.lt.s32.totalorder %v500, 0
      %v503 = vsub.s32 0, %v500
      %v504 = vsel %vm502, %v503, %v500
      %v505 = vshrl.u32 %v504, 4
      %v506 = vand.u32 %v504, 15
      %v507 = vsub.s32 0, %v506
      %v508 = vsel %vm502, %v507, %v506
      %vm509 = vcmp.lt.s32.totalorder %v501, 0
      %v510 = vsub.s32 0, %v501
      %v511 = vsel %vm509, %v510, %v501
      %v512 = vshrl.u32 %v511, 4
      %v513 = vand.u32 %v511, 15
      %v514 = vsub.s32 0, %v513
      %v515 = vsel %vm509, %v514, %v513
      %vm516 = vcmp.ne.s32.totalorder %v508, 0
      %vm517 = vcmp.ne.s32.totalorder %v515, 0
      %vm518 = vcmp.lt.s32.totalorder %v508, 0
      %vm519 = vcmp.lt.s32.totalorder %v515, 0
      %vm520 = vmand %vm518, %vm516
      %vm521 = vmand %vm519, %vm517
      %v522 = vadd.s32 %v508, 16
      %v523 = vadd.s32 %v515, 16
      %v524 = vsel %vm520, %v522, %v508
      %v525 = vsel %vm521, %v523, %v515
      %vm526 = vcmp.ne.s32.totalorder %v524, 0
      %vm527 = vcmp.ne.s32.totalorder %v525, 0
      %vm528 = vcmp.ne.s32.totalorder %v524, 15
      %vm529 = vcmp.ne.s32.totalorder %v525, 15
      %v530 = vld [vmem:[%s478] sm:$0xf]
      %v533 = vunpack.c.l.s4 1983009808
      %v534 = vunpack.c.0.s8 %v533
      %v535 = vlaneseq
      %v536 = vshrl.u32 %v535, 7
      %v537 = vsub.s32 %v534, %v536
      %v538 = vrot.slane %v530, %v537
      %v539 = vcombine.high %v538, %v538
      %540 = vrot.lane.b32.xlu0 %v538, 17
      %v541 = vpop.permute.xlu0 %540
      %542 = vrot.lane.b32.xlu0 %v539, 17
      %v543 = vpop.permute.xlu0 %542
      %vm544 = vcmask 138240
      %v545 = vsel %vm544, %v541, %v543
      %vm549 = vcmask 1041544
      %550 = vst.msk [vmem:[#allocation2] sm:$0x3] %vm549, %v541
      %551 = vst [vmem:[#allocation2 + $0x8] sm:$0x3] %v545
      %vm552 = vcmask 132096
      %553 = vst.msk [vmem:[#allocation2 + $0x10] sm:$0x3] %vm552, %v543
      %v554 = vld [vmem:[%s483] sm:$0xff]
      %v556 = vunpack.c.l.b16 %v554
      %v557 = vunpack.c.h.b16 %v554
      %v558 = vpack.c.b16 %v556, %v556
      %v559 = vpack.c.b16 %v557, %v557
      %v560 = vrot.slane %v558, 6
      %v561 = vrot.slane %v559, 6
      %562 = vrot.lane.b32.xlu0 %v560, 17
      %v563 = vpop.permute.xlu0 %562
      %564 = vrot.lane.b32.xlu0 %v561, 17
      %v565 = vpop.permute.xlu0 %564
      %v566 = vsel %vm544, %v563, %v565
      %vm570 = vcmask 1045642
      %571 = vst.msk [vmem:[#allocation2] sm:$0x3c] %vm570, %v563
      %572 = vst [vmem:[#allocation2 + $0x8] sm:$0x3c] %v566
      %vm573 = vcmask 136194
      %574 = vst.msk [vmem:[#allocation2 + $0x10] sm:$0x3c] %vm573, %v565
      %v575 = vld [vmem:[#allocation2] sm:$0xff]
      %v576 = vld [vmem:[#allocation2 + $0x8] sm:$0xff]
      %v577 = vsel %vm526, 1, 0
      %v578 = vsel %vm527, 1, 0
      %vm579 = vcmp.eq.s32.totalorder %v577, 1
      %vm580 = vcmp.eq.s32.totalorder %v578, 1
      %vm581 = vmpackc.low %vm580, %vm579
      %v582 = vsel %vm581, 65537, 0
      %v583 = vlaneseq
      %v584 = vshrl.u32 %v583, 7
      %v585 = vsub.s32 0, %v584
      %v586 = vrot.slane %v582, %v585
      %v587 = vlaneseq
      %v588 = vshrl.u32 %v587, 7
      %v589 = vsub.s32 4, %v588
      %v590 = vrot.slane %v582, %v589
      %vm591 = vcmp.ne.s16.totalorder %v586, 0
      %vm592 = vcmp.ne.s16.totalorder %v590, 0
      %v593 = vsel %vm591, %v575, 0
      %v594 = vsel %vm592, %v576, 0
      %v595 = vld [vmem:[#allocation2 + $0x10] sm:$0xff]
      %v596 = vsel %vm528, 1, 0
      %v597 = vsel %vm529, 1, 0
      %vm598 = vcmp.eq.s32.totalorder %v596, 1
      %vm599 = vcmp.eq.s32.totalorder %v597, 1
      %vm600 = vmpackc.low %vm599, %vm598
      %v601 = vsel %vm600, 65537, 0
      %v602 = vlaneseq
      %v603 = vshrl.u32 %v602, 7
      %v604 = vsub.s32 0, %v603
      %v605 = vrot.slane %v601, %v604
      %v606 = vlaneseq
      %v607 = vshrl.u32 %v606, 7
      %v608 = vsub.s32 4, %v607
      %v609 = vrot.slane %v601, %v608
      %610 = vrot.lane.b32.xlu0 %v605, 2
      %v611 = vpop.permute.xlu0 %610
      %612 = vrot.lane.b32.xlu0 %v609, 2
      %v613 = vpop.permute.xlu0 %612
      %vm614 = vcmask 15360
      %v615 = vsel %vm614, %v611, %v613
      %vm616 = vcmp.ne.s16.totalorder %v611, 0
      %vm617 = vcmp.ne.s16.totalorder %v615, 0
      %vm618 = vcmp.ne.s16.totalorder %v613, 0
      %v619 = vsel %vm616, %v575, 0
      %v620 = vsel %vm617, %v576, 0
      %v621 = vsel %vm618, %v595, 0
      %622 = vrot.lane.b32.xlu0 %v586, 16
      %v623 = vpop.permute.xlu0 %622
      %624 = vrot.lane.b32.xlu0 %v590, 16
      %v625 = vpop.permute.xlu0 %624
      %vm626 = vcmask 130048
      %v627 = vsel %vm626, %v623, %v625
      %vm628 = vcmp.ne.s16.totalorder %v623, 0
      %vm629 = vcmp.ne.s16.totalorder %v627, 0
      %vm630 = vcmp.ne.s16.totalorder %v625, 0
      %v631 = vsel %vm628, %v575, 0
      %v632 = vsel %vm629, %v576, 0
      %v633 = vsel %vm630, %v595, 0
      %634 = vrot.lane.b32.xlu0 %v605, 18
      %v635 = vpop.permute.xlu0 %634
      %636 = vrot.lane.b32.xlu0 %v609, 18
      %v637 = vpop.permute.xlu0 %636
      %vm638 = vcmask 146432
      %v639 = vsel %vm638, %v635, %v637
      %vm640 = vcmp.ne.s16.totalorder %v635, 0
      %vm641 = vcmp.ne.s16.totalorder %v639, 0
      %vm642 = vcmp.ne.s16.totalorder %v637, 0
      %v643 = vsel %vm640, %v575, 0
      %v644 = vsel %vm641, %v576, 0
      %v645 = vsel %vm642, %v595, 0
      %646 = vrot.lane.b32.xlu0 %v586, 32
      %v647 = vpop.permute.xlu0 %646
      %648 = vrot.lane.b32.xlu0 %v590, 32
      %v649 = vpop.permute.xlu0 %648
      %vm650 = vcmask 261120
      %v651 = vsel %vm650, %v647, %v649
      %vm652 = vcmp.ne.s16.totalorder %v647, 0
      %vm653 = vcmp.ne.s16.totalorder %v651, 0
      %vm654 = vcmp.ne.s16.totalorder %v649, 0
      %v655 = vsel %vm652, %v575, 0
      %v656 = vsel %vm653, %v576, 0
      %v657 = vsel %vm654, %v595, 0
      %658 = vrot.lane.b32.xlu0 %v605, 34
      %v659 = vpop.permute.xlu0 %658
      %660 = vrot.lane.b32.xlu0 %v609, 34
      %v661 = vpop.permute.xlu0 %660
      %vm662 = vcmask 277504
      %v663 = vsel %vm662, %v659, %v661
      %vm664 = vcmp.ne.s16.totalorder %v659, 0
      %vm665 = vcmp.ne.s16.totalorder %v663, 0
      %vm666 = vcmp.ne.s16.totalorder %v661, 0
      %v667 = vsel %vm664, %v575, 0
      %v668 = vsel %vm665, %v576, 0
      %v669 = vsel %vm666, %v595, 0
      %673 = vrot.lane.b32.xlu0 %v575, 127
      %v674 = vpop.permute.xlu0 %673
      %675 = vrot.lane.b32.xlu0 %v576, 127
      %v676 = vpop.permute.xlu0 %675
      %677 = vrot.lane.b32.xlu0 %v595, 127
      %v678 = vpop.permute.xlu0 %677
      %vm679 = vcmask 1039360
      %v680 = vsel %vm679, %v674, %v676
      %v681 = vsel %vm679, %v676, %v678
      %687 = vrot.lane.b32.xlu0 %v619, 126
      %v688 = vpop.permute.xlu0 %687
      %689 = vrot.lane.b32.xlu0 %v620, 126
      %v690 = vpop.permute.xlu0 %689
      %691 = vrot.lane.b32.xlu0 %v621, 126
      %v692 = vpop.permute.xlu0 %691
      %vm693 = vcmask 1031168
      %v694 = vsel %vm693, %v688, %v690
      %v695 = vsel %vm693, %v690, %v692
      %701 = vrot.lane.b32.xlu0 %v631, 112
      %v702 = vpop.permute.xlu0 %701
      %703 = vrot.lane.b32.xlu0 %v632, 112
      %v704 = vpop.permute.xlu0 %703
      %705 = vrot.lane.b32.xlu0 %v633, 112
      %v706 = vpop.permute.xlu0 %705
      %vm707 = vcmask 916480
      %v708 = vsel %vm707, %v702, %v704
      %v709 = vsel %vm707, %v704, %v706
      %712 = vrot.lane.b32.xlu0 %v575, 111
      %v713 = vpop.permute.xlu0 %712
      %714 = vrot.lane.b32.xlu0 %v576, 111
      %v715 = vpop.permute.xlu0 %714
      %716 = vrot.lane.b32.xlu0 %v595, 111
      %v717 = vpop.permute.xlu0 %716
      %vm718 = vcmask 908288
      %v719 = vsel %vm718, %v713, %v715
      %v720 = vsel %vm718, %v715, %v717
      %726 = vrot.lane.b32.xlu0 %v643, 110
      %v727 = vpop.permute.xlu0 %726
      %728 = vrot.lane.b32.xlu0 %v644, 110
      %v729 = vpop.permute.xlu0 %728
      %730 = vrot.lane.b32.xlu0 %v645, 110
      %v731 = vpop.permute.xlu0 %730
      %vm732 = vcmask 900096
      %v733 = vsel %vm732, %v727, %v729
      %v734 = vsel %vm732, %v729, %v731
      %740 = vrot.lane.b32.xlu0 %v655, 96
      %v741 = vpop.permute.xlu0 %740
      %742 = vrot.lane.b32.xlu0 %v656, 96
      %v743 = vpop.permute.xlu0 %742
      %744 = vrot.lane.b32.xlu0 %v657, 96
      %v745 = vpop.permute.xlu0 %744
      %vm746 = vcmask 785408
      %v747 = vsel %vm746, %v741, %v743
      %v748 = vsel %vm746, %v743, %v745
      %751 = vrot.lane.b32.xlu0 %v575, 95
      %v752 = vpop.permute.xlu0 %751
      %753 = vrot.lane.b32.xlu0 %v576, 95
      %v754 = vpop.permute.xlu0 %753
      %755 = vrot.lane.b32.xlu0 %v595, 95
      %v756 = vpop.permute.xlu0 %755
      %vm757 = vcmask 777216
      %v758 = vsel %vm757, %v752, %v754
      %v759 = vsel %vm757, %v754, %v756
      %765 = vrot.lane.b32.xlu0 %v667, 94
      %v766 = vpop.permute.xlu0 %765
      %767 = vrot.lane.b32.xlu0 %v668, 94
      %v768 = vpop.permute.xlu0 %767
      %769 = vrot.lane.b32.xlu0 %v669, 94
      %v770 = vpop.permute.xlu0 %769
      %vm771 = vcmask 769024
      %v772 = vsel %vm771, %v766, %v768
      %v773 = vsel %vm771, %v768, %v770
      %v776 = vld [vmem:[%s2] sm:$0xf]
      %v777 = vld [vmem:[%s3] sm:$0xf]
      %779 = vset.pattern.permute.xlu0 0
      %780 = vperm.xlu0 %779, %v777
      %v781 = vpop.permute.xlu0 %780
      %v785 = vunpack.c.l.s4 1983009808
      %v786 = vunpack.c.0.s8 %v785
      %v787 = vlaneseq
      %v788 = vshrl.u32 %v787, 7
      %v789 = vsub.s32 %v786, %v788
      %v790 = vrot.slane %v776, %v789
      %v791 = vcombine.high %v790, %v790
      %vm793 = vcmask 130048
      %v795 = vsel %vm793, %v791, 0
      %797 = vmatprep.subr.bf16.mxu0 %v594
      %798 = vmatpush1.bf16.msra.mxu0 %v593
      %799 = vmatprep.subr.bf16.mxu0 %v681
      %800 = vmatpush1.bf16.msra.mxu0 %v680
      %801 = vmatprep.subr.bf16.mxu0 %v695
      %802 = vmatpush1.bf16.msra.mxu0 %v694
      %803 = vmatprep.subr.bf16.mxu0 %v709
      %804 = vmatpush1.bf16.msra.mxu0 %v708
      %805 = vmatprep.subr.bf16.mxu0 %v720
      %806 = vmatpush1.bf16.msra.mxu0 %v719
      %807 = vmatprep.subr.bf16.mxu0 %v734
      %808 = vmatpush1.bf16.msra.mxu0 %v733
      %809 = vmatprep.subr.bf16.mxu0 %v748
      %810 = vmatpush1.bf16.msra.mxu0 %v747
      %811 = vmatprep.subr.bf16.mxu0 %v759
      %812 = vmatpush1.bf16.msra.mxu0 %v758
      %813 = vmatprep.subr.bf16.mxu0 %v773
      %814 = vmatpush1.bf16.msra.mxu0 %v772
      %815 = vmatprep.subr.bf16.mxu0 0
      %816 = vmatpush1.bf16.msra.mxu0 0
      %817 = vmatprep.subr.bf16.mxu0 0
      %818 = vmatpush1.bf16.msra.mxu0 0
      %819 = vmatprep.subr.bf16.mxu0 0
      %820 = vmatpush1.bf16.msra.mxu0 0
      %821 = vmatprep.subr.bf16.mxu0 0
      %822 = vmatpush1.bf16.msra.mxu0 0
      %823 = vmatprep.subr.bf16.mxu0 0
      %824 = vmatpush1.bf16.msra.mxu0 0
      %825 = vmatprep.subr.bf16.mxu0 0
      %826 = vmatpush1.bf16.msra.mxu0 0
      %827 = vmatprep.subr.bf16.mxu0 0
      %828 = vmatpush1.bf16.msra.mxu0 0
      %829 = vmatprep.mubr.bf16.mxu0 %v795
      %830 = vmatmul.mubr.bf16.gmra.mrb[0].mxu0 %v790
      %v831 = vpop.f32.mrb[0].mxu0
      %v832 = vadd.f32 %v781, %v831
      %v833 = vpop.f32.mrb[0].mxu0
      %v834 = vadd.f32 %v781, %v833
      %v835 = vpop.f32.mrb[0].mxu0
      %v836 = vpop.f32.mrb[0].mxu0
      %837 = vdwg.mxu0
      %vm838 = vcmp.ge.f32.partialorder %v832, 0.0
      %vm839 = vcmp.ge.f32.partialorder %v834, 0.0
      %v840 = vmul.f32 %v832, 0.01
      %v841 = vmul.f32 %v834, 0.01
      %v842 = vsel %vm838, %v832, %v840
      %v843 = vsel %vm839, %v834, %v841
      %v844 = vpack.c.bf16 %v842, %v842
      %v845 = vpack.c.bf16 %v843, %v843
      %848 = vrot.lane.b32.xlu0 %v844, 17
      %v849 = vpop.permute.xlu0 %848
      %850 = vrot.lane.b32.xlu0 %v845, 17
      %v851 = vpop.permute.xlu0 %850
      %v852 = vsel %vm544, %v849, %v851
      %856 = vst.msk [vmem:[#allocation2] sm:$0x3] %vm549, %v849
      %857 = vst [vmem:[#allocation2 + $0x8] sm:$0x3] %v852
      %858 = vst.msk [vmem:[#allocation2 + $0x10] sm:$0x3] %vm552, %v851
      %v859 = vld [vmem:[#allocation2] sm:$0xff]
      %v860 = vld [vmem:[#allocation2 + $0x8] sm:$0xff]
      %v861 = vsel %vm591, %v859, 0
      %v862 = vsel %vm592, %v860, 0
      %v863 = vld [vmem:[#allocation2 + $0x10] sm:$0xff]
      %v864 = vsel %vm616, %v859, 0
      %v865 = vsel %vm617, %v860, 0
      %v866 = vsel %vm618, %v863, 0
      %v867 = vsel %vm628, %v859, 0
      %v868 = vsel %vm629, %v860, 0
      %v869 = vsel %vm630, %v863, 0
      %v870 = vsel %vm640, %v859, 0
      %v871 = vsel %vm641, %v860, 0
      %v872 = vsel %vm642, %v863, 0
      %v873 = vsel %vm652, %v859, 0
      %v874 = vsel %vm653, %v860, 0
      %v875 = vsel %vm654, %v863, 0
      %v876 = vsel %vm664, %v859, 0
      %v877 = vsel %vm665, %v860, 0
      %v878 = vsel %vm666, %v863, 0
      %882 = vrot.lane.b32.xlu0 %v859, 127
      %v883 = vpop.permute.xlu0 %882
      %884 = vrot.lane.b32.xlu0 %v860, 127
      %v885 = vpop.permute.xlu0 %884
      %886 = vrot.lane.b32.xlu0 %v863, 127
      %v887 = vpop.permute.xlu0 %886
      %v888 = vsel %vm679, %v883, %v885
      %v889 = vsel %vm679, %v885, %v887
      %895 = vrot.lane.b32.xlu0 %v864, 126
      %v896 = vpop.permute.xlu0 %895
      %897 = vrot.lane.b32.xlu0 %v865, 126
      %v898 = vpop.permute.xlu0 %897
      %899 = vrot.lane.b32.xlu0 %v866, 126
      %v900 = vpop.permute.xlu0 %899
      %v901 = vsel %vm693, %v896, %v898
      %v902 = vsel %vm693, %v898, %v900
      %908 = vrot.lane.b32.xlu0 %v867, 112
      %v909 = vpop.permute.xlu0 %908
      %910 = vrot.lane.b32.xlu0 %v868, 112
      %v911 = vpop.permute.xlu0 %910
      %912 = vrot.lane.b32.xlu0 %v869, 112
      %v913 = vpop.permute.xlu0 %912
      %v914 = vsel %vm707, %v909, %v911
      %v915 = vsel %vm707, %v911, %v913
      %918 = vrot.lane.b32.xlu0 %v859, 111
      %v919 = vpop.permute.xlu0 %918
      %920 = vrot.lane.b32.xlu0 %v860, 111
      %v921 = vpop.permute.xlu0 %920
      %922 = vrot.lane.b32.xlu0 %v863, 111
      %v923 = vpop.permute.xlu0 %922
      %v924 = vsel %vm718, %v919, %v921
      %v925 = vsel %vm718, %v921, %v923
      %931 = vrot.lane.b32.xlu0 %v870, 110
      %v932 = vpop.permute.xlu0 %931
      %933 = vrot.lane.b32.xlu0 %v871, 110
      %v934 = vpop.permute.xlu0 %933
      %935 = vrot.lane.b32.xlu0 %v872, 110
      %v936 = vpop.permute.xlu0 %935
      %v937 = vsel %vm732, %v932, %v934
      %v938 = vsel %vm732, %v934, %v936
      %944 = vrot.lane.b32.xlu0 %v873, 96
      %v945 = vpop.permute.xlu0 %944
      %946 = vrot.lane.b32.xlu0 %v874, 96
      %v947 = vpop.permute.xlu0 %946
      %948 = vrot.lane.b32.xlu0 %v875, 96
      %v949 = vpop.permute.xlu0 %948
      %v950 = vsel %vm746, %v945, %v947
      %v951 = vsel %vm746, %v947, %v949
      %954 = vrot.lane.b32.xlu0 %v859, 95
      %v955 = vpop.permute.xlu0 %954
      %956 = vrot.lane.b32.xlu0 %v860, 95
      %v957 = vpop.permute.xlu0 %956
      %958 = vrot.lane.b32.xlu0 %v863, 95
      %v959 = vpop.permute.xlu0 %958
      %v960 = vsel %vm757, %v955, %v957
      %v961 = vsel %vm757, %v957, %v959
      %967 = vrot.lane.b32.xlu0 %v876, 94
      %v968 = vpop.permute.xlu0 %967
      %969 = vrot.lane.b32.xlu0 %v877, 94
      %v970 = vpop.permute.xlu0 %969
      %971 = vrot.lane.b32.xlu0 %v878, 94
      %v972 = vpop.permute.xlu0 %971
      %v973 = vsel %vm771, %v968, %v970
      %v974 = vsel %vm771, %v970, %v972
      %v977 = vld [vmem:[%s4] sm:$0xf]
      %v978 = vld [vmem:[%s5] sm:$0xf]
      %980 = vset.pattern.permute.xlu0 0
      %981 = vperm.xlu0 %980, %v978
      %v982 = vpop.permute.xlu0 %981
      %v986 = vunpack.c.l.s4 1983009808
      %v987 = vunpack.c.0.s8 %v986
      %v988 = vlaneseq
      %v989 = vshrl.u32 %v988, 7
      %v990 = vsub.s32 %v987, %v989
      %v991 = vrot.slane %v977, %v990
      %v992 = vcombine.high %v991, %v991
      %v995 = vsel %vm793, %v992, 0
      %997 = vmatprep.subr.bf16.mxu0 %v862
      %998 = vmatpush1.bf16.msra.mxu0 %v861
      %999 = vmatprep.subr.bf16.mxu0 %v889
      %1000 = vmatpush1.bf16.msra.mxu0 %v888
      %1001 = vmatprep.subr.bf16.mxu0 %v902
      %1002 = vmatpush1.bf16.msra.mxu0 %v901
      %1003 = vmatprep.subr.bf16.mxu0 %v915
      %1004 = vmatpush1.bf16.msra.mxu0 %v914
      %1005 = vmatprep.subr.bf16.mxu0 %v925
      %1006 = vmatpush1.bf16.msra.mxu0 %v924
      %1007 = vmatprep.subr.bf16.mxu0 %v938
      %1008 = vmatpush1.bf16.msra.mxu0 %v937
      %1009 = vmatprep.subr.bf16.mxu0 %v951
      %1010 = vmatpush1.bf16.msra.mxu0 %v950
      %1011 = vmatprep.subr.bf16.mxu0 %v961
      %1012 = vmatpush1.bf16.msra.mxu0 %v960
      %1013 = vmatprep.subr.bf16.mxu0 %v974
      %1014 = vmatpush1.bf16.msra.mxu0 %v973
      %1015 = vmatprep.subr.bf16.mxu0 0
      %1016 = vmatpush1.bf16.msra.mxu0 0
      %1017 = vmatprep.subr.bf16.mxu0 0
      %1018 = vmatpush1.bf16.msra.mxu0 0
      %1019 = vmatprep.subr.bf16.mxu0 0
      %1020 = vmatpush1.bf16.msra.mxu0 0
      %1021 = vmatprep.subr.bf16.mxu0 0
      %1022 = vmatpush1.bf16.msra.mxu0 0
      %1023 = vmatprep.subr.bf16.mxu0 0
      %1024 = vmatpush1.bf16.msra.mxu0 0
      %1025 = vmatprep.subr.bf16.mxu0 0
      %1026 = vmatpush1.bf16.msra.mxu0 0
      %1027 = vmatprep.subr.bf16.mxu0 0
      %1028 = vmatpush1.bf16.msra.mxu0 0
      %1029 = vmatprep.mubr.bf16.mxu0 %v995
      %1030 = vmatmul.mubr.bf16.gmra.mrb[0].mxu0 %v991
      %v1031 = vpop.f32.mrb[0].mxu0
      %v1032 = vadd.f32 %v982, %v1031
      %v1033 = vpop.f32.mrb[0].mxu0
      %v1034 = vadd.f32 %v982, %v1033
      %v1035 = vpop.f32.mrb[0].mxu0
      %v1036 = vpop.f32.mrb[0].mxu0
      %1037 = vdwg.mxu0
      %vm1038 = vcmp.ge.f32.partialorder %v1032, 0.0
      %vm1039 = vcmp.ge.f32.partialorder %v1034, 0.0
      %v1040 = vmul.f32 %v1032, 0.01
      %v1041 = vmul.f32 %v1034, 0.01
      %v1042 = vsel %vm1038, %v1032, %v1040
      %v1043 = vsel %vm1039, %v1034, %v1041
      %v1044 = vpack.c.bf16 %v1042, %v1042
      %v1045 = vpack.c.bf16 %v1043, %v1043
      %1048 = vrot.lane.b32.xlu0 %v1044, 17
      %v1049 = vpop.permute.xlu0 %1048
      %1050 = vrot.lane.b32.xlu0 %v1045, 17
      %v1051 = vpop.permute.xlu0 %1050
      %v1052 = vsel %vm544, %v1049, %v1051
      %1056 = vst.msk [vmem:[#allocation2] sm:$0x3] %vm549, %v1049
      %1057 = vst [vmem:[#allocation2 + $0x8] sm:$0x3] %v1052
      %1058 = vst.msk [vmem:[#allocation2 + $0x10] sm:$0x3] %vm552, %v1051
      %v1059 = vld [vmem:[#allocation2] sm:$0xff]
      %v1060 = vld [vmem:[#allocation2 + $0x8] sm:$0xff]
      %v1061 = vsel %vm591, %v1059, 0
      %v1062 = vsel %vm592, %v1060, 0
      %v1063 = vld [vmem:[#allocation2 + $0x10] sm:$0xff]
      %v1064 = vsel %vm616, %v1059, 0
      %v1065 = vsel %vm617, %v1060, 0
      %v1066 = vsel %vm618, %v1063, 0
      %v1067 = vsel %vm628, %v1059, 0
      %v1068 = vsel %vm629, %v1060, 0
      %v1069 = vsel %vm630, %v1063, 0
      %v1070 = vsel %vm640, %v1059, 0
      %v1071 = vsel %vm641, %v1060, 0
      %v1072 = vsel %vm642, %v1063, 0
      %v1073 = vsel %vm652, %v1059, 0
      %v1074 = vsel %vm653, %v1060, 0
      %v1075 = vsel %vm654, %v1063, 0
      %v1076 = vsel %vm664, %v1059, 0
      %v1077 = vsel %vm665, %v1060, 0
      %v1078 = vsel %vm666, %v1063, 0
      %1082 = vrot.lane.b32.xlu0 %v1059, 127
      %v1083 = vpop.permute.xlu0 %1082
      %1084 = vrot.lane.b32.xlu0 %v1060, 127
      %v1085 = vpop.permute.xlu0 %1084
      %1086 = vrot.lane.b32.xlu0 %v1063, 127
      %v1087 = vpop.permute.xlu0 %1086
      %v1088 = vsel %vm679, %v1083, %v1085
      %v1089 = vsel %vm679, %v1085, %v1087
      %1095 = vrot.lane.b32.xlu0 %v1064, 126
      %v1096 = vpop.permute.xlu0 %1095
      %1097 = vrot.lane.b32.xlu0 %v1065, 126
      %v1098 = vpop.permute.xlu0 %1097
      %1099 = vrot.lane.b32.xlu0 %v1066, 126
      %v1100 = vpop.permute.xlu0 %1099
      %v1101 = vsel %vm693, %v1096, %v1098
      %v1102 = vsel %vm693, %v1098, %v1100
      %1108 = vrot.lane.b32.xlu0 %v1067, 112
      %v1109 = vpop.permute.xlu0 %1108
      %1110 = vrot.lane.b32.xlu0 %v1068, 112
      %v1111 = vpop.permute.xlu0 %1110
      %1112 = vrot.lane.b32.xlu0 %v1069, 112
      %v1113 = vpop.permute.xlu0 %1112
      %v1114 = vsel %vm707, %v1109, %v1111
      %v1115 = vsel %vm707, %v1111, %v1113
      %1118 = vrot.lane.b32.xlu0 %v1059, 111
      %v1119 = vpop.permute.xlu0 %1118
      %1120 = vrot.lane.b32.xlu0 %v1060, 111
      %v1121 = vpop.permute.xlu0 %1120
      %1122 = vrot.lane.b32.xlu0 %v1063, 111
      %v1123 = vpop.permute.xlu0 %1122
      %v1124 = vsel %vm718, %v1119, %v1121
      %v1125 = vsel %vm718, %v1121, %v1123
      %1131 = vrot.lane.b32.xlu0 %v1070, 110
      %v1132 = vpop.permute.xlu0 %1131
      %1133 = vrot.lane.b32.xlu0 %v1071, 110
      %v1134 = vpop.permute.xlu0 %1133
      %1135 = vrot.lane.b32.xlu0 %v1072, 110
      %v1136 = vpop.permute.xlu0 %1135
      %v1137 = vsel %vm732, %v1132, %v1134
      %v1138 = vsel %vm732, %v1134, %v1136
      %1144 = vrot.lane.b32.xlu0 %v1073, 96
      %v1145 = vpop.permute.xlu0 %1144
      %1146 = vrot.lane.b32.xlu0 %v1074, 96
      %v1147 = vpop.permute.xlu0 %1146
      %1148 = vrot.lane.b32.xlu0 %v1075, 96
      %v1149 = vpop.permute.xlu0 %1148
      %v1150 = vsel %vm746, %v1145, %v1147
      %v1151 = vsel %vm746, %v1147, %v1149
      %1154 = vrot.lane.b32.xlu0 %v1059, 95
      %v1155 = vpop.permute.xlu0 %1154
      %1156 = vrot.lane.b32.xlu0 %v1060, 95
      %v1157 = vpop.permute.xlu0 %1156
      %1158 = vrot.lane.b32.xlu0 %v1063, 95
      %v1159 = vpop.permute.xlu0 %1158
      %v1160 = vsel %vm757, %v1155, %v1157
      %v1161 = vsel %vm757, %v1157, %v1159
      %1167 = vrot.lane.b32.xlu0 %v1076, 94
      %v1168 = vpop.permute.xlu0 %1167
      %1169 = vrot.lane.b32.xlu0 %v1077, 94
      %v1170 = vpop.permute.xlu0 %1169
      %1171 = vrot.lane.b32.xlu0 %v1078, 94
      %v1172 = vpop.permute.xlu0 %1171
      %v1173 = vsel %vm771, %v1168, %v1170
      %v1174 = vsel %vm771, %v1170, %v1172
      %v1177 = vld [vmem:[%s6] sm:$0xf]
      %v1178 = vld [vmem:[%s7] sm:$0xf]
      %1180 = vset.pattern.permute.xlu0 0
      %1181 = vperm.xlu0 %1180, %v1178
      %v1182 = vpop.permute.xlu0 %1181
      %v1186 = vunpack.c.l.s4 1983009808
      %v1187 = vunpack.c.0.s8 %v1186
      %v1188 = vlaneseq
      %v1189 = vshrl.u32 %v1188, 7
      %v1190 = vsub.s32 %v1187, %v1189
      %v1191 = vrot.slane %v1177, %v1190
      %v1192 = vcombine.high %v1191, %v1191
      %v1195 = vsel %vm793, %v1192, 0
      %1197 = vmatprep.subr.bf16.mxu0 %v1062
      %1198 = vmatpush1.bf16.msra.mxu0 %v1061
      %1199 = vmatprep.subr.bf16.mxu0 %v1089
      %1200 = vmatpush1.bf16.msra.mxu0 %v1088
      %1201 = vmatprep.subr.bf16.mxu0 %v1102
      %1202 = vmatpush1.bf16.msra.mxu0 %v1101
      %1203 = vmatprep.subr.bf16.mxu0 %v1115
      %1204 = vmatpush1.bf16.msra.mxu0 %v1114
      %1205 = vmatprep.subr.bf16.mxu0 %v1125
      %1206 = vmatpush1.bf16.msra.mxu0 %v1124
      %1207 = vmatprep.subr.bf16.mxu0 %v1138
      %1208 = vmatpush1.bf16.msra.mxu0 %v1137
      %1209 = vmatprep.subr.bf16.mxu0 %v1151
      %1210 = vmatpush1.bf16.msra.mxu0 %v1150
      %1211 = vmatprep.subr.bf16.mxu0 %v1161
      %1212 = vmatpush1.bf16.msra.mxu0 %v1160
      %1213 = vmatprep.subr.bf16.mxu0 %v1174
      %1214 = vmatpush1.bf16.msra.mxu0 %v1173
      %1215 = vmatprep.subr.bf16.mxu0 0
      %1216 = vmatpush1.bf16.msra.mxu0 0
      %1217 = vmatprep.subr.bf16.mxu0 0
      %1218 = vmatpush1.bf16.msra.mxu0 0
      %1219 = vmatprep.subr.bf16.mxu0 0
      %1220 = vmatpush1.bf16.msra.mxu0 0
      %1221 = vmatprep.subr.bf16.mxu0 0
      %1222 = vmatpush1.bf16.msra.mxu0 0
      %1223 = vmatprep.subr.bf16.mxu0 0
      %1224 = vmatpush1.bf16.msra.mxu0 0
      %1225 = vmatprep.subr.bf16.mxu0 0
      %1226 = vmatpush1.bf16.msra.mxu0 0
      %1227 = vmatprep.subr.bf16.mxu0 0
      %1228 = vmatpush1.bf16.msra.mxu0 0
      %1229 = vmatprep.mubr.bf16.mxu0 %v1195
      %1230 = vmatmul.mubr.bf16.gmra.mrb[0].mxu0 %v1191
      %v1231 = vpop.f32.mrb[0].mxu0
      %v1232 = vadd.f32 %v1182, %v1231
      %v1233 = vpop.f32.mrb[0].mxu0
      %v1234 = vadd.f32 %v1182, %v1233
      %v1235 = vpop.f32.mrb[0].mxu0
      %v1236 = vpop.f32.mrb[0].mxu0
      %1237 = vdwg.mxu0
      %vm1238 = vcmp.ge.f32.partialorder %v1232, 0.0
      %vm1239 = vcmp.ge.f32.partialorder %v1234, 0.0
      %v1240 = vmul.f32 %v1232, 0.01
      %v1241 = vmul.f32 %v1234, 0.01
      %v1242 = vsel %vm1238, %v1232, %v1240
      %v1243 = vsel %vm1239, %v1234, %v1241
      %v1244 = vpack.c.bf16 %v1242, %v1242
      %v1245 = vpack.c.bf16 %v1243, %v1243
      %v1246 = vld [vmem:[%s8] sm:$0x3]
      %v1247 = vld [vmem:[%s9] sm:$0xf]
      %1249 = vset.pattern.permute.xlu0 0
      %1250 = vperm.xlu0 %1249, %v1247
      %v1251 = vpop.permute.xlu0 %1250
      %vm1253 = vcmask 31744
      %v1255 = vsel %vm1253, %v1246, 0
      %vm1257 = vcmask 1041408
      %v1259 = vsel %vm1257, %v1244, 0
      %v1262 = vsel %vm1257, %v1245, 0
      %1264 = vmatprep.subr.bf16.mxu0 %v1262
      %1265 = vmatpush1.bf16.msra.mxu0 %v1259
      %1266 = vmatprep.subr.bf16.mxu0 0
      %1267 = vmatpush1.bf16.msra.mxu0 0
      %1268 = vmatprep.subr.bf16.mxu0 0
      %1269 = vmatpush1.bf16.msra.mxu0 0
      %1270 = vmatprep.subr.bf16.mxu0 0
      %1271 = vmatpush1.bf16.msra.mxu0 0
      %1272 = vmatprep.subr.bf16.mxu0 0
      %1273 = vmatpush1.bf16.msra.mxu0 0
      %1274 = vmatprep.subr.bf16.mxu0 0
      %1275 = vmatpush1.bf16.msra.mxu0 0
      %1276 = vmatprep.subr.bf16.mxu0 0
      %1277 = vmatpush1.bf16.msra.mxu0 0
      %1278 = vmatprep.subr.bf16.mxu0 0
      %1279 = vmatpush1.bf16.msra.mxu0 0
      %1280 = vmatprep.subr.bf16.mxu0 0
      %1281 = vmatpush1.bf16.msra.mxu0 0
      %1282 = vmatprep.subr.bf16.mxu0 0
      %1283 = vmatpush1.bf16.msra.mxu0 0
      %1284 = vmatprep.subr.bf16.mxu0 0
      %1285 = vmatpush1.bf16.msra.mxu0 0
      %1286 = vmatprep.subr.bf16.mxu0 0
      %1287 = vmatpush1.bf16.msra.mxu0 0
      %1288 = vmatprep.subr.bf16.mxu0 0
      %1289 = vmatpush1.bf16.msra.mxu0 0
      %1290 = vmatprep.subr.bf16.mxu0 0
      %1291 = vmatpush1.bf16.msra.mxu0 0
      %1292 = vmatprep.subr.bf16.mxu0 0
      %1293 = vmatpush1.bf16.msra.mxu0 0
      %1294 = vmatprep.subr.bf16.mxu0 0
      %1295 = vmatpush1.bf16.msra.mxu0 0
      %1296 = vmatprep.mubr.bf16.mxu0 0
      %1297 = vmatmul.mubr.bf16.gmra.mrb[0].mxu0 %v1255
      %v1298 = vpop.f32.mrb[0].mxu0
      %v1299 = vadd.f32 %v1251, %v1298
      %v1300 = vpop.f32.mrb[0].mxu0
      %v1301 = vadd.f32 %v1251, %v1300
      %v1302 = vpop.f32.mrb[0].mxu0
      %v1303 = vpop.f32.mrb[0].mxu0
      %1304 = vdwg.mxu0
      %vm1305 = vcmp.ge.f32.partialorder %v1299, 0.0
      %vm1306 = vcmp.ge.f32.partialorder %v1301, 0.0
      %v1307 = vmul.f32 %v1299, 0.01
      %v1308 = vmul.f32 %v1301, 0.01
      %v1309 = vsel %vm1305, %v1299, %v1307
      %v1310 = vsel %vm1306, %v1301, %v1308
      %v1311 = vpack.c.bf16 %v1309, %v1309
      %v1312 = vpack.c.bf16 %v1310, %v1310
      %v1313 = vld [vmem:[%s10] sm:$0x3]
      %v1314 = vld [vmem:[%s11] sm:$0xf]
      %1316 = vset.pattern.permute.xlu0 0
      %1317 = vperm.xlu0 %1316, %v1314
      %v1318 = vpop.permute.xlu0 %1317
      %v1321 = vsel %vm1253, %v1313, 0
      %v1324 = vsel %vm1257, %v1311, 0
      %v1327 = vsel %vm1257, %v1312, 0
      %1329 = vmatprep.subr.bf16.mxu0 %v1327
      %1330 = vmatpush1.bf16.msra.mxu0 %v1324
      %1331 = vmatprep.subr.bf16.mxu0 0
      %1332 = vmatpush1.bf16.msra.mxu0 0
      %1333 = vmatprep.subr.bf16.mxu0 0
      %1334 = vmatpush1.bf16.msra.mxu0 0
      %1335 = vmatprep.subr.bf16.mxu0 0
      %1336 = vmatpush1.bf16.msra.mxu0 0
      %1337 = vmatprep.subr.bf16.mxu0 0
      %1338 = vmatpush1.bf16.msra.mxu0 0
      %1339 = vmatprep.subr.bf16.mxu0 0
      %1340 = vmatpush1.bf16.msra.mxu0 0
      %1341 = vmatprep.subr.bf16.mxu0 0
      %1342 = vmatpush1.bf16.msra.mxu0 0
      %1343 = vmatprep.subr.bf16.mxu0 0
      %1344 = vmatpush1.bf16.msra.mxu0 0
      %1345 = vmatprep.subr.bf16.mxu0 0
      %1346 = vmatpush1.bf16.msra.mxu0 0
      %1347 = vmatprep.subr.bf16.mxu0 0
      %1348 = vmatpush1.bf16.msra.mxu0 0
      %1349 = vmatprep.subr.bf16.mxu0 0
      %1350 = vmatpush1.bf16.msra.mxu0 0
      %1351 = vmatprep.subr.bf16.mxu0 0
      %1352 = vmatpush1.bf16.msra.mxu0 0
      %1353 = vmatprep.subr.bf16.mxu0 0
      %1354 = vmatpush1.bf16.msra.mxu0 0
      %1355 = vmatprep.subr.bf16.mxu0 0
      %1356 = vmatpush1.bf16.msra.mxu0 0
      %1357 = vmatprep.subr.bf16.mxu0 0
      %1358 = vmatpush1.bf16.msra.mxu0 0
      %1359 = vmatprep.subr.bf16.mxu0 0
      %1360 = vmatpush1.bf16.msra.mxu0 0
      %1361 = vmatprep.mubr.bf16.mxu0 0
      %1362 = vmatmul.mubr.bf16.gmra.mrb[0].mxu0 %v1321
      %v1363 = vpop.f32.mrb[0].mxu0
      %v1364 = vadd.f32 %v1318, %v1363
      %v1365 = vpop.f32.mrb[0].mxu0
      %v1366 = vadd.f32 %v1318, %v1365
      %v1367 = vpop.f32.mrb[0].mxu0
      %v1368 = vpop.f32.mrb[0].mxu0
      %1369 = vdwg.mxu0
      %vm1370 = vcmp.ge.f32.partialorder %v1364, 0.0
      %vm1371 = vcmp.ge.f32.partialorder %v1366, 0.0
      %v1372 = vmul.f32 %v1364, 0.01
      %v1373 = vmul.f32 %v1366, 0.01
      %v1374 = vsel %vm1370, %v1364, %v1372
      %v1375 = vsel %vm1371, %v1366, %v1373
      %v1376 = vpack.c.bf16 %v1374, %v1374
      %v1377 = vpack.c.bf16 %v1375, %v1375
      %v1378 = vld [vmem:[%s12] sm:$0x1]
      %v1379 = vld [vmem:[#allocation3] sm:$0x1]
      %1381 = vset.pattern.permute.xlu0 0
      %1382 = vperm.xlu0 %1381, %v1379
      %v1383 = vpop.permute.xlu0 %1382
      %v1385 = vlaneseq
      %v1386 = vshrl.u32 %v1385, 7
      %v1387 = vsub.s32 0, %v1386
      %v1388 = vrot.slane %v1383, %v1387
      %v1390 = vsel %vm1253, %v1378, 0
      %v1393 = vsel %vm1257, %v1376, 0
      %v1396 = vsel %vm1257, %v1377, 0
      %1398 = vmatprep.subr.bf16.mxu0 %v1396
      %1399 = vmatpush1.bf16.msra.mxu0 %v1393
      %1400 = vmatprep.subr.bf16.mxu0 0
      %1401 = vmatpush1.bf16.msra.mxu0 0
      %1402 = vmatprep.subr.bf16.mxu0 0
      %1403 = vmatpush1.bf16.msra.mxu0 0
      %1404 = vmatprep.subr.bf16.mxu0 0
      %1405 = vmatpush1.bf16.msra.mxu0 0
      %1406 = vmatprep.subr.bf16.mxu0 0
      %1407 = vmatpush1.bf16.msra.mxu0 0
      %1408 = vmatprep.subr.bf16.mxu0 0
      %1409 = vmatpush1.bf16.msra.mxu0 0
      %1410 = vmatprep.subr.bf16.mxu0 0
      %1411 = vmatpush1.bf16.msra.mxu0 0
      %1412 = vmatprep.subr.bf16.mxu0 0
      %1413 = vmatpush1.bf16.msra.mxu0 0
      %1414 = vmatprep.subr.bf16.mxu0 0
      %1415 = vmatpush1.bf16.msra.mxu0 0
      %1416 = vmatprep.subr.bf16.mxu0 0
      %1417 = vmatpush1.bf16.msra.mxu0 0
      %1418 = vmatprep.subr.bf16.mxu0 0
      %1419 = vmatpush1.bf16.msra.mxu0 0
      %1420 = vmatprep.subr.bf16.mxu0 0
      %1421 = vmatpush1.bf16.msra.mxu0 0
      %1422 = vmatprep.subr.bf16.mxu0 0
      %1423 = vmatpush1.bf16.msra.mxu0 0
      %1424 = vmatprep.subr.bf16.mxu0 0
      %1425 = vmatpush1.bf16.msra.mxu0 0
      %1426 = vmatprep.subr.bf16.mxu0 0
      %1427 = vmatpush1.bf16.msra.mxu0 0
      %1428 = vmatprep.subr.bf16.mxu0 0
      %1429 = vmatpush1.bf16.msra.mxu0 0
      %1430 = vmatprep.mubr.bf16.mxu0 0
      %1431 = vmatmul.mubr.bf16.gmra.mrb[0].mxu0 %v1390
      %v1432 = vpop.f32.mrb[0].mxu0
      %v1433 = vadd.f32 %v1388, %v1432
      %v1434 = vpop.f32.mrb[0].mxu0
      %v1435 = vadd.f32 %v1388, %v1434
      %v1436 = vpop.f32.mrb[0].mxu0
      %v1437 = vpop.f32.mrb[0].mxu0
      %1438 = vdwg.mxu0
      %vm1439 = vcmp.ge.f32.partialorder %v1433, 0.0
      %vm1440 = vcmp.ge.f32.partialorder %v1435, 0.0
      %v1441 = vmul.f32 %v1433, 0.01
      %v1442 = vmul.f32 %v1435, 0.01
      %v1443 = vsel %vm1439, %v1433, %v1441
      %v1444 = vsel %vm1440, %v1435, %v1442
      %v1447 = vcombine.low %v1443, %v1444
      %v1449 = vunpack.c.l.s4 1966171168
      %v1450 = vunpack.c.0.s8 %v1449
      %v1451 = vlaneseq
      %v1452 = vshrl.u32 %v1451, 7
      %v1453 = vsub.s32 %v1450, %v1452
      %v1454 = vrot.slane %v1447, %v1453
      %v1456 = vunpack.c.l.s4 1966171168
      %v1457 = vunpack.c.0.s8 %v1456
      %v1458 = vlaneseq
      %v1459 = vshrl.u32 %v1458, 7
      %v1460 = vsub.s32 %v1457, %v1459
      %v1461 = vrot.slane %v1454, %v1460
      %v1463 = vlaneseq
      %vm1464 = vcmp.ge.s32.totalorder %v1463, 0
      %vm1465 = vcmp.lt.s32.totalorder %v1463, 256
      %vm1466 = vmand %vm1464, %vm1465
      %1467 = vst.msk [vmem:[%s487] sm:$0x3] %vm1466, %v1461
      %p1468 = scmp.lt.s32.totalorder %s27, 1
      %s1469 = scalar_select %p1468, %s27, 1
      %s1470 = smul.addr %s1469, 2
      %s1471 = scalar_lea.vmem %s14, %s1470
      // Predicated region
      $region81: #{run.5} parent=75 // pred_check
        %p1472 = pneg %p349
      $region82: #{run.5} parent=75 // pred_check_branch
        %1474 = sbr.rel (%p1472) target = $region84
      $region83: #{run.5} parent=75 // pred_region
        _
      $region84: #{run.5} parent=75 // pred_fallthru
        _
    $region76: #{run.5} parent=5 // pred_fallthru
      _
    %p1475 = scmp.le.s32.totalorder 2, %s22
    // Predicated region
    $region85: #{run.5} parent=5 // pred_check
      %p1476 = pneg %p1475
    $region86: #{run.5} parent=5 // pred_check_branch
      %1478 = sbr.rel (%p1476) target = $region88
    $region87: #{run.5} parent=5 // pred_region
      %s1479 = ssub.s32 %s22, 2
      // Predicated region
      $region89: #{run.5} parent=87 // pred_check
        %p1480 = pneg %p355
      $region90: #{run.5} parent=87 // pred_check_branch
        %1482 = sbr.rel (%p1480) target = $region92
      $region91: #{run.5} parent=87 // pred_region
        %p1483 = scmp.lt.s32.totalorder %s28, 1
        %s1484 = scalar_select %p1483, %s28, 1
        %s1485 = smul.addr %s1484, 2
        %s1486 = scalar_lea.vmem %s14, %s1485
      $region92: #{run.5} parent=87 // pred_fallthru
        _
    $region88: #{run.5} parent=5 // pred_fallthru
      _
  $region6: #{run.5} parent=0 // loop_footer
    %s26 = sadd.s32 1, %s22
  $region7: #{run.5} parent=0 // loop_footer_branch
    %21 = sbr.rel target = $region3
  $region8: #{run.5} parent=0 // loop_exit
    _

</llo_original>
